<compile_context>
chip_gen: v6e
topology: v6e:2x2x1
jax: 0.10.0
libtpu: 0.0.40
codegen_flags: <defaults>
</compile_context>

<pallas_src>
import jax
import jax.numpy as jnp
from jax.experimental import pallas as pl
from jax.experimental.pallas import tpu as pltpu

GATE = 128  # each recurrent gate block is stored at a 128-lane-aligned column offset


def _vmem():
    return pl.BlockSpec(memory_space=pltpu.MemorySpace.VMEM)


def _lstm_step(x, h, c, wih, whh, b):
    """PyTorch-convention LSTMCell (i, f, g, o); gate columns padded to GATE lanes."""
    g = (jnp.dot(x, wih, preferred_element_type=jnp.float32)
         + jnp.dot(h, whh, preferred_element_type=jnp.float32) + b)
    H = h.shape[-1]
    i = jax.nn.sigmoid(g[:, 0 * GATE:0 * GATE + H])
    f = jax.nn.sigmoid(g[:, 1 * GATE:1 * GATE + H])
    gg = jnp.tanh(g[:, 2 * GATE:2 * GATE + H])
    o = jax.nn.sigmoid(g[:, 3 * GATE:3 * GATE + H])
    c_new = f * c + i * gg
    h_new = o * jnp.tanh(c_new)
    return h_new, c_new


# ---------------------------------------------------------------------------
# Fused decoder step kernel
# ---------------------------------------------------------------------------
def _decoder_step_kernel(
    # -- data / state --
    pin_ref, ctx_ref, attnh_ref, encp_ref, encs_ref, patch_ref, cum_ref,
    h1_ref, c1_ref, h2_ref, c2_ref, resh_ref, resc_ref,
    # -- PreNet --
    fc1w_ref, fc1b_ref, fc2w_ref, fc2b_ref,
    # -- attention GRUCell (input weights pre-split: context rows / prenet rows) --
    gwic_ref, gwip_ref, gbi_ref, gwh_ref, gbh_ref,
    # -- LSA --
    convw_ref, lw_ref, lb_ref, ww_ref, wb_ref, vw_ref,
    # -- rnn_input (pre-split: context rows / attn-hidden rows) --
    riwc_ref, riwa_ref, rib_ref,
    # -- res_rnn1 / res_rnn2 --
    l1wi_ref, l1wh_ref, l1b_ref, l2wi_ref, l2wh_ref, l2b_ref,
    # -- 4-layer residual LSTM stack --
    rwi_ref, rwh_ref, rb_ref,
    # -- stop_proj --
    sw_ref, sb_ref,
    # -- outputs --
    attnho_ref, scoreso_ref, cumo_ref, ctxo_ref,
    h1o_ref, c1o_ref, h2o_ref, c2o_ref, resho_ref, resco_ref, stopo_ref,
):
    B, T, D = encp_ref.shape

    # ---- PreNet: two Linear + tanh (dropout p=0 -> identity) ----
    pin = pin_ref[...]
    p1 = jnp.tanh(jnp.dot(pin, fc1w_ref[...],
                          preferred_element_type=jnp.float32) + fc1b_ref[...])
    p2 = jnp.tanh(jnp.dot(p1, fc2w_ref[...],
                          preferred_element_type=jnp.float32) + fc2b_ref[...])

    # ---- attention GRUCell on [context_vec ; prenet_out] (concat folded into split W) ----
    h_prev = attnh_ref[...]
    gi = (jnp.dot(ctx_ref[...], gwic_ref[...], preferred_element_type=jnp.float32)
          + jnp.dot(p2, gwip_ref[...], preferred_element_type=jnp.float32)
          + gbi_ref[...])
    gh = jnp.dot(h_prev, gwh_ref[...], preferred_element_type=jnp.float32) + gbh_ref[...]
    r = jax.nn.sigmoid(gi[:, 0 * GATE:0 * GATE + D] + gh[:, 0 * GATE:0 * GATE + D])
    z = jax.nn.sigmoid(gi[:, 1 * GATE:1 * GATE + D] + gh[:, 1 * GATE:1 * GATE + D])
    n = jnp.tanh(gi[:, 2 * GATE:2 * GATE + D] + r * gh[:, 2 * GATE:2 * GATE + D])
    attn_hidden = (1.0 - z) * n + z * h_prev
    attnho_ref[...] = attn_hidden

    # ---- LSA attention (location conv as a single im2col MXU matmul) ----
    pq = jnp.dot(attn_hidden, ww_ref[...],
                 preferred_element_type=jnp.float32) + wb_ref[...]          # (B, D)
    conv_out = jnp.dot(patch_ref[...], convw_ref[...],
                       preferred_element_type=jnp.float32)                  # (B*T, CF)
    ploc2d = jnp.dot(conv_out, lw_ref[...],
                     preferred_element_type=jnp.float32) + lb_ref[...]      # (B*T, D)
    ploc = ploc2d.reshape(B, T, D)
    u = jnp.tanh(pq[:, None, :] + encp_ref[...] + ploc)                     # (B, T, D)
    us = jnp.sum(u * vw_ref[...], axis=-1)                                  # v(.) -> (B, T)
    s = jax.nn.sigmoid(us)
    scores = s * pl.reciprocal(jnp.sum(s, axis=1, keepdims=True), approx=True)
    scoreso_ref[...] = scores
    cumo_ref[...] = cum_ref[...] + scores
    context_vec = jnp.sum(scores[:, :, None] * encs_ref[...], axis=1)       # (B, D)
    ctxo_ref[...] = context_vec

    # ---- rnn_input on [context_vec ; attn_hidden] (concat folded into split W) ----
    x = (jnp.dot(context_vec, riwc_ref[...], preferred_element_type=jnp.float32)
         + jnp.dot(attn_hidden, riwa_ref[...], preferred_element_type=jnp.float32)
         + rib_ref[...])

    # ---- two residual LSTMCells ----
    h1, c1 = _lstm_step(x, h1_ref[...], c1_ref[...],
                        l1wi_ref[...], l1wh_ref[...], l1b_ref[...])
    x = x + h1
    h2, c2 = _lstm_step(x, h2_ref[...], c2_ref[...],
                        l2wi_ref[...], l2wh_ref[...], l2b_ref[...])
    x = x + h2
    h1o_ref[...] = h1
    c1o_ref[...] = c1
    h2o_ref[...] = h2
    c2o_ref[...] = c2

    # ---- 4-layer residual LSTM stack over [prenet_in ; x] ----
    rx = jnp.concatenate([pin, x], axis=-1)
    for i in range(resh_ref.shape[0]):
        hi, ci = _lstm_step(rx, resh_ref[i], resc_ref[i],
                            rwi_ref[i], rwh_ref[i], rb_ref[i])
        resho_ref[i] = hi
        resco_ref[i] = ci
        rx = rx + hi

    # ---- stop projection (cond_features consumed in place, never written to HBM) ----
    stopo_ref[...] = jax.nn.sigmoid(
        jnp.dot(rx, sw_ref[...], preferred_element_type=jnp.float32) + sb_ref[...])


# ---------------------------------------------------------------------------
# Wrapper: one decoder step (eval mode)
# ---------------------------------------------------------------------------
def decoder_forward(params, encoder_seq, encoder_seq_proj, prenet_in,
                    hidden_states, cell_states, context_vec, t, lsa_state=None):
    f32 = jnp.float32
    B, T, D = encoder_seq_proj.shape
    L = hidden_states[1].shape[-1]
    R = hidden_states[3].shape[-1]
    KC = params['conv_w'].shape[0] // 2

    attn_hidden, rnn1_hidden, rnn2_hidden, res_h = hidden_states
    rnn1_cell, rnn2_cell, res_c = cell_states

    # LSA.init_attention at t == 0. NOTE: `t` must be a static Python int here
    # (use static_argnums under jit); a traced `t` would need lax.cond instead.
    if t == 0 or lsa_state is None:
        cumulative = jnp.zeros((B, T), f32)
        attention = jnp.zeros((B, T), f32)
    else:
        cumulative, attention = lsa_state

    # im2col patches for the location conv:
    # patches[b, t, c*KC + k] = pad(location)[b, c, t + k], location = [cumulative; attention]
    pad = (KC - 1) // 2
    location = jnp.stack([cumulative, attention], axis=1)            # (B, 2, T)   NCW
    loc_pad = jnp.pad(location, ((0, 0), (0, 0), (pad, pad)))        # (B, 2, T+KC-1)
    gather_idx = jnp.arange(T)[:, None] + jnp.arange(KC)[None, :]    # (T, KC)
    patches = loc_pad[:, :, gather_idx]                              # (B, 2, T, KC)
    patches = jnp.transpose(patches, (0, 2, 1, 3)).reshape(B * T, 2 * KC)

    inputs = (
        # data / state
        prenet_in, context_vec, attn_hidden, encoder_seq_proj, encoder_seq,
        patches, cumulative,
        rnn1_hidden, rnn1_cell, rnn2_hidden, rnn2_cell, res_h, res_c,
        # PreNet
        params['fc1_w'], params['fc1_b'], params['fc2_w'], params['fc2_b'],
        # GRUCell
        params['gru_wih_ctx'], params['gru_wih_pre'], params['gru_bih'],
        params['gru_whh'], params['gru_bhh'],
        # LSA
        params['conv_w'], params['L_w'], params['L_b'],
        params['W_w'], params['W_b'], params['v_w'],
        # rnn_input
        params['rnn_in_w_ctx'], params['rnn_in_w_attn'], params['rnn_in_b'],
        # res_rnn1 / res_rnn2
        params['l1_wih'], params['l1_whh'], params['l1_b'],
        params['l2_wih'], params['l2_whh'], params['l2_b'],
        # residual LSTM stack
        params['res_wih'], params['res_whh'], params['res_b'],
        # stop projection
        params['stop_w'], params['stop_b'],
    )

    out_shapes = (
        jax.ShapeDtypeStruct((B, D), f32),     # attn_hidden
        jax.ShapeDtypeStruct((B, T), f32),     # scores
        jax.ShapeDtypeStruct((B, T), f32),     # cumulative
        jax.ShapeDtypeStruct((B, D), f32),     # context_vec
        jax.ShapeDtypeStruct((B, L), f32),     # rnn1 hidden
        jax.ShapeDtypeStruct((B, L), f32),     # rnn1 cell
        jax.ShapeDtypeStruct((B, L), f32),     # rnn2 hidden
        jax.ShapeDtypeStruct((B, L), f32),     # rnn2 cell
        jax.ShapeDtypeStruct((4, B, R), f32),  # res_lstm hidden
        jax.ShapeDtypeStruct((4, B, R), f32),  # res_lstm cell
        jax.ShapeDtypeStruct((B, 1), f32),     # stop tokens
    )

    (attn_hidden, scores, cumulative, context_vec,
     rnn1_hidden, rnn1_cell, rnn2_hidden, rnn2_cell,
     res_h, res_c, stop_tokens) = pl.pallas_call(
        _decoder_step_kernel,
        out_shape=out_shapes,
        in_specs=[_vmem() for _ in inputs],
        out_specs=tuple(_vmem() for _ in out_shapes),
    )(*inputs)

    hidden_states = (attn_hidden, rnn1_hidden, rnn2_hidden, res_h)
    cell_states = (rnn1_cell, rnn2_cell, res_c)
    attention = scores

    # TODO(synk): Blow flow generation (`self.flows.reverse`) has no available definition.
    return (stop_tokens, scores[:, None, :],
            [hidden_states, cell_states, context_vec],
            (cumulative, attention))


# ---------------------------------------------------------------------------
# Deterministic parameter init (weights stored pre-transposed as [in, out],
# concat-inputs pre-split by row block, gate columns padded to GATE-lane blocks)
# ---------------------------------------------------------------------------
def init_params(key, *, K, D, L, F1, F2, CF, KC):
    R = L + K
    keys = iter(jax.random.split(key, 32))

    def rnd(shape, scale=0.1):
        return jax.random.normal(next(keys), shape, jnp.float32) * scale

    def pad_gates(w, n_gates, gdim):
        parts = []
        for g in range(n_gates):
            blk = w[..., g * gdim:(g + 1) * gdim]
            pad_width = [(0, 0)] * (w.ndim - 1) + [(0, GATE - gdim)]
            parts.append(jnp.pad(blk, pad_width))
        return jnp.concatenate(parts, axis=-1)

    p = {}
    # PreNet (fc2 = decoder_dims // 2 so GRU input = decoder_dims + decoder_dims // 2)
    p['fc1_w'] = rnd((K, F1)); p['fc1_b'] = rnd((1, F1))
    p['fc2_w'] = rnd((F1, F2)); p['fc2_b'] = rnd((1, F2))
    # attn_rnn GRUCell: input = [context (D); prenet_out (F2)], hidden = D
    gru_wih = rnd((D + F2, 3 * D))
    p['gru_wih_ctx'] = pad_gates(gru_wih[:D], 3, D)
    p['gru_wih_pre'] = pad_gates(gru_wih[D:], 3, D)
    p['gru_bih'] = pad_gates(rnd((1, 3 * D)), 3, D)
    p['gru_whh'] = pad_gates(rnd((D, 3 * D)), 3, D)
    p['gru_bhh'] = pad_gates(rnd((1, 3 * D)), 3, D)
    # LSA: conv weight stored in im2col layout (2*KC, CF)
    # (== PyTorch Conv1d weight (CF, 2, KC).transpose(1, 2, 0).reshape(2*KC, CF))
    p['conv_w'] = rnd((2 * KC, CF))
    p['L_w'] = rnd((CF, D)); p['L_b'] = rnd((1, D))
    p['W_w'] = rnd((D, D)); p['W_b'] = rnd((1, D))
    p['v_w'] = rnd((1, D))
    # rnn_input: [context (D); attn_hidden (D)] -> L
    rnn_in_w = rnd((2 * D, L))
    p['rnn_in_w_ctx'] = rnn_in_w[:D]
    p['rnn_in_w_attn'] = rnn_in_w[D:]
    p['rnn_in_b'] = rnd((1, L))
    # residual LSTMCells (biases pre-summed b_ih + b_hh)
    for name in ('l1', 'l2'):
        p[f'{name}_wih'] = pad_gates(rnd((L, 4 * L)), 4, L)
        p[f'{name}_whh'] = pad_gates(rnd((L, 4 * L)), 4, L)
        p[f'{name}_b'] = pad_gates(rnd((1, 4 * L)), 4, L)
    # 4-layer residual LSTM stack, weights stacked on a leading layer axis
    p['res_wih'] = pad_gates(rnd((4, R, 4 * R)), 4, R)
    p['res_whh'] = pad_gates(rnd((4, R, 4 * R)), 4, R)
    p['res_b'] = pad_gates(rnd((4, 1, 4 * R)), 4, R)
    # stop projection
    p['stop_w'] = rnd((R, 1)); p['stop_b'] = rnd((1, 1))
    return p


if __name__ == "__main__":
    B, T = 2, 8
    D = 32            # decoder_dims (== attn dim == encoder feature dim)
    L = 32            # lstm_dims
    K = 16            # decoder_K
    F1, F2 = 32, D // 2
    CF, KC = 32, 31   # LSA conv filters / kernel size
    R = L + K

    key = jax.random.PRNGKey(0)
    kp, kd = jax.random.split(key)
    params = init_params(kp, K=K, D=D, L=L, F1=F1, F2=F2, CF=CF, KC=KC)

    ks = jax.random.split(kd, 12)
    encoder_seq = jax.random.normal(ks[0], (B, T, D), jnp.float32)
    encoder_seq_proj = jax.random.normal(ks[1], (B, T, D), jnp.float32)
    prenet_in = jax.random.normal(ks[2], (B, K), jnp.float32)
    context_vec = jax.random.normal(ks[3], (B, D), jnp.float32)
    attn_hidden = jax.random.normal(ks[4], (B, D), jnp.float32) * 0.1
    rnn1_hidden = jax.random.normal(ks[5], (B, L), jnp.float32) * 0.1
    rnn2_hidden = jax.random.normal(ks[6], (B, L), jnp.float32) * 0.1
    res_h = jax.random.normal(ks[7], (4, B, R), jnp.float32) * 0.1
    rnn1_cell = jax.random.normal(ks[8], (B, L), jnp.float32) * 0.1
    rnn2_cell = jax.random.normal(ks[9], (B, L), jnp.float32) * 0.1
    res_c = jax.random.normal(ks[10], (4, B, R), jnp.float32) * 0.1

    hidden_states = (attn_hidden, rnn1_hidden, rnn2_hidden, res_h)
    cell_states = (rnn1_cell, rnn2_cell, res_c)

    step = jax.jit(decoder_forward, static_argnums=(7,))
    stop_tokens, scores, state, lsa_state = step(
        params, encoder_seq, encoder_seq_proj, prenet_in,
        hidden_states, cell_states, context_vec, 0, None)
    jax.block_until_ready((stop_tokens, scores, state, lsa_state))

    assert stop_tokens.shape == (B, 1)
    assert scores.shape == (B, 1, T)
    assert state[2].shape == (B, D)
    assert state[0][3].shape == (4, B, R)
    print("KERNEL_OK")
</pallas_src>

<mosaic_0001>
module attributes {stable_mosaic.version = 11 : i64} {
  func.func @_decoder_step_kernel(%arg0: memref<2x16xf32, #tpu.memory_space<vmem>>, %arg1: memref<2x32xf32, #tpu.memory_space<vmem>>, %arg2: memref<2x32xf32, #tpu.memory_space<vmem>>, %arg3: memref<2x8x32xf32, #tpu.memory_space<vmem>>, %arg4: memref<2x8x32xf32, #tpu.memory_space<vmem>>, %arg5: memref<16x62xf32, #tpu.memory_space<vmem>>, %arg6: memref<2x8xf32, #tpu.memory_space<vmem>>, %arg7: memref<2x32xf32, #tpu.memory_space<vmem>>, %arg8: memref<2x32xf32, #tpu.memory_space<vmem>>, %arg9: memref<2x32xf32, #tpu.memory_space<vmem>>, %arg10: memref<2x32xf32, #tpu.memory_space<vmem>>, %arg11: memref<4x2x48xf32, #tpu.memory_space<vmem>>, %arg12: memref<4x2x48xf32, #tpu.memory_space<vmem>>, %arg13: memref<16x32xf32, #tpu.memory_space<vmem>>, %arg14: memref<1x32xf32, #tpu.memory_space<vmem>>, %arg15: memref<32x16xf32, #tpu.memory_space<vmem>>, %arg16: memref<1x16xf32, #tpu.memory_space<vmem>>, %arg17: memref<32x384xf32, #tpu.memory_space<vmem>>, %arg18: memref<16x384xf32, #tpu.memory_space<vmem>>, %arg19: memref<1x384xf32, #tpu.memory_space<vmem>>, %arg20: memref<32x384xf32, #tpu.memory_space<vmem>>, %arg21: memref<1x384xf32, #tpu.memory_space<vmem>>, %arg22: memref<62x32xf32, #tpu.memory_space<vmem>>, %arg23: memref<32x32xf32, #tpu.memory_space<vmem>>, %arg24: memref<1x32xf32, #tpu.memory_space<vmem>>, %arg25: memref<32x32xf32, #tpu.memory_space<vmem>>, %arg26: memref<1x32xf32, #tpu.memory_space<vmem>>, %arg27: memref<1x32xf32, #tpu.memory_space<vmem>>, %arg28: memref<32x32xf32, #tpu.memory_space<vmem>>, %arg29: memref<32x32xf32, #tpu.memory_space<vmem>>, %arg30: memref<1x32xf32, #tpu.memory_space<vmem>>, %arg31: memref<32x512xf32, #tpu.memory_space<vmem>>, %arg32: memref<32x512xf32, #tpu.memory_space<vmem>>, %arg33: memref<1x512xf32, #tpu.memory_space<vmem>>, %arg34: memref<32x512xf32, #tpu.memory_space<vmem>>, %arg35: memref<32x512xf32, #tpu.memory_space<vmem>>, %arg36: memref<1x512xf32, #tpu.memory_space<vmem>>, %arg37: memref<4x48x512xf32, #tpu.memory_space<vmem>>, %arg38: memref<4x48x512xf32, #tpu.memory_space<vmem>>, %arg39: memref<4x1x512xf32, #tpu.memory_space<vmem>>, %arg40: memref<48x1xf32, #tpu.memory_space<vmem>>, %arg41: memref<1x1xf32, #tpu.memory_space<vmem>>, %arg42: memref<2x32xf32, #tpu.memory_space<vmem>>, %arg43: memref<2x8xf32, #tpu.memory_space<vmem>>, %arg44: memref<2x8xf32, #tpu.memory_space<vmem>>, %arg45: memref<2x32xf32, #tpu.memory_space<vmem>>, %arg46: memref<2x32xf32, #tpu.memory_space<vmem>>, %arg47: memref<2x32xf32, #tpu.memory_space<vmem>>, %arg48: memref<2x32xf32, #tpu.memory_space<vmem>>, %arg49: memref<2x32xf32, #tpu.memory_space<vmem>>, %arg50: memref<4x2x48xf32, #tpu.memory_space<vmem>>, %arg51: memref<4x2x48xf32, #tpu.memory_space<vmem>>, %arg52: memref<2x1xf32, #tpu.memory_space<vmem>>) attributes {dimension_semantics = [], scalar_prefetch = 0 : i64, scratch_operands = 0 : i64, tpu.core_type = #tpu.core_type<tc>} {
    %c0 = arith.constant 0 : index
    %c0_0 = arith.constant 0 : index
    %0 = vector.load %arg0[%c0, %c0_0] : memref<2x16xf32, #tpu.memory_space<vmem>>, vector<2x16xf32>
    %c0_1 = arith.constant 0 : index
    %c0_2 = arith.constant 0 : index
    %1 = vector.load %arg13[%c0_1, %c0_2] : memref<16x32xf32, #tpu.memory_space<vmem>>, vector<16x32xf32>
    %cst = arith.constant dense<0.000000e+00> : vector<2x32xf32>
    %2 = tpu.matmul %0, %1, %cst {dimension_numbers = #tpu.dot_dimension_numbers<[1], [0], [0], [1], [0, 0, 1, 1], [], []>} : vector<2x16xf32>, vector<16x32xf32>, vector<2x32xf32> -> vector<2x32xf32>
    %c0_3 = arith.constant 0 : index
    %c0_4 = arith.constant 0 : index
    %3 = vector.load %arg14[%c0_3, %c0_4] : memref<1x32xf32, #tpu.memory_space<vmem>>, vector<1x32xf32>
    %4 = vector.broadcast %3 : vector<1x32xf32> to vector<2x32xf32>
    %5 = arith.addf %2, %4 : vector<2x32xf32>
    %6 = math.tanh %5 : vector<2x32xf32>
    %c0_5 = arith.constant 0 : index
    %c0_6 = arith.constant 0 : index
    %7 = vector.load %arg15[%c0_5, %c0_6] : memref<32x16xf32, #tpu.memory_space<vmem>>, vector<32x16xf32>
    %cst_7 = arith.constant dense<0.000000e+00> : vector<2x16xf32>
    %8 = tpu.matmul %6, %7, %cst_7 {dimension_numbers = #tpu.dot_dimension_numbers<[1], [0], [0], [1], [0, 0, 1, 1], [], []>} : vector<2x32xf32>, vector<32x16xf32>, vector<2x16xf32> -> vector<2x16xf32>
    %c0_8 = arith.constant 0 : index
    %c0_9 = arith.constant 0 : index
    %9 = vector.load %arg16[%c0_8, %c0_9] : memref<1x16xf32, #tpu.memory_space<vmem>>, vector<1x16xf32>
    %10 = vector.broadcast %9 : vector<1x16xf32> to vector<2x16xf32>
    %11 = arith.addf %8, %10 : vector<2x16xf32>
    %12 = math.tanh %11 : vector<2x16xf32>
    %c0_10 = arith.constant 0 : index
    %c0_11 = arith.constant 0 : index
    %13 = vector.load %arg2[%c0_10, %c0_11] : memref<2x32xf32, #tpu.memory_space<vmem>>, vector<2x32xf32>
    %c0_12 = arith.constant 0 : index
    %c0_13 = arith.constant 0 : index
    %14 = vector.load %arg1[%c0_12, %c0_13] : memref<2x32xf32, #tpu.memory_space<vmem>>, vector<2x32xf32>
    %c0_14 = arith.constant 0 : index
    %c0_15 = arith.constant 0 : index
    %15 = vector.load %arg17[%c0_14, %c0_15] : memref<32x384xf32, #tpu.memory_space<vmem>>, vector<32x384xf32>
    %cst_16 = arith.constant dense<0.000000e+00> : vector<2x384xf32>
    %16 = tpu.matmul %14, %15, %cst_16 {dimension_numbers = #tpu.dot_dimension_numbers<[1], [0], [0], [1], [0, 0, 1, 1], [], []>} : vector<2x32xf32>, vector<32x384xf32>, vector<2x384xf32> -> vector<2x384xf32>
    %c0_17 = arith.constant 0 : index
    %c0_18 = arith.constant 0 : index
    %17 = vector.load %arg18[%c0_17, %c0_18] : memref<16x384xf32, #tpu.memory_space<vmem>>, vector<16x384xf32>
    %cst_19 = arith.constant dense<0.000000e+00> : vector<2x384xf32>
    %18 = tpu.matmul %12, %17, %cst_19 {dimension_numbers = #tpu.dot_dimension_numbers<[1], [0], [0], [1], [0, 0, 1, 1], [], []>} : vector<2x16xf32>, vector<16x384xf32>, vector<2x384xf32> -> vector<2x384xf32>
    %19 = arith.addf %16, %18 : vector<2x384xf32>
    %c0_20 = arith.constant 0 : index
    %c0_21 = arith.constant 0 : index
    %20 = vector.load %arg19[%c0_20, %c0_21] : memref<1x384xf32, #tpu.memory_space<vmem>>, vector<1x384xf32>
    %21 = vector.broadcast %20 : vector<1x384xf32> to vector<2x384xf32>
    %22 = arith.addf %19, %21 : vector<2x384xf32>
    %c0_22 = arith.constant 0 : index
    %c0_23 = arith.constant 0 : index
    %23 = vector.load %arg20[%c0_22, %c0_23] : memref<32x384xf32, #tpu.memory_space<vmem>>, vector<32x384xf32>
    %cst_24 = arith.constant dense<0.000000e+00> : vector<2x384xf32>
    %24 = tpu.matmul %13, %23, %cst_24 {dimension_numbers = #tpu.dot_dimension_numbers<[1], [0], [0], [1], [0, 0, 1, 1], [], []>} : vector<2x32xf32>, vector<32x384xf32>, vector<2x384xf32> -> vector<2x384xf32>
    %c0_25 = arith.constant 0 : index
    %c0_26 = arith.constant 0 : index
    %25 = vector.load %arg21[%c0_25, %c0_26] : memref<1x384xf32, #tpu.memory_space<vmem>>, vector<1x384xf32>
    %26 = vector.broadcast %25 : vector<1x384xf32> to vector<2x384xf32>
    %27 = arith.addf %24, %26 : vector<2x384xf32>
    %28 = vector.extract_strided_slice %22 {offsets = [0, 0], sizes = [2, 32], strides = [1, 1]} : vector<2x384xf32> to vector<2x32xf32>
    %29 = vector.extract_strided_slice %27 {offsets = [0, 0], sizes = [2, 32], strides = [1, 1]} : vector<2x384xf32> to vector<2x32xf32>
    %30 = arith.addf %28, %29 : vector<2x32xf32>
    %31 = arith.negf %30 : vector<2x32xf32>
    %32 = math.exp %31 : vector<2x32xf32>
    %cst_27 = arith.constant 1.000000e+00 : f32
    %33 = vector.broadcast %cst_27 : f32 to vector<2x32xf32>
    %34 = arith.addf %33, %32 : vector<2x32xf32>
    %35 = arith.divf %33, %34 : vector<2x32xf32>
    %36 = vector.extract_strided_slice %22 {offsets = [0, 128], sizes = [2, 32], strides = [1, 1]} : vector<2x384xf32> to vector<2x32xf32>
    %37 = vector.extract_strided_slice %27 {offsets = [0, 128], sizes = [2, 32], strides = [1, 1]} : vector<2x384xf32> to vector<2x32xf32>
    %38 = arith.addf %36, %37 : vector<2x32xf32>
    %39 = arith.negf %38 : vector<2x32xf32>
    %40 = math.exp %39 : vector<2x32xf32>
    %cst_28 = arith.constant 1.000000e+00 : f32
    %41 = vector.broadcast %cst_28 : f32 to vector<2x32xf32>
    %42 = arith.addf %41, %40 : vector<2x32xf32>
    %43 = arith.divf %41, %42 : vector<2x32xf32>
    %44 = vector.extract_strided_slice %22 {offsets = [0, 256], sizes = [2, 32], strides = [1, 1]} : vector<2x384xf32> to vector<2x32xf32>
    %45 = vector.extract_strided_slice %27 {offsets = [0, 256], sizes = [2, 32], strides = [1, 1]} : vector<2x384xf32> to vector<2x32xf32>
    %46 = arith.mulf %35, %45 : vector<2x32xf32>
    %47 = arith.addf %44, %46 : vector<2x32xf32>
    %48 = math.tanh %47 : vector<2x32xf32>
    %cst_29 = arith.constant 1.000000e+00 : f32
    %49 = vector.broadcast %cst_29 : f32 to vector<2x32xf32>
    %50 = arith.subf %49, %43 : vector<2x32xf32>
    %51 = arith.mulf %50, %48 : vector<2x32xf32>
    %52 = arith.mulf %43, %13 : vector<2x32xf32>
    %53 = arith.addf %51, %52 : vector<2x32xf32>
    %c0_30 = arith.constant 0 : index
    %c0_31 = arith.constant 0 : index
    %54 = vector.load %arg42[%c0_30, %c0_31] : memref<2x32xf32, #tpu.memory_space<vmem>>, vector<2x32xf32>
    tpu.vector_store %arg42[%c0_30, %c0_31], %53 {strides = array<i32>} : memref<2x32xf32, #tpu.memory_space<vmem>>, vector<2x32xf32>,
    %c0_32 = arith.constant 0 : index
    %c0_33 = arith.constant 0 : index
    %55 = vector.load %arg25[%c0_32, %c0_33] : memref<32x32xf32, #tpu.memory_space<vmem>>, vector<32x32xf32>
    %cst_34 = arith.constant dense<0.000000e+00> : vector<2x32xf32>
    %56 = tpu.matmul %53, %55, %cst_34 {dimension_numbers = #tpu.dot_dimension_numbers<[1], [0], [0], [1], [0, 0, 1, 1], [], []>} : vector<2x32xf32>, vector<32x32xf32>, vector<2x32xf32> -> vector<2x32xf32>
    %c0_35 = arith.constant 0 : index
    %c0_36 = arith.constant 0 : index
    %57 = vector.load %arg26[%c0_35, %c0_36] : memref<1x32xf32, #tpu.memory_space<vmem>>, vector<1x32xf32>
    %58 = vector.broadcast %57 : vector<1x32xf32> to vector<2x32xf32>
    %59 = arith.addf %56, %58 : vector<2x32xf32>
    %c0_37 = arith.constant 0 : index
    %c0_38 = arith.constant 0 : index
    %60 = vector.load %arg5[%c0_37, %c0_38] : memref<16x62xf32, #tpu.memory_space<vmem>>, vector<16x62xf32>
    %c0_39 = arith.constant 0 : index
    %c0_40 = arith.constant 0 : index
    %61 = vector.load %arg22[%c0_39, %c0_40] : memref<62x32xf32, #tpu.memory_space<vmem>>, vector<62x32xf32>
    %cst_41 = arith.constant dense<0.000000e+00> : vector<16x32xf32>
    %62 = tpu.matmul %60, %61, %cst_41 {dimension_numbers = #tpu.dot_dimension_numbers<[1], [0], [0], [1], [0, 0, 1, 1], [], []>} : vector<16x62xf32>, vector<62x32xf32>, vector<16x32xf32> -> vector<16x32xf32>
    %c0_42 = arith.constant 0 : index
    %c0_43 = arith.constant 0 : index
    %63 = vector.load %arg23[%c0_42, %c0_43] : memref<32x32xf32, #tpu.memory_space<vmem>>, vector<32x32xf32>
    %cst_44 = arith.constant dense<0.000000e+00> : vector<16x32xf32>
    %64 = tpu.matmul %62, %63, %cst_44 {dimension_numbers = #tpu.dot_dimension_numbers<[1], [0], [0], [1], [0, 0, 1, 1], [], []>} : vector<16x32xf32>, vector<32x32xf32>, vector<16x32xf32> -> vector<16x32xf32>
    %c0_45 = arith.constant 0 : index
    %c0_46 = arith.constant 0 : index
    %65 = vector.load %arg24[%c0_45, %c0_46] : memref<1x32xf32, #tpu.memory_space<vmem>>, vector<1x32xf32>
    %66 = vector.broadcast %65 : vector<1x32xf32> to vector<16x32xf32>
    %67 = arith.addf %64, %66 : vector<16x32xf32>
    %68 = vector.shape_cast %67 : vector<16x32xf32> to vector<2x8x32xf32>
    %69 = vector.shape_cast %59 : vector<2x32xf32> to vector<2x1x32xf32>
    %c0_47 = arith.constant 0 : index
    %c0_48 = arith.constant 0 : index
    %c0_49 = arith.constant 0 : index
    %70 = vector.load %arg3[%c0_47, %c0_48, %c0_49] : memref<2x8x32xf32, #tpu.memory_space<vmem>>, vector<2x8x32xf32>
    %71 = vector.broadcast %69 : vector<2x1x32xf32> to vector<2x8x32xf32>
    %72 = arith.addf %71, %70 : vector<2x8x32xf32>
    %73 = arith.addf %72, %68 : vector<2x8x32xf32>
    %74 = math.tanh %73 : vector<2x8x32xf32>
    %c0_50 = arith.constant 0 : index
    %c0_51 = arith.constant 0 : index
    %75 = vector.load %arg27[%c0_50, %c0_51] : memref<1x32xf32, #tpu.memory_space<vmem>>, vector<1x32xf32>
    %76 = vector.shape_cast %75 : vector<1x32xf32> to vector<1x1x32xf32>
    %77 = vector.broadcast %76 : vector<1x1x32xf32> to vector<2x8x32xf32>
    %78 = arith.mulf %74, %77 : vector<2x8x32xf32>
    %cst_52 = arith.constant dense<0.000000e+00> : vector<2x8xf32>
    %79 = vector.multi_reduction <add>, %78, %cst_52 [2] : vector<2x8x32xf32> to vector<2x8xf32>
    %80 = arith.negf %79 : vector<2x8xf32>
    %81 = math.exp %80 : vector<2x8xf32>
    %cst_53 = arith.constant 1.000000e+00 : f32
    %82 = vector.broadcast %cst_53 : f32 to vector<2x8xf32>
    %83 = arith.addf %82, %81 : vector<2x8xf32>
    %84 = arith.divf %82, %83 : vector<2x8xf32>
    %cst_54 = arith.constant dense<0.000000e+00> : vector<2xf32>
    %85 = vector.multi_reduction <add>, %84, %cst_54 [1] : vector<2x8xf32> to vector<2xf32>
    %86 = vector.shape_cast %85 : vector<2xf32> to vector<2x1xf32>
    %87 = tpu.reciprocal %86 {approx = true} : vector<2x1xf32> -> vector<2x1xf32>
    %88 = vector.broadcast %87 : vector<2x1xf32> to vector<2x8xf32>
    %89 = arith.mulf %84, %88 : vector<2x8xf32>
    %c0_55 = arith.constant 0 : index
    %c0_56 = arith.constant 0 : index
    %90 = vector.load %arg43[%c0_55, %c0_56] : memref<2x8xf32, #tpu.memory_space<vmem>>, vector<2x8xf32>
    tpu.vector_store %arg43[%c0_55, %c0_56], %89 {strides = array<i32>} : memref<2x8xf32, #tpu.memory_space<vmem>>, vector<2x8xf32>,
    %c0_57 = arith.constant 0 : index
    %c0_58 = arith.constant 0 : index
    %91 = vector.load %arg6[%c0_57, %c0_58] : memref<2x8xf32, #tpu.memory_space<vmem>>, vector<2x8xf32>
    %92 = arith.addf %91, %89 : vector<2x8xf32>
    %c0_59 = arith.constant 0 : index
    %c0_60 = arith.constant 0 : index
    %93 = vector.load %arg44[%c0_59, %c0_60] : memref<2x8xf32, #tpu.memory_space<vmem>>, vector<2x8xf32>
    tpu.vector_store %arg44[%c0_59, %c0_60], %92 {strides = array<i32>} : memref<2x8xf32, #tpu.memory_space<vmem>>, vector<2x8xf32>,
    %94 = vector.shape_cast %89 : vector<2x8xf32> to vector<2x8x1xf32>
    %c0_61 = arith.constant 0 : index
    %c0_62 = arith.constant 0 : index
    %c0_63 = arith.constant 0 : index
    %95 = vector.load %arg4[%c0_61, %c0_62, %c0_63] : memref<2x8x32xf32, #tpu.memory_space<vmem>>, vector<2x8x32xf32>
    %96 = vector.broadcast %94 : vector<2x8x1xf32> to vector<2x8x32xf32>
    %97 = arith.mulf %96, %95 : vector<2x8x32xf32>
    %cst_64 = arith.constant dense<0.000000e+00> : vector<2x32xf32>
    %98 = vector.multi_reduction <add>, %97, %cst_64 [1] : vector<2x8x32xf32> to vector<2x32xf32>
    %c0_65 = arith.constant 0 : index
    %c0_66 = arith.constant 0 : index
    %99 = vector.load %arg45[%c0_65, %c0_66] : memref<2x32xf32, #tpu.memory_space<vmem>>, vector<2x32xf32>
    tpu.vector_store %arg45[%c0_65, %c0_66], %98 {strides = array<i32>} : memref<2x32xf32, #tpu.memory_space<vmem>>, vector<2x32xf32>,
    %c0_67 = arith.constant 0 : index
    %c0_68 = arith.constant 0 : index
    %100 = vector.load %arg28[%c0_67, %c0_68] : memref<32x32xf32, #tpu.memory_space<vmem>>, vector<32x32xf32>
    %cst_69 = arith.constant dense<0.000000e+00> : vector<2x32xf32>
    %101 = tpu.matmul %98, %100, %cst_69 {dimension_numbers = #tpu.dot_dimension_numbers<[1], [0], [0], [1], [0, 0, 1, 1], [], []>} : vector<2x32xf32>, vector<32x32xf32>, vector<2x32xf32> -> vector<2x32xf32>
    %c0_70 = arith.constant 0 : index
    %c0_71 = arith.constant 0 : index
    %102 = vector.load %arg29[%c0_70, %c0_71] : memref<32x32xf32, #tpu.memory_space<vmem>>, vector<32x32xf32>
    %cst_72 = arith.constant dense<0.000000e+00> : vector<2x32xf32>
    %103 = tpu.matmul %53, %102, %cst_72 {dimension_numbers = #tpu.dot_dimension_numbers<[1], [0], [0], [1], [0, 0, 1, 1], [], []>} : vector<2x32xf32>, vector<32x32xf32>, vector<2x32xf32> -> vector<2x32xf32>
    %104 = arith.addf %101, %103 : vector<2x32xf32>
    %c0_73 = arith.constant 0 : index
    %c0_74 = arith.constant 0 : index
    %105 = vector.load %arg30[%c0_73, %c0_74] : memref<1x32xf32, #tpu.memory_space<vmem>>, vector<1x32xf32>
    %106 = vector.broadcast %105 : vector<1x32xf32> to vector<2x32xf32>
    %107 = arith.addf %104, %106 : vector<2x32xf32>
    %c0_75 = arith.constant 0 : index
    %c0_76 = arith.constant 0 : index
    %108 = vector.load %arg7[%c0_75, %c0_76] : memref<2x32xf32, #tpu.memory_space<vmem>>, vector<2x32xf32>
    %c0_77 = arith.constant 0 : index
    %c0_78 = arith.constant 0 : index
    %109 = vector.load %arg8[%c0_77, %c0_78] : memref<2x32xf32, #tpu.memory_space<vmem>>, vector<2x32xf32>
    %c0_79 = arith.constant 0 : index
    %c0_80 = arith.constant 0 : index
    %110 = vector.load %arg31[%c0_79, %c0_80] : memref<32x512xf32, #tpu.memory_space<vmem>>, vector<32x512xf32>
    %c0_81 = arith.constant 0 : index
    %c0_82 = arith.constant 0 : index
    %111 = vector.load %arg32[%c0_81, %c0_82] : memref<32x512xf32, #tpu.memory_space<vmem>>, vector<32x512xf32>
    %c0_83 = arith.constant 0 : index
    %c0_84 = arith.constant 0 : index
    %112 = vector.load %arg33[%c0_83, %c0_84] : memref<1x512xf32, #tpu.memory_space<vmem>>, vector<1x512xf32>
    %cst_85 = arith.constant dense<0.000000e+00> : vector<2x512xf32>
    %113 = tpu.matmul %107, %110, %cst_85 {dimension_numbers = #tpu.dot_dimension_numbers<[1], [0], [0], [1], [0, 0, 1, 1], [], []>} : vector<2x32xf32>, vector<32x512xf32>, vector<2x512xf32> -> vector<2x512xf32>
    %cst_86 = arith.constant dense<0.000000e+00> : vector<2x512xf32>
    %114 = tpu.matmul %108, %111, %cst_86 {dimension_numbers = #tpu.dot_dimension_numbers<[1], [0], [0], [1], [0, 0, 1, 1], [], []>} : vector<2x32xf32>, vector<32x512xf32>, vector<2x512xf32> -> vector<2x512xf32>
    %115 = arith.addf %113, %114 : vector<2x512xf32>
    %116 = vector.broadcast %112 : vector<1x512xf32> to vector<2x512xf32>
    %117 = arith.addf %115, %116 : vector<2x512xf32>
    %118 = vector.extract_strided_slice %117 {offsets = [0, 0], sizes = [2, 32], strides = [1, 1]} : vector<2x512xf32> to vector<2x32xf32>
    %119 = arith.negf %118 : vector<2x32xf32>
    %120 = math.exp %119 : vector<2x32xf32>
    %cst_87 = arith.constant 1.000000e+00 : f32
    %121 = vector.broadcast %cst_87 : f32 to vector<2x32xf32>
    %122 = arith.addf %121, %120 : vector<2x32xf32>
    %123 = arith.divf %121, %122 : vector<2x32xf32>
    %124 = vector.extract_strided_slice %117 {offsets = [0, 128], sizes = [2, 32], strides = [1, 1]} : vector<2x512xf32> to vector<2x32xf32>
    %125 = arith.negf %124 : vector<2x32xf32>
    %126 = math.exp %125 : vector<2x32xf32>
    %cst_88 = arith.constant 1.000000e+00 : f32
    %127 = vector.broadcast %cst_88 : f32 to vector<2x32xf32>
    %128 = arith.addf %127, %126 : vector<2x32xf32>
    %129 = arith.divf %127, %128 : vector<2x32xf32>
    %130 = vector.extract_strided_slice %117 {offsets = [0, 256], sizes = [2, 32], strides = [1, 1]} : vector<2x512xf32> to vector<2x32xf32>
    %131 = math.tanh %130 : vector<2x32xf32>
    %132 = vector.extract_strided_slice %117 {offsets = [0, 384], sizes = [2, 32], strides = [1, 1]} : vector<2x512xf32> to vector<2x32xf32>
    %133 = arith.negf %132 : vector<2x32xf32>
    %134 = math.exp %133 : vector<2x32xf32>
    %cst_89 = arith.constant 1.000000e+00 : f32
    %135 = vector.broadcast %cst_89 : f32 to vector<2x32xf32>
    %136 = arith.addf %135, %134 : vector<2x32xf32>
    %137 = arith.divf %135, %136 : vector<2x32xf32>
    %138 = arith.mulf %129, %109 : vector<2x32xf32>
    %139 = arith.mulf %123, %131 : vector<2x32xf32>
    %140 = arith.addf %138, %139 : vector<2x32xf32>
    %141 = math.tanh %140 : vector<2x32xf32>
    %142 = arith.mulf %137, %141 : vector<2x32xf32>
    %143 = arith.addf %107, %142 : vector<2x32xf32>
    %c0_90 = arith.constant 0 : index
    %c0_91 = arith.constant 0 : index
    %144 = vector.load %arg9[%c0_90, %c0_91] : memref<2x32xf32, #tpu.memory_space<vmem>>, vector<2x32xf32>
    %c0_92 = arith.constant 0 : index
    %c0_93 = arith.constant 0 : index
    %145 = vector.load %arg10[%c0_92, %c0_93] : memref<2x32xf32, #tpu.memory_space<vmem>>, vector<2x32xf32>
    %c0_94 = arith.constant 0 : index
    %c0_95 = arith.constant 0 : index
    %146 = vector.load %arg34[%c0_94, %c0_95] : memref<32x512xf32, #tpu.memory_space<vmem>>, vector<32x512xf32>
    %c0_96 = arith.constant 0 : index
    %c0_97 = arith.constant 0 : index
    %147 = vector.load %arg35[%c0_96, %c0_97] : memref<32x512xf32, #tpu.memory_space<vmem>>, vector<32x512xf32>
    %c0_98 = arith.constant 0 : index
    %c0_99 = arith.constant 0 : index
    %148 = vector.load %arg36[%c0_98, %c0_99] : memref<1x512xf32, #tpu.memory_space<vmem>>, vector<1x512xf32>
    %cst_100 = arith.constant dense<0.000000e+00> : vector<2x512xf32>
    %149 = tpu.matmul %143, %146, %cst_100 {dimension_numbers = #tpu.dot_dimension_numbers<[1], [0], [0], [1], [0, 0, 1, 1], [], []>} : vector<2x32xf32>, vector<32x512xf32>, vector<2x512xf32> -> vector<2x512xf32>
    %cst_101 = arith.constant dense<0.000000e+00> : vector<2x512xf32>
    %150 = tpu.matmul %144, %147, %cst_101 {dimension_numbers = #tpu.dot_dimension_numbers<[1], [0], [0], [1], [0, 0, 1, 1], [], []>} : vector<2x32xf32>, vector<32x512xf32>, vector<2x512xf32> -> vector<2x512xf32>
    %151 = arith.addf %149, %150 : vector<2x512xf32>
    %152 = vector.broadcast %148 : vector<1x512xf32> to vector<2x512xf32>
    %153 = arith.addf %151, %152 : vector<2x512xf32>
    %154 = vector.extract_strided_slice %153 {offsets = [0, 0], sizes = [2, 32], strides = [1, 1]} : vector<2x512xf32> to vector<2x32xf32>
    %155 = arith.negf %154 : vector<2x32xf32>
    %156 = math.exp %155 : vector<2x32xf32>
    %cst_102 = arith.constant 1.000000e+00 : f32
    %157 = vector.broadcast %cst_102 : f32 to vector<2x32xf32>
    %158 = arith.addf %157, %156 : vector<2x32xf32>
    %159 = arith.divf %157, %158 : vector<2x32xf32>
    %160 = vector.extract_strided_slice %153 {offsets = [0, 128], sizes = [2, 32], strides = [1, 1]} : vector<2x512xf32> to vector<2x32xf32>
    %161 = arith.negf %160 : vector<2x32xf32>
    %162 = math.exp %161 : vector<2x32xf32>
    %cst_103 = arith.constant 1.000000e+00 : f32
    %163 = vector.broadcast %cst_103 : f32 to vector<2x32xf32>
    %164 = arith.addf %163, %162 : vector<2x32xf32>
    %165 = arith.divf %163, %164 : vector<2x32xf32>
    %166 = vector.extract_strided_slice %153 {offsets = [0, 256], sizes = [2, 32], strides = [1, 1]} : vector<2x512xf32> to vector<2x32xf32>
    %167 = math.tanh %166 : vector<2x32xf32>
    %168 = vector.extract_strided_slice %153 {offsets = [0, 384], sizes = [2, 32], strides = [1, 1]} : vector<2x512xf32> to vector<2x32xf32>
    %169 = arith.negf %168 : vector<2x32xf32>
    %170 = math.exp %169 : vector<2x32xf32>
    %cst_104 = arith.constant 1.000000e+00 : f32
    %171 = vector.broadcast %cst_104 : f32 to vector<2x32xf32>
    %172 = arith.addf %171, %170 : vector<2x32xf32>
    %173 = arith.divf %171, %172 : vector<2x32xf32>
    %174 = arith.mulf %165, %145 : vector<2x32xf32>
    %175 = arith.mulf %159, %167 : vector<2x32xf32>
    %176 = arith.addf %174, %175 : vector<2x32xf32>
    %177 = math.tanh %176 : vector<2x32xf32>
    %178 = arith.mulf %173, %177 : vector<2x32xf32>
    %179 = arith.addf %143, %178 : vector<2x32xf32>
    %c0_105 = arith.constant 0 : index
    %c0_106 = arith.constant 0 : index
    %180 = vector.load %arg46[%c0_105, %c0_106] : memref<2x32xf32, #tpu.memory_space<vmem>>, vector<2x32xf32>
    tpu.vector_store %arg46[%c0_105, %c0_106], %142 {strides = array<i32>} : memref<2x32xf32, #tpu.memory_space<vmem>>, vector<2x32xf32>,
    %c0_107 = arith.constant 0 : index
    %c0_108 = arith.constant 0 : index
    %181 = vector.load %arg47[%c0_107, %c0_108] : memref<2x32xf32, #tpu.memory_space<vmem>>, vector<2x32xf32>
    tpu.vector_store %arg47[%c0_107, %c0_108], %140 {strides = array<i32>} : memref<2x32xf32, #tpu.memory_space<vmem>>, vector<2x32xf32>,
    %c0_109 = arith.constant 0 : index
    %c0_110 = arith.constant 0 : index
    %182 = vector.load %arg48[%c0_109, %c0_110] : memref<2x32xf32, #tpu.memory_space<vmem>>, vector<2x32xf32>
    tpu.vector_store %arg48[%c0_109, %c0_110], %178 {strides = array<i32>} : memref<2x32xf32, #tpu.memory_space<vmem>>, vector<2x32xf32>,
    %c0_111 = arith.constant 0 : index
    %c0_112 = arith.constant 0 : index
    %183 = vector.load %arg49[%c0_111, %c0_112] : memref<2x32xf32, #tpu.memory_space<vmem>>, vector<2x32xf32>
    tpu.vector_store %arg49[%c0_111, %c0_112], %176 {strides = array<i32>} : memref<2x32xf32, #tpu.memory_space<vmem>>, vector<2x32xf32>,
    %184 = tpu.concatenate %0, %179 in 1 : vector<2x16xf32>, vector<2x32xf32> -> vector<2x48xf32>
    %c0_113 = arith.constant 0 : index
    %c0_114 = arith.constant 0 : index
    %c0_115 = arith.constant 0 : index
    %185 = vector.load %arg11[%c0_113, %c0_114, %c0_115] : memref<4x2x48xf32, #tpu.memory_space<vmem>>, vector<1x2x48xf32>
    %186 = vector.shape_cast %185 : vector<1x2x48xf32> to vector<2x48xf32>
    %c0_116 = arith.constant 0 : index
    %c0_117 = arith.constant 0 : index
    %c0_118 = arith.constant 0 : index
    %187 = vector.load %arg12[%c0_116, %c0_117, %c0_118] : memref<4x2x48xf32, #tpu.memory_space<vmem>>, vector<1x2x48xf32>
    %188 = vector.shape_cast %187 : vector<1x2x48xf32> to vector<2x48xf32>
    %c0_119 = arith.constant 0 : index
    %c0_120 = arith.constant 0 : index
    %c0_121 = arith.constant 0 : index
    %189 = vector.load %arg37[%c0_119, %c0_120, %c0_121] : memref<4x48x512xf32, #tpu.memory_space<vmem>>, vector<1x48x512xf32>
    %190 = vector.shape_cast %189 : vector<1x48x512xf32> to vector<48x512xf32>
    %c0_122 = arith.constant 0 : index
    %c0_123 = arith.constant 0 : index
    %c0_124 = arith.constant 0 : index
    %191 = vector.load %arg38[%c0_122, %c0_123, %c0_124] : memref<4x48x512xf32, #tpu.memory_space<vmem>>, vector<1x48x512xf32>
    %192 = vector.shape_cast %191 : vector<1x48x512xf32> to vector<48x512xf32>
    %c0_125 = arith.constant 0 : index
    %c0_126 = arith.constant 0 : index
    %c0_127 = arith.constant 0 : index
    %193 = vector.load %arg39[%c0_125, %c0_126, %c0_127] : memref<4x1x512xf32, #tpu.memory_space<vmem>>, vector<1x1x512xf32>
    %194 = vector.shape_cast %193 : vector<1x1x512xf32> to vector<1x512xf32>
    %cst_128 = arith.constant dense<0.000000e+00> : vector<2x512xf32>
    %195 = tpu.matmul %184, %190, %cst_128 {dimension_numbers = #tpu.dot_dimension_numbers<[1], [0], [0], [1], [0, 0, 1, 1], [], []>} : vector<2x48xf32>, vector<48x512xf32>, vector<2x512xf32> -> vector<2x512xf32>
    %cst_129 = arith.constant dense<0.000000e+00> : vector<2x512xf32>
    %196 = tpu.matmul %186, %192, %cst_129 {dimension_numbers = #tpu.dot_dimension_numbers<[1], [0], [0], [1], [0, 0, 1, 1], [], []>} : vector<2x48xf32>, vector<48x512xf32>, vector<2x512xf32> -> vector<2x512xf32>
    %197 = arith.addf %195, %196 : vector<2x512xf32>
    %198 = vector.broadcast %194 : vector<1x512xf32> to vector<2x512xf32>
    %199 = arith.addf %197, %198 : vector<2x512xf32>
    %200 = vector.extract_strided_slice %199 {offsets = [0, 0], sizes = [2, 48], strides = [1, 1]} : vector<2x512xf32> to vector<2x48xf32>
    %201 = arith.negf %200 : vector<2x48xf32>
    %202 = math.exp %201 : vector<2x48xf32>
    %cst_130 = arith.constant 1.000000e+00 : f32
    %203 = vector.broadcast %cst_130 : f32 to vector<2x48xf32>
    %204 = arith.addf %203, %202 : vector<2x48xf32>
    %205 = arith.divf %203, %204 : vector<2x48xf32>
    %206 = vector.extract_strided_slice %199 {offsets = [0, 128], sizes = [2, 48], strides = [1, 1]} : vector<2x512xf32> to vector<2x48xf32>
    %207 = arith.negf %206 : vector<2x48xf32>
    %208 = math.exp %207 : vector<2x48xf32>
    %cst_131 = arith.constant 1.000000e+00 : f32
    %209 = vector.broadcast %cst_131 : f32 to vector<2x48xf32>
    %210 = arith.addf %209, %208 : vector<2x48xf32>
    %211 = arith.divf %209, %210 : vector<2x48xf32>
    %212 = vector.extract_strided_slice %199 {offsets = [0, 256], sizes = [2, 48], strides = [1, 1]} : vector<2x512xf32> to vector<2x48xf32>
    %213 = math.tanh %212 : vector<2x48xf32>
    %214 = vector.extract_strided_slice %199 {offsets = [0, 384], sizes = [2, 48], strides = [1, 1]} : vector<2x512xf32> to vector<2x48xf32>
    %215 = arith.negf %214 : vector<2x48xf32>
    %216 = math.exp %215 : vector<2x48xf32>
    %cst_132 = arith.constant 1.000000e+00 : f32
    %217 = vector.broadcast %cst_132 : f32 to vector<2x48xf32>
    %218 = arith.addf %217, %216 : vector<2x48xf32>
    %219 = arith.divf %217, %218 : vector<2x48xf32>
    %220 = arith.mulf %211, %188 : vector<2x48xf32>
    %221 = arith.mulf %205, %213 : vector<2x48xf32>
    %222 = arith.addf %220, %221 : vector<2x48xf32>
    %223 = math.tanh %222 : vector<2x48xf32>
    %224 = arith.mulf %219, %223 : vector<2x48xf32>
    %c0_133 = arith.constant 0 : index
    %c0_134 = arith.constant 0 : index
    %c0_135 = arith.constant 0 : index
    %225 = vector.load %arg50[%c0_133, %c0_134, %c0_135] : memref<4x2x48xf32, #tpu.memory_space<vmem>>, vector<1x2x48xf32>
    %226 = vector.shape_cast %225 : vector<1x2x48xf32> to vector<2x48xf32>
    %227 = vector.shape_cast %224 : vector<2x48xf32> to vector<1x2x48xf32>
    tpu.vector_store %arg50[%c0_133, %c0_134, %c0_135], %227 {strides = array<i32>} : memref<4x2x48xf32, #tpu.memory_space<vmem>>, vector<1x2x48xf32>,
    %c0_136 = arith.constant 0 : index
    %c0_137 = arith.constant 0 : index
    %c0_138 = arith.constant 0 : index
    %228 = vector.load %arg51[%c0_136, %c0_137, %c0_138] : memref<4x2x48xf32, #tpu.memory_space<vmem>>, vector<1x2x48xf32>
    %229 = vector.shape_cast %228 : vector<1x2x48xf32> to vector<2x48xf32>
    %230 = vector.shape_cast %222 : vector<2x48xf32> to vector<1x2x48xf32>
    tpu.vector_store %arg51[%c0_136, %c0_137, %c0_138], %230 {strides = array<i32>} : memref<4x2x48xf32, #tpu.memory_space<vmem>>, vector<1x2x48xf32>,
    %231 = arith.addf %184, %224 : vector<2x48xf32>
    %c1 = arith.constant 1 : index
    %c0_139 = arith.constant 0 : index
    %c0_140 = arith.constant 0 : index
    %232 = vector.load %arg11[%c1, %c0_139, %c0_140] : memref<4x2x48xf32, #tpu.memory_space<vmem>>, vector<1x2x48xf32>
    %233 = vector.shape_cast %232 : vector<1x2x48xf32> to vector<2x48xf32>
    %c1_141 = arith.constant 1 : index
    %c0_142 = arith.constant 0 : index
    %c0_143 = arith.constant 0 : index
    %234 = vector.load %arg12[%c1_141, %c0_142, %c0_143] : memref<4x2x48xf32, #tpu.memory_space<vmem>>, vector<1x2x48xf32>
    %235 = vector.shape_cast %234 : vector<1x2x48xf32> to vector<2x48xf32>
    %c1_144 = arith.constant 1 : index
    %c0_145 = arith.constant 0 : index
    %c0_146 = arith.constant 0 : index
    %236 = vector.load %arg37[%c1_144, %c0_145, %c0_146] : memref<4x48x512xf32, #tpu.memory_space<vmem>>, vector<1x48x512xf32>
    %237 = vector.shape_cast %236 : vector<1x48x512xf32> to vector<48x512xf32>
    %c1_147 = arith.constant 1 : index
    %c0_148 = arith.constant 0 : index
    %c0_149 = arith.constant 0 : index
    %238 = vector.load %arg38[%c1_147, %c0_148, %c0_149] : memref<4x48x512xf32, #tpu.memory_space<vmem>>, vector<1x48x512xf32>
    %239 = vector.shape_cast %238 : vector<1x48x512xf32> to vector<48x512xf32>
    %c1_150 = arith.constant 1 : index
    %c0_151 = arith.constant 0 : index
    %c0_152 = arith.constant 0 : index
    %240 = vector.load %arg39[%c1_150, %c0_151, %c0_152] : memref<4x1x512xf32, #tpu.memory_space<vmem>>, vector<1x1x512xf32>
    %241 = vector.shape_cast %240 : vector<1x1x512xf32> to vector<1x512xf32>
    %cst_153 = arith.constant dense<0.000000e+00> : vector<2x512xf32>
    %242 = tpu.matmul %231, %237, %cst_153 {dimension_numbers = #tpu.dot_dimension_numbers<[1], [0], [0], [1], [0, 0, 1, 1], [], []>} : vector<2x48xf32>, vector<48x512xf32>, vector<2x512xf32> -> vector<2x512xf32>
    %cst_154 = arith.constant dense<0.000000e+00> : vector<2x512xf32>
    %243 = tpu.matmul %233, %239, %cst_154 {dimension_numbers = #tpu.dot_dimension_numbers<[1], [0], [0], [1], [0, 0, 1, 1], [], []>} : vector<2x48xf32>, vector<48x512xf32>, vector<2x512xf32> -> vector<2x512xf32>
    %244 = arith.addf %242, %243 : vector<2x512xf32>
    %245 = vector.broadcast %241 : vector<1x512xf32> to vector<2x512xf32>
    %246 = arith.addf %244, %245 : vector<2x512xf32>
    %247 = vector.extract_strided_slice %246 {offsets = [0, 0], sizes = [2, 48], strides = [1, 1]} : vector<2x512xf32> to vector<2x48xf32>
    %248 = arith.negf %247 : vector<2x48xf32>
    %249 = math.exp %248 : vector<2x48xf32>
    %cst_155 = arith.constant 1.000000e+00 : f32
    %250 = vector.broadcast %cst_155 : f32 to vector<2x48xf32>
    %251 = arith.addf %250, %249 : vector<2x48xf32>
    %252 = arith.divf %250, %251 : vector<2x48xf32>
    %253 = vector.extract_strided_slice %246 {offsets = [0, 128], sizes = [2, 48], strides = [1, 1]} : vector<2x512xf32> to vector<2x48xf32>
    %254 = arith.negf %253 : vector<2x48xf32>
    %255 = math.exp %254 : vector<2x48xf32>
    %cst_156 = arith.constant 1.000000e+00 : f32
    %256 = vector.broadcast %cst_156 : f32 to vector<2x48xf32>
    %257 = arith.addf %256, %255 : vector<2x48xf32>
    %258 = arith.divf %256, %257 : vector<2x48xf32>
    %259 = vector.extract_strided_slice %246 {offsets = [0, 256], sizes = [2, 48], strides = [1, 1]} : vector<2x512xf32> to vector<2x48xf32>
    %260 = math.tanh %259 : vector<2x48xf32>
    %261 = vector.extract_strided_slice %246 {offsets = [0, 384], sizes = [2, 48], strides = [1, 1]} : vector<2x512xf32> to vector<2x48xf32>
    %262 = arith.negf %261 : vector<2x48xf32>
    %263 = math.exp %262 : vector<2x48xf32>
    %cst_157 = arith.constant 1.000000e+00 : f32
    %264 = vector.broadcast %cst_157 : f32 to vector<2x48xf32>
    %265 = arith.addf %264, %263 : vector<2x48xf32>
    %266 = arith.divf %264, %265 : vector<2x48xf32>
    %267 = arith.mulf %258, %235 : vector<2x48xf32>
    %268 = arith.mulf %252, %260 : vector<2x48xf32>
    %269 = arith.addf %267, %268 : vector<2x48xf32>
    %270 = math.tanh %269 : vector<2x48xf32>
    %271 = arith.mulf %266, %270 : vector<2x48xf32>
    %c1_158 = arith.constant 1 : index
    %c0_159 = arith.constant 0 : index
    %c0_160 = arith.constant 0 : index
    %272 = vector.load %arg50[%c1_158, %c0_159, %c0_160] : memref<4x2x48xf32, #tpu.memory_space<vmem>>, vector<1x2x48xf32>
    %273 = vector.shape_cast %272 : vector<1x2x48xf32> to vector<2x48xf32>
    %274 = vector.shape_cast %271 : vector<2x48xf32> to vector<1x2x48xf32>
    tpu.vector_store %arg50[%c1_158, %c0_159, %c0_160], %274 {strides = array<i32>} : memref<4x2x48xf32, #tpu.memory_space<vmem>>, vector<1x2x48xf32>,
    %c1_161 = arith.constant 1 : index
    %c0_162 = arith.constant 0 : index
    %c0_163 = arith.constant 0 : index
    %275 = vector.load %arg51[%c1_161, %c0_162, %c0_163] : memref<4x2x48xf32, #tpu.memory_space<vmem>>, vector<1x2x48xf32>
    %276 = vector.shape_cast %275 : vector<1x2x48xf32> to vector<2x48xf32>
    %277 = vector.shape_cast %269 : vector<2x48xf32> to vector<1x2x48xf32>
    tpu.vector_store %arg51[%c1_161, %c0_162, %c0_163], %277 {strides = array<i32>} : memref<4x2x48xf32, #tpu.memory_space<vmem>>, vector<1x2x48xf32>,
    %278 = arith.addf %231, %271 : vector<2x48xf32>
    %c2 = arith.constant 2 : index
    %c0_164 = arith.constant 0 : index
    %c0_165 = arith.constant 0 : index
    %279 = vector.load %arg11[%c2, %c0_164, %c0_165] : memref<4x2x48xf32, #tpu.memory_space<vmem>>, vector<1x2x48xf32>
    %280 = vector.shape_cast %279 : vector<1x2x48xf32> to vector<2x48xf32>
    %c2_166 = arith.constant 2 : index
    %c0_167 = arith.constant 0 : index
    %c0_168 = arith.constant 0 : index
    %281 = vector.load %arg12[%c2_166, %c0_167, %c0_168] : memref<4x2x48xf32, #tpu.memory_space<vmem>>, vector<1x2x48xf32>
    %282 = vector.shape_cast %281 : vector<1x2x48xf32> to vector<2x48xf32>
    %c2_169 = arith.constant 2 : index
    %c0_170 = arith.constant 0 : index
    %c0_171 = arith.constant 0 : index
    %283 = vector.load %arg37[%c2_169, %c0_170, %c0_171] : memref<4x48x512xf32, #tpu.memory_space<vmem>>, vector<1x48x512xf32>
    %284 = vector.shape_cast %283 : vector<1x48x512xf32> to vector<48x512xf32>
    %c2_172 = arith.constant 2 : index
    %c0_173 = arith.constant 0 : index
    %c0_174 = arith.constant 0 : index
    %285 = vector.load %arg38[%c2_172, %c0_173, %c0_174] : memref<4x48x512xf32, #tpu.memory_space<vmem>>, vector<1x48x512xf32>
    %286 = vector.shape_cast %285 : vector<1x48x512xf32> to vector<48x512xf32>
    %c2_175 = arith.constant 2 : index
    %c0_176 = arith.constant 0 : index
    %c0_177 = arith.constant 0 : index
    %287 = vector.load %arg39[%c2_175, %c0_176, %c0_177] : memref<4x1x512xf32, #tpu.memory_space<vmem>>, vector<1x1x512xf32>
    %288 = vector.shape_cast %287 : vector<1x1x512xf32> to vector<1x512xf32>
    %cst_178 = arith.constant dense<0.000000e+00> : vector<2x512xf32>
    %289 = tpu.matmul %278, %284, %cst_178 {dimension_numbers = #tpu.dot_dimension_numbers<[1], [0], [0], [1], [0, 0, 1, 1], [], []>} : vector<2x48xf32>, vector<48x512xf32>, vector<2x512xf32> -> vector<2x512xf32>
    %cst_179 = arith.constant dense<0.000000e+00> : vector<2x512xf32>
    %290 = tpu.matmul %280, %286, %cst_179 {dimension_numbers = #tpu.dot_dimension_numbers<[1], [0], [0], [1], [0, 0, 1, 1], [], []>} : vector<2x48xf32>, vector<48x512xf32>, vector<2x512xf32> -> vector<2x512xf32>
    %291 = arith.addf %289, %290 : vector<2x512xf32>
    %292 = vector.broadcast %288 : vector<1x512xf32> to vector<2x512xf32>
    %293 = arith.addf %291, %292 : vector<2x512xf32>
    %294 = vector.extract_strided_slice %293 {offsets = [0, 0], sizes = [2, 48], strides = [1, 1]} : vector<2x512xf32> to vector<2x48xf32>
    %295 = arith.negf %294 : vector<2x48xf32>
    %296 = math.exp %295 : vector<2x48xf32>
    %cst_180 = arith.constant 1.000000e+00 : f32
    %297 = vector.broadcast %cst_180 : f32 to vector<2x48xf32>
    %298 = arith.addf %297, %296 : vector<2x48xf32>
    %299 = arith.divf %297, %298 : vector<2x48xf32>
    %300 = vector.extract_strided_slice %293 {offsets = [0, 128], sizes = [2, 48], strides = [1, 1]} : vector<2x512xf32> to vector<2x48xf32>
    %301 = arith.negf %300 : vector<2x48xf32>
    %302 = math.exp %301 : vector<2x48xf32>
    %cst_181 = arith.constant 1.000000e+00 : f32
    %303 = vector.broadcast %cst_181 : f32 to vector<2x48xf32>
    %304 = arith.addf %303, %302 : vector<2x48xf32>
    %305 = arith.divf %303, %304 : vector<2x48xf32>
    %306 = vector.extract_strided_slice %293 {offsets = [0, 256], sizes = [2, 48], strides = [1, 1]} : vector<2x512xf32> to vector<2x48xf32>
    %307 = math.tanh %306 : vector<2x48xf32>
    %308 = vector.extract_strided_slice %293 {offsets = [0, 384], sizes = [2, 48], strides = [1, 1]} : vector<2x512xf32> to vector<2x48xf32>
    %309 = arith.negf %308 : vector<2x48xf32>
    %310 = math.exp %309 : vector<2x48xf32>
    %cst_182 = arith.constant 1.000000e+00 : f32
    %311 = vector.broadcast %cst_182 : f32 to vector<2x48xf32>
    %312 = arith.addf %311, %310 : vector<2x48xf32>
    %313 = arith.divf %311, %312 : vector<2x48xf32>
    %314 = arith.mulf %305, %282 : vector<2x48xf32>
    %315 = arith.mulf %299, %307 : vector<2x48xf32>
    %316 = arith.addf %314, %315 : vector<2x48xf32>
    %317 = math.tanh %316 : vector<2x48xf32>
    %318 = arith.mulf %313, %317 : vector<2x48xf32>
    %c2_183 = arith.constant 2 : index
    %c0_184 = arith.constant 0 : index
    %c0_185 = arith.constant 0 : index
    %319 = vector.load %arg50[%c2_183, %c0_184, %c0_185] : memref<4x2x48xf32, #tpu.memory_space<vmem>>, vector<1x2x48xf32>
    %320 = vector.shape_cast %319 : vector<1x2x48xf32> to vector<2x48xf32>
    %321 = vector.shape_cast %318 : vector<2x48xf32> to vector<1x2x48xf32>
    tpu.vector_store %arg50[%c2_183, %c0_184, %c0_185], %321 {strides = array<i32>} : memref<4x2x48xf32, #tpu.memory_space<vmem>>, vector<1x2x48xf32>,
    %c2_186 = arith.constant 2 : index
    %c0_187 = arith.constant 0 : index
    %c0_188 = arith.constant 0 : index
    %322 = vector.load %arg51[%c2_186, %c0_187, %c0_188] : memref<4x2x48xf32, #tpu.memory_space<vmem>>, vector<1x2x48xf32>
    %323 = vector.shape_cast %322 : vector<1x2x48xf32> to vector<2x48xf32>
    %324 = vector.shape_cast %316 : vector<2x48xf32> to vector<1x2x48xf32>
    tpu.vector_store %arg51[%c2_186, %c0_187, %c0_188], %324 {strides = array<i32>} : memref<4x2x48xf32, #tpu.memory_space<vmem>>, vector<1x2x48xf32>,
    %325 = arith.addf %278, %318 : vector<2x48xf32>
    %c3 = arith.constant 3 : index
    %c0_189 = arith.constant 0 : index
    %c0_190 = arith.constant 0 : index
    %326 = vector.load %arg11[%c3, %c0_189, %c0_190] : memref<4x2x48xf32, #tpu.memory_space<vmem>>, vector<1x2x48xf32>
    %327 = vector.shape_cast %326 : vector<1x2x48xf32> to vector<2x48xf32>
    %c3_191 = arith.constant 3 : index
    %c0_192 = arith.constant 0 : index
    %c0_193 = arith.constant 0 : index
    %328 = vector.load %arg12[%c3_191, %c0_192, %c0_193] : memref<4x2x48xf32, #tpu.memory_space<vmem>>, vector<1x2x48xf32>
    %329 = vector.shape_cast %328 : vector<1x2x48xf32> to vector<2x48xf32>
    %c3_194 = arith.constant 3 : index
    %c0_195 = arith.constant 0 : index
    %c0_196 = arith.constant 0 : index
    %330 = vector.load %arg37[%c3_194, %c0_195, %c0_196] : memref<4x48x512xf32, #tpu.memory_space<vmem>>, vector<1x48x512xf32>
    %331 = vector.shape_cast %330 : vector<1x48x512xf32> to vector<48x512xf32>
    %c3_197 = arith.constant 3 : index
    %c0_198 = arith.constant 0 : index
    %c0_199 = arith.constant 0 : index
    %332 = vector.load %arg38[%c3_197, %c0_198, %c0_199] : memref<4x48x512xf32, #tpu.memory_space<vmem>>, vector<1x48x512xf32>
    %333 = vector.shape_cast %332 : vector<1x48x512xf32> to vector<48x512xf32>
    %c3_200 = arith.constant 3 : index
    %c0_201 = arith.constant 0 : index
    %c0_202 = arith.constant 0 : index
    %334 = vector.load %arg39[%c3_200, %c0_201, %c0_202] : memref<4x1x512xf32, #tpu.memory_space<vmem>>, vector<1x1x512xf32>
    %335 = vector.shape_cast %334 : vector<1x1x512xf32> to vector<1x512xf32>
    %cst_203 = arith.constant dense<0.000000e+00> : vector<2x512xf32>
    %336 = tpu.matmul %325, %331, %cst_203 {dimension_numbers = #tpu.dot_dimension_numbers<[1], [0], [0], [1], [0, 0, 1, 1], [], []>} : vector<2x48xf32>, vector<48x512xf32>, vector<2x512xf32> -> vector<2x512xf32>
    %cst_204 = arith.constant dense<0.000000e+00> : vector<2x512xf32>
    %337 = tpu.matmul %327, %333, %cst_204 {dimension_numbers = #tpu.dot_dimension_numbers<[1], [0], [0], [1], [0, 0, 1, 1], [], []>} : vector<2x48xf32>, vector<48x512xf32>, vector<2x512xf32> -> vector<2x512xf32>
    %338 = arith.addf %336, %337 : vector<2x512xf32>
    %339 = vector.broadcast %335 : vector<1x512xf32> to vector<2x512xf32>
    %340 = arith.addf %338, %339 : vector<2x512xf32>
    %341 = vector.extract_strided_slice %340 {offsets = [0, 0], sizes = [2, 48], strides = [1, 1]} : vector<2x512xf32> to vector<2x48xf32>
    %342 = arith.negf %341 : vector<2x48xf32>
    %343 = math.exp %342 : vector<2x48xf32>
    %cst_205 = arith.constant 1.000000e+00 : f32
    %344 = vector.broadcast %cst_205 : f32 to vector<2x48xf32>
    %345 = arith.addf %344, %343 : vector<2x48xf32>
    %346 = arith.divf %344, %345 : vector<2x48xf32>
    %347 = vector.extract_strided_slice %340 {offsets = [0, 128], sizes = [2, 48], strides = [1, 1]} : vector<2x512xf32> to vector<2x48xf32>
    %348 = arith.negf %347 : vector<2x48xf32>
    %349 = math.exp %348 : vector<2x48xf32>
    %cst_206 = arith.constant 1.000000e+00 : f32
    %350 = vector.broadcast %cst_206 : f32 to vector<2x48xf32>
    %351 = arith.addf %350, %349 : vector<2x48xf32>
    %352 = arith.divf %350, %351 : vector<2x48xf32>
    %353 = vector.extract_strided_slice %340 {offsets = [0, 256], sizes = [2, 48], strides = [1, 1]} : vector<2x512xf32> to vector<2x48xf32>
    %354 = math.tanh %353 : vector<2x48xf32>
    %355 = vector.extract_strided_slice %340 {offsets = [0, 384], sizes = [2, 48], strides = [1, 1]} : vector<2x512xf32> to vector<2x48xf32>
    %356 = arith.negf %355 : vector<2x48xf32>
    %357 = math.exp %356 : vector<2x48xf32>
    %cst_207 = arith.constant 1.000000e+00 : f32
    %358 = vector.broadcast %cst_207 : f32 to vector<2x48xf32>
    %359 = arith.addf %358, %357 : vector<2x48xf32>
    %360 = arith.divf %358, %359 : vector<2x48xf32>
    %361 = arith.mulf %352, %329 : vector<2x48xf32>
    %362 = arith.mulf %346, %354 : vector<2x48xf32>
    %363 = arith.addf %361, %362 : vector<2x48xf32>
    %364 = math.tanh %363 : vector<2x48xf32>
    %365 = arith.mulf %360, %364 : vector<2x48xf32>
    %c3_208 = arith.constant 3 : index
    %c0_209 = arith.constant 0 : index
    %c0_210 = arith.constant 0 : index
    %366 = vector.load %arg50[%c3_208, %c0_209, %c0_210] : memref<4x2x48xf32, #tpu.memory_space<vmem>>, vector<1x2x48xf32>
    %367 = vector.shape_cast %366 : vector<1x2x48xf32> to vector<2x48xf32>
    %368 = vector.shape_cast %365 : vector<2x48xf32> to vector<1x2x48xf32>
    tpu.vector_store %arg50[%c3_208, %c0_209, %c0_210], %368 {strides = array<i32>} : memref<4x2x48xf32, #tpu.memory_space<vmem>>, vector<1x2x48xf32>,
    %c3_211 = arith.constant 3 : index
    %c0_212 = arith.constant 0 : index
    %c0_213 = arith.constant 0 : index
    %369 = vector.load %arg51[%c3_211, %c0_212, %c0_213] : memref<4x2x48xf32, #tpu.memory_space<vmem>>, vector<1x2x48xf32>
    %370 = vector.shape_cast %369 : vector<1x2x48xf32> to vector<2x48xf32>
    %371 = vector.shape_cast %363 : vector<2x48xf32> to vector<1x2x48xf32>
    tpu.vector_store %arg51[%c3_211, %c0_212, %c0_213], %371 {strides = array<i32>} : memref<4x2x48xf32, #tpu.memory_space<vmem>>, vector<1x2x48xf32>,
    %372 = arith.addf %325, %365 : vector<2x48xf32>
    %c0_214 = arith.constant 0 : index
    %c0_215 = arith.constant 0 : index
    %373 = vector.load %arg40[%c0_214, %c0_215] : memref<48x1xf32, #tpu.memory_space<vmem>>, vector<48x1xf32>
    %cst_216 = arith.constant dense<0.000000e+00> : vector<2x1xf32>
    %374 = tpu.matmul %372, %373, %cst_216 {dimension_numbers = #tpu.dot_dimension_numbers<[1], [0], [0], [1], [0, 0, 1, 1], [], []>} : vector<2x48xf32>, vector<48x1xf32>, vector<2x1xf32> -> vector<2x1xf32>
    %c0_217 = arith.constant 0 : index
    %c0_218 = arith.constant 0 : index
    %375 = vector.load %arg41[%c0_217, %c0_218] : memref<1x1xf32, #tpu.memory_space<vmem>>, vector<1x1xf32>
    %376 = vector.broadcast %375 : vector<1x1xf32> to vector<2x1xf32>
    %377 = arith.addf %374, %376 : vector<2x1xf32>
    %378 = arith.negf %377 : vector<2x1xf32>
    %379 = math.exp %378 : vector<2x1xf32>
    %cst_219 = arith.constant 1.000000e+00 : f32
    %380 = vector.broadcast %cst_219 : f32 to vector<2x1xf32>
    %381 = arith.addf %380, %379 : vector<2x1xf32>
    %382 = arith.divf %380, %381 : vector<2x1xf32>
    %c0_220 = arith.constant 0 : index
    %c0_221 = arith.constant 0 : index
    %383 = vector.load %arg52[%c0_220, %c0_221] : memref<2x1xf32, #tpu.memory_space<vmem>>, vector<2x1xf32>
    tpu.vector_store %arg52[%c0_220, %c0_221], %382 {strides = array<i32>} : memref<2x1xf32, #tpu.memory_space<vmem>>, vector<2x1xf32>,
    return
  }
}

</mosaic_0001>

<llo_original>
// kernel: decoder_forward.1
$region0: #{decoder_forward.1}
  #allocation0 [shape = 'u32[]', space=smem, size = 0x4, offset = 0x4, fixed_abs, tag = 'smem constant byte address 0x4 - core index']
  #allocation1 [shape = 'u32[144,128]{1,0:T(1,128)}', space=vmem, size = 0x12000, scoped, tag = 'internal scratch']
  #allocation2 [shape = 'f32[1,1]{1,0:T(1,128)S(1)}', space=vmem, size = 0x200, scoped, tag = 'scoped memory for decoder_forward.1']
  %s0 = inlined_call_operand.smem [shape: u32[53], index: -1, kind: input, shape index: {}]
  %s1 = sld [smem:[%s0]]
  %s2 = scalar_lea.smem %s0, 1
  %s3 = sld [smem:[%s2]]
  %s4 = scalar_lea.smem %s0, 2
  %s5 = sld [smem:[%s4]]
  %s6 = scalar_lea.smem %s0, 3
  %s7 = sld [smem:[%s6]]
  %s8 = scalar_lea.smem %s0, 4
  %s9 = sld [smem:[%s8]]
  %s10 = scalar_lea.smem %s0, 5
  %s11 = sld [smem:[%s10]]
  %s12 = scalar_lea.smem %s0, 6
  %s13 = sld [smem:[%s12]]
  %s14 = scalar_lea.smem %s0, 7
  %s15 = sld [smem:[%s14]]
  %s16 = scalar_lea.smem %s0, 8
  %s17 = sld [smem:[%s16]]
  %s18 = scalar_lea.smem %s0, 9
  %s19 = sld [smem:[%s18]]
  %s20 = scalar_lea.smem %s0, 10
  %s21 = sld [smem:[%s20]]
  %s22 = scalar_lea.smem %s0, 11
  %s23 = sld [smem:[%s22]]
  %s24 = scalar_lea.smem %s0, 12
  %s25 = sld [smem:[%s24]]
  %s26 = scalar_lea.smem %s0, 13
  %s27 = sld [smem:[%s26]]
  %s28 = scalar_lea.smem %s0, 14
  %s29 = sld [smem:[%s28]]
  %s30 = scalar_lea.smem %s0, 15
  %s31 = sld [smem:[%s30]]
  %s32 = scalar_lea.smem %s0, 16
  %s33 = sld [smem:[%s32]]
  %s34 = scalar_lea.smem %s0, 17
  %s35 = sld [smem:[%s34]]
  %s36 = scalar_lea.smem %s0, 18
  %s37 = sld [smem:[%s36]]
  %s38 = scalar_lea.smem %s0, 19
  %s39 = sld [smem:[%s38]]
  %s40 = scalar_lea.smem %s0, 20
  %s41 = sld [smem:[%s40]]
  %s42 = scalar_lea.smem %s0, 21
  %s43 = sld [smem:[%s42]]
  %s44 = scalar_lea.smem %s0, 22
  %s45 = sld [smem:[%s44]]
  %s46 = scalar_lea.smem %s0, 23
  %s47 = sld [smem:[%s46]]
  %s48 = scalar_lea.smem %s0, 24
  %s49 = sld [smem:[%s48]]
  %s50 = scalar_lea.smem %s0, 25
  %s51 = sld [smem:[%s50]]
  %s52 = scalar_lea.smem %s0, 26
  %s53 = sld [smem:[%s52]]
  %s54 = scalar_lea.smem %s0, 27
  %s55 = sld [smem:[%s54]]
  %s56 = scalar_lea.smem %s0, 28
  %s57 = sld [smem:[%s56]]
  %s58 = scalar_lea.smem %s0, 29
  %s59 = sld [smem:[%s58]]
  %s60 = scalar_lea.smem %s0, 30
  %s61 = sld [smem:[%s60]]
  %s62 = scalar_lea.smem %s0, 31
  %s63 = sld [smem:[%s62]]
  %s64 = scalar_lea.smem %s0, 32
  %s65 = sld [smem:[%s64]]
  %s66 = scalar_lea.smem %s0, 33
  %s67 = sld [smem:[%s66]]
  %s68 = scalar_lea.smem %s0, 34
  %s69 = sld [smem:[%s68]]
  %s70 = scalar_lea.smem %s0, 35
  %s71 = sld [smem:[%s70]]
  %s72 = scalar_lea.smem %s0, 36
  %s73 = sld [smem:[%s72]]
  %s74 = scalar_lea.smem %s0, 37
  %s75 = sld [smem:[%s74]]
  %s76 = scalar_lea.smem %s0, 38
  %s77 = sld [smem:[%s76]]
  %s78 = scalar_lea.smem %s0, 39
  %s79 = sld [smem:[%s78]]
  %s80 = scalar_lea.smem %s0, 40
  %s81 = sld [smem:[%s80]]
  %s82 = scalar_lea.smem %s0, 41
  %s83 = sld [smem:[%s82]]
  %s84 = scalar_lea.smem %s0, 42
  %s85 = sld [smem:[%s84]]
  %s86 = scalar_lea.smem %s0, 43
  %s87 = sld [smem:[%s86]]
  %s88 = scalar_lea.smem %s0, 44
  %s89 = sld [smem:[%s88]]
  %s90 = scalar_lea.smem %s0, 45
  %s91 = sld [smem:[%s90]]
  %s92 = scalar_lea.smem %s0, 46
  %s93 = sld [smem:[%s92]]
  %s94 = scalar_lea.smem %s0, 47
  %s95 = sld [smem:[%s94]]
  %s96 = scalar_lea.smem %s0, 48
  %s97 = sld [smem:[%s96]]
  %s98 = scalar_lea.smem %s0, 49
  %s99 = sld [smem:[%s98]]
  %s100 = scalar_lea.smem %s0, 50
  %s101 = sld [smem:[%s100]]
  %s102 = scalar_lea.smem %s0, 51
  %s103 = sld [smem:[%s102]]
  %s104 = scalar_lea.smem %s0, 52
  %s105 = sld [smem:[%s104]]
  %106 = xla_tuple %s85, %s87, %s89, %s91, %s93, %s95, %s97, %s99, %s101, %s103, %s105
  %s107 = sld [smem:[#allocation0]]
  $region378: #{decoder_forward.1} parent=0
    _
  %s109 = ssub.s32 1, %s107
  %s110 = scalar_select 0, %s109, %s107
  %v111 = vstv %s83
  %112 = vst [vmem:[#allocation2] sm:$0x1] %v111
  $region1: #{decoder_forward.1} parent=0
    #allocation3 [shape = 'u8[1024]{0}', space=vmem, size = 0x400, scoped, tag = 'input window, operand 0, single buffered']
    #allocation4 [shape = 's32[1]{0}', space=sflag, size = 0x4, scoped, tag = 'scoped memory for decoder_forward.1']
    #allocation5 [shape = 's32[1]{0}', space=sflag, size = 0x4, scoped, tag = 'scoped memory for decoder_forward.1']
    #allocation6 [shape = 'u8[1024]{0}', space=vmem, size = 0x400, scoped, tag = 'input window, operand 2, single buffered']
    #allocation7 [shape = 's32[1]{0}', space=sflag, size = 0x4, scoped, tag = 'scoped memory for decoder_forward.1']
    #allocation8 [shape = 'u8[8192]{0}', space=vmem, size = 0x2000, scoped, tag = 'input window, operand 3, single buffered']
    #allocation9 [shape = 'u8[8192]{0}', space=vmem, size = 0x2000, scoped, tag = 'input window, operand 4, single buffered']
    #allocation10 [shape = 's32[1]{0}', space=sflag, size = 0x4, scoped, tag = 'scoped memory for decoder_forward.1']
    #allocation11 [shape = 'u8[1024]{0}', space=vmem, size = 0x400, scoped, tag = 'input window, operand 7, single buffered']
    #allocation12 [shape = 'u8[1024]{0}', space=vmem, size = 0x400, scoped, tag = 'input window, operand 9, single buffered']
    #allocation13 [shape = 's32[1]{0}', space=sflag, size = 0x4, scoped, tag = 'scoped memory for decoder_forward.1']
    #allocation14 [shape = 'u8[4096]{0}', space=vmem, size = 0x1000, scoped, tag = 'input window, operand 11, single buffered']
    #allocation15 [shape = 'u8[4096]{0}', space=vmem, size = 0x1000, scoped, tag = 'input window, operand 12, single buffered']
    #allocation16 [shape = 's32[1]{0}', space=sflag, size = 0x4, scoped, tag = 'scoped memory for decoder_forward.1']
    #allocation17 [shape = 'u8[8192]{0}', space=vmem, size = 0x2000, scoped, tag = 'input window, operand 13, single buffered']
    #allocation18 [shape = 'u8[512]{0}', space=vmem, size = 0x400, scoped, tag = 'input window, operand 14, single buffered']
    #allocation19 [shape = 's32[1]{0}', space=sflag, size = 0x4, scoped, tag = 'scoped memory for decoder_forward.1']
    #allocation20 [shape = 'u8[512]{0}', space=vmem, size = 0x400, scoped, tag = 'input window, operand 16, single buffered']
    #allocation21 [shape = 'u8[49152]{0}', space=vmem, size = 0xc000, scoped, tag = 'input window, operand 17, single buffered']
    #allocation22 [shape = 's32[1]{0}', space=sflag, size = 0x4, scoped, tag = 'scoped memory for decoder_forward.1']
    #allocation23 [shape = 'u8[24576]{0}', space=vmem, size = 0x6000, scoped, tag = 'input window, operand 18, single buffered']
    #allocation24 [shape = 'u8[1536]{0}', space=vmem, size = 0x800, scoped, tag = 'input window, operand 19, single buffered']
    #allocation25 [shape = 's32[1]{0}', space=sflag, size = 0x4, scoped, tag = 'scoped memory for decoder_forward.1']
    #allocation26 [shape = 'u8[49152]{0}', space=vmem, size = 0xc000, scoped, tag = 'input window, operand 20, single buffered']
    #allocation27 [shape = 'u8[1536]{0}', space=vmem, size = 0x800, scoped, tag = 'input window, operand 21, single buffered']
    #allocation28 [shape = 's32[1]{0}', space=sflag, size = 0x4, scoped, tag = 'scoped memory for decoder_forward.1']
    #allocation29 [shape = 'u8[16384]{0}', space=vmem, size = 0x4000, scoped, tag = 'input window, operand 23, single buffered']
    #allocation30 [shape = 'u8[512]{0}', space=vmem, size = 0x400, scoped, tag = 'input window, operand 24, single buffered']
    #allocation31 [shape = 's32[1]{0}', space=sflag, size = 0x4, scoped, tag = 'scoped memory for decoder_forward.1']
    #allocation32 [shape = 'u8[16384]{0}', space=vmem, size = 0x4000, scoped, tag = 'input window, operand 25, single buffered']
    #allocation33 [shape = 'u8[512]{0}', space=vmem, size = 0x400, scoped, tag = 'input window, operand 26, single buffered']
    #allocation34 [shape = 's32[1]{0}', space=sflag, size = 0x4, scoped, tag = 'scoped memory for decoder_forward.1']
    #allocation35 [shape = 'u8[512]{0}', space=vmem, size = 0x400, scoped, tag = 'input window, operand 27, single buffered']
    #allocation36 [shape = 'u8[16384]{0}', space=vmem, size = 0x4000, scoped, tag = 'input window, operand 28, single buffered']
    #allocation37 [shape = 's32[1]{0}', space=sflag, size = 0x4, scoped, tag = 'scoped memory for decoder_forward.1']
    #allocation38 [shape = 'u8[16384]{0}', space=vmem, size = 0x4000, scoped, tag = 'input window, operand 29, single buffered']
    #allocation39 [shape = 'u8[512]{0}', space=vmem, size = 0x400, scoped, tag = 'input window, operand 30, single buffered']
    #allocation40 [shape = 's32[1]{0}', space=sflag, size = 0x4, scoped, tag = 'scoped memory for decoder_forward.1']
    #allocation41 [shape = 'u8[2048]{0}', space=vmem, size = 0x800, scoped, tag = 'input window, operand 33, single buffered']
    #allocation42 [shape = 'u8[65536]{0}', space=vmem, size = 0x10000, scoped, tag = 'input window, operand 34, single buffered']
    #allocation43 [shape = 's32[1]{0}', space=sflag, size = 0x4, scoped, tag = 'scoped memory for decoder_forward.1']
    #allocation44 [shape = 'u8[65536]{0}', space=vmem, size = 0x10000, scoped, tag = 'input window, operand 35, single buffered']
    #allocation45 [shape = 'u8[2048]{0}', space=vmem, size = 0x800, scoped, tag = 'input window, operand 36, single buffered']
    #allocation46 [shape = 's32[1]{0}', space=sflag, size = 0x4, scoped, tag = 'scoped memory for decoder_forward.1']
    #allocation47 [shape = 'u8[393216]{0}', space=vmem, size = 0x60000, scoped, tag = 'input window, operand 38, single buffered']
    #allocation48 [shape = 'u8[8192]{0}', space=vmem, size = 0x2000, scoped, tag = 'input window, operand 39, single buffered']
    #allocation49 [shape = 's32[1]{0}', space=sflag, size = 0x4, scoped, tag = 'scoped memory for decoder_forward.1']
    #allocation50 [shape = 'u8[1024]{0}', space=vmem, size = 0x400, scoped, tag = 'output window, operand 0, single buffered']
    #allocation51 [shape = 'u8[1024]{0}', space=vmem, size = 0x400, scoped, tag = 'output window, operand 2, single buffered']
    #allocation52 [shape = 's32[1]{0}', space=sflag, size = 0x4, scoped, tag = 'scoped memory for decoder_forward.1']
    #allocation53 [shape = 'u8[1024]{0}', space=vmem, size = 0x400, scoped, tag = 'output window, operand 3, single buffered']
    #allocation54 [shape = 'u8[1024]{0}', space=vmem, size = 0x400, scoped, tag = 'output window, operand 4, single buffered']
    #allocation55 [shape = 's32[1]{0}', space=sflag, size = 0x4, scoped, tag = 'scoped memory for decoder_forward.1']
    #allocation56 [shape = 'u8[1024]{0}', space=vmem, size = 0x400, scoped, tag = 'output window, operand 5, single buffered']
    #allocation57 [shape = 'u8[1024]{0}', space=vmem, size = 0x400, scoped, tag = 'output window, operand 6, single buffered']
    #allocation58 [shape = 's32[1]{0}', space=sflag, size = 0x4, scoped, tag = 'scoped memory for decoder_forward.1']
    #allocation59 [shape = 'u8[1024]{0}', space=vmem, size = 0x400, scoped, tag = 'output window, operand 7, single buffered']
    #allocation60 [shape = 'u8[4096]{0}', space=vmem, size = 0x1000, scoped, tag = 'output window, operand 8, single buffered']
    #allocation61 [shape = 's32[1]{0}', space=sflag, size = 0x4, scoped, tag = 'scoped memory for decoder_forward.1']
    #allocation62 [shape = 'u8[4096]{0}', space=vmem, size = 0x1000, scoped, tag = 'output window, operand 9, single buffered']
    %113 = vsyncpa [#allocation4], 0
    %114 = vsyncpa [#allocation7], 0
    %115 = vsyncpa [#allocation10], 0
    %116 = vsyncpa [#allocation13], 0
    %117 = vsyncpa [#allocation16], 0
    %118 = vsyncpa [#allocation19], 0
    %119 = vsyncpa [#allocation22], 0
    %120 = vsyncpa [#allocation25], 0
    %121 = vsyncpa [#allocation28], 0
    %122 = vsyncpa [#allocation31], 0
    %123 = vsyncpa [#allocation34], 0
    %124 = vsyncpa [#allocation37], 0
    %125 = vsyncpa [#allocation40], 0
    %126 = vsyncpa [#allocation43], 0
    %127 = vsyncpa [#allocation46], 0
    %128 = vsyncpa [#allocation49], 0
    %129 = vsyncpa [#allocation5], 0
    %130 = vsyncpa [#allocation52], 0
    %131 = vsyncpa [#allocation55], 0
    %132 = vsyncpa [#allocation58], 0
    %133 = vsyncpa [#allocation61], 0
    // Predicated region
    $region2: #{decoder_forward.1} parent=1 // pred_check
      _
    $region3: #{decoder_forward.1} parent=1 // pred_check_branch
      %135 = sbr.rel (0) target = $region5
    $region4: #{decoder_forward.1} parent=1 // pred_region
      %s137 = ssub.s32 32, 32
      %138 = vsyncadd [#allocation4], %s137
      %s140 = sshll.u32 [#allocation3], 4
      %s141 = int_to_ptr.vmem [resolvable:$true] %s140
      %143 = dma.hbm_to_vmem [thread:$0]  %s1, 32, %s141, [#allocation4]
    $region5: #{decoder_forward.1} parent=1 // pred_fallthru
      _
    // Predicated region
    $region6: #{decoder_forward.1} parent=1 // pred_check
      _
    $region7: #{decoder_forward.1} parent=1 // pred_check_branch
      %145 = sbr.rel (0) target = $region9
    $region8: #{decoder_forward.1} parent=1 // pred_region
      _
    $region9: #{decoder_forward.1} parent=1 // pred_fallthru
      _
    // Predicated region
    $region10: #{decoder_forward.1} parent=1 // pred_check
      _
    $region11: #{decoder_forward.1} parent=1 // pred_check_branch
      %147 = sbr.rel (0) target = $region13
    $region12: #{decoder_forward.1} parent=1 // pred_region
      %s149 = ssub.s32 32, 32
      %150 = vsyncadd [#allocation7], %s149
      %s152 = sshll.u32 [#allocation6], 4
      %s153 = int_to_ptr.vmem [resolvable:$true] %s152
      %155 = dma.hbm_to_vmem [thread:$0]  %s5, 32, %s153, [#allocation7]
    $region13: #{decoder_forward.1} parent=1 // pred_fallthru
      _
    // Predicated region
    $region14: #{decoder_forward.1} parent=1 // pred_check
      _
    $region15: #{decoder_forward.1} parent=1 // pred_check_branch
      %157 = sbr.rel (0) target = $region17
    $region16: #{decoder_forward.1} parent=1 // pred_region
      %s159 = ssub.s32 256, 256
      %160 = vsyncadd [#allocation7], %s159
      %s161 = sshll.u32 [#allocation8], 4
      %s162 = int_to_ptr.vmem [resolvable:$true] %s161
      %167 = dma.hbm_to_vmem [thread:$0]  %s7, 256, %s162, [#allocation7], 128, 128, 8
    $region17: #{decoder_forward.1} parent=1 // pred_fallthru
      _
    // Predicated region
    $region18: #{decoder_forward.1} parent=1 // pred_check
      _
    $region19: #{decoder_forward.1} parent=1 // pred_check_branch
      %169 = sbr.rel (0) target = $region21
    $region20: #{decoder_forward.1} parent=1 // pred_region
      %s171 = ssub.s32 256, 256
      %172 = vsyncadd [#allocation10], %s171
      %s173 = sshll.u32 [#allocation9], 4
      %s174 = int_to_ptr.vmem [resolvable:$true] %s173
      %179 = dma.hbm_to_vmem [thread:$0]  %s9, 256, %s174, [#allocation10], 128, 128, 8
    $region21: #{decoder_forward.1} parent=1 // pred_fallthru
      _
    // Predicated region
    $region22: #{decoder_forward.1} parent=1 // pred_check
      _
    $region23: #{decoder_forward.1} parent=1 // pred_check_branch
      %181 = sbr.rel (0) target = $region25
    $region24: #{decoder_forward.1} parent=1 // pred_region
      _
    $region25: #{decoder_forward.1} parent=1 // pred_fallthru
      _
    // Predicated region
    $region26: #{decoder_forward.1} parent=1 // pred_check
      _
    $region27: #{decoder_forward.1} parent=1 // pred_check_branch
      %183 = sbr.rel (0) target = $region29
    $region28: #{decoder_forward.1} parent=1 // pred_region
      _
    $region29: #{decoder_forward.1} parent=1 // pred_fallthru
      _
    // Predicated region
    $region30: #{decoder_forward.1} parent=1 // pred_check
      _
    $region31: #{decoder_forward.1} parent=1 // pred_check_branch
      %185 = sbr.rel (0) target = $region33
    $region32: #{decoder_forward.1} parent=1 // pred_region
      %s187 = ssub.s32 32, 32
      %188 = vsyncadd [#allocation10], %s187
      %s190 = sshll.u32 [#allocation11], 4
      %s191 = int_to_ptr.vmem [resolvable:$true] %s190
      %193 = dma.hbm_to_vmem [thread:$0]  %s15, 32, %s191, [#allocation10]
    $region33: #{decoder_forward.1} parent=1 // pred_fallthru
      _
    // Predicated region
    $region34: #{decoder_forward.1} parent=1 // pred_check
      _
    $region35: #{decoder_forward.1} parent=1 // pred_check_branch
      %195 = sbr.rel (0) target = $region37
    $region36: #{decoder_forward.1} parent=1 // pred_region
      _
    $region37: #{decoder_forward.1} parent=1 // pred_fallthru
      _
    // Predicated region
    $region38: #{decoder_forward.1} parent=1 // pred_check
      _
    $region39: #{decoder_forward.1} parent=1 // pred_check_branch
      %197 = sbr.rel (0) target = $region41
    $region40: #{decoder_forward.1} parent=1 // pred_region
      %s199 = ssub.s32 32, 32
      %200 = vsyncadd [#allocation13], %s199
      %s202 = sshll.u32 [#allocation12], 4
      %s203 = int_to_ptr.vmem [resolvable:$true] %s202
      %205 = dma.hbm_to_vmem [thread:$0]  %s19, 32, %s203, [#allocation13]
    $region41: #{decoder_forward.1} parent=1 // pred_fallthru
      _
    // Predicated region
    $region42: #{decoder_forward.1} parent=1 // pred_check
      _
    $region43: #{decoder_forward.1} parent=1 // pred_check_branch
      %207 = sbr.rel (0) target = $region45
    $region44: #{decoder_forward.1} parent=1 // pred_region
      _
    $region45: #{decoder_forward.1} parent=1 // pred_fallthru
      _
    // Predicated region
    $region46: #{decoder_forward.1} parent=1 // pred_check
      _
    $region47: #{decoder_forward.1} parent=1 // pred_check_branch
      %209 = sbr.rel (0) target = $region49
    $region48: #{decoder_forward.1} parent=1 // pred_region
      %s211 = ssub.s32 128, 128
      %212 = vsyncadd [#allocation13], %s211
      %s213 = sshll.u32 [#allocation14], 4
      %s214 = int_to_ptr.vmem [resolvable:$true] %s213
      %219 = dma.hbm_to_vmem [thread:$0]  %s23, 128, %s214, [#allocation13], 32, 32, 2
    $region49: #{decoder_forward.1} parent=1 // pred_fallthru
      _
    // Predicated region
    $region50: #{decoder_forward.1} parent=1 // pred_check
      _
    $region51: #{decoder_forward.1} parent=1 // pred_check_branch
      %221 = sbr.rel (0) target = $region53
    $region52: #{decoder_forward.1} parent=1 // pred_region
      %s223 = ssub.s32 128, 128
      %224 = vsyncadd [#allocation16], %s223
      %s225 = sshll.u32 [#allocation15], 4
      %s226 = int_to_ptr.vmem [resolvable:$true] %s225
      %231 = dma.hbm_to_vmem [thread:$0]  %s25, 128, %s226, [#allocation16], 32, 32, 2
    $region53: #{decoder_forward.1} parent=1 // pred_fallthru
      _
    // Predicated region
    $region54: #{decoder_forward.1} parent=1 // pred_check
      _
    $region55: #{decoder_forward.1} parent=1 // pred_check_branch
      %233 = sbr.rel (0) target = $region57
    $region56: #{decoder_forward.1} parent=1 // pred_region
      %s235 = ssub.s32 256, 256
      %236 = vsyncadd [#allocation16], %s235
      %s237 = sshll.u32 [#allocation17], 4
      %s238 = int_to_ptr.vmem [resolvable:$true] %s237
      %243 = dma.hbm_to_vmem [thread:$0]  %s27, 256, %s238, [#allocation16], 128, 128, 8
    $region57: #{decoder_forward.1} parent=1 // pred_fallthru
      _
    // Predicated region
    $region58: #{decoder_forward.1} parent=1 // pred_check
      _
    $region59: #{decoder_forward.1} parent=1 // pred_check_branch
      %245 = sbr.rel (0) target = $region61
    $region60: #{decoder_forward.1} parent=1 // pred_region
      %s247 = ssub.s32 16, 16
      %248 = vsyncadd [#allocation19], %s247
      %s250 = sshll.u32 [#allocation18], 4
      %s251 = int_to_ptr.vmem [resolvable:$true] %s250
      %253 = dma.hbm_to_vmem [thread:$0]  %s29, 16, %s251, [#allocation19]
    $region61: #{decoder_forward.1} parent=1 // pred_fallthru
      _
    // Predicated region
    $region62: #{decoder_forward.1} parent=1 // pred_check
      _
    $region63: #{decoder_forward.1} parent=1 // pred_check_branch
      %255 = sbr.rel (0) target = $region65
    $region64: #{decoder_forward.1} parent=1 // pred_region
      _
    $region65: #{decoder_forward.1} parent=1 // pred_fallthru
      _
    // Predicated region
    $region66: #{decoder_forward.1} parent=1 // pred_check
      _
    $region67: #{decoder_forward.1} parent=1 // pred_check_branch
      %257 = sbr.rel (0) target = $region69
    $region68: #{decoder_forward.1} parent=1 // pred_region
      %s259 = ssub.s32 16, 16
      %260 = vsyncadd [#allocation19], %s259
      %s262 = sshll.u32 [#allocation20], 4
      %s263 = int_to_ptr.vmem [resolvable:$true] %s262
      %265 = dma.hbm_to_vmem [thread:$0]  %s33, 16, %s263, [#allocation19]
    $region69: #{decoder_forward.1} parent=1 // pred_fallthru
      _
    // Predicated region
    $region70: #{decoder_forward.1} parent=1 // pred_check
      _
    $region71: #{decoder_forward.1} parent=1 // pred_check_branch
      %267 = sbr.rel (0) target = $region73
    $region72: #{decoder_forward.1} parent=1 // pred_region
      %s269 = ssub.s32 1536, 1536
      %270 = vsyncadd [#allocation22], %s269
      %s271 = sshll.u32 [#allocation21], 4
      %s272 = int_to_ptr.vmem [resolvable:$true] %s271
      %277 = dma.hbm_to_vmem [thread:$0]  %s35, 1536, %s272, [#allocation22], 384, 384, 24
    $region73: #{decoder_forward.1} parent=1 // pred_fallthru
      _
    // Predicated region
    $region74: #{decoder_forward.1} parent=1 // pred_check
      _
    $region75: #{decoder_forward.1} parent=1 // pred_check_branch
      %279 = sbr.rel (0) target = $region77
    $region76: #{decoder_forward.1} parent=1 // pred_region
      %s281 = ssub.s32 768, 768
      %282 = vsyncadd [#allocation22], %s281
      %s283 = sshll.u32 [#allocation23], 4
      %s284 = int_to_ptr.vmem [resolvable:$true] %s283
      %289 = dma.hbm_to_vmem [thread:$0]  %s37, 768, %s284, [#allocation22], 384, 384, 24
    $region77: #{decoder_forward.1} parent=1 // pred_fallthru
      _
    // Predicated region
    $region78: #{decoder_forward.1} parent=1 // pred_check
      _
    $region79: #{decoder_forward.1} parent=1 // pred_check_branch
      %291 = sbr.rel (0) target = $region81
    $region80: #{decoder_forward.1} parent=1 // pred_region
      %s293 = ssub.s32 48, 48
      %294 = vsyncadd [#allocation25], %s293
      %s296 = sshll.u32 [#allocation24], 4
      %s297 = int_to_ptr.vmem [resolvable:$true] %s296
      %299 = dma.hbm_to_vmem [thread:$0]  %s39, 48, %s297, [#allocation25]
    $region81: #{decoder_forward.1} parent=1 // pred_fallthru
      _
    // Predicated region
    $region82: #{decoder_forward.1} parent=1 // pred_check
      _
    $region83: #{decoder_forward.1} parent=1 // pred_check_branch
      %301 = sbr.rel (0) target = $region85
    $region84: #{decoder_forward.1} parent=1 // pred_region
      %s303 = ssub.s32 1536, 1536
      %304 = vsyncadd [#allocation25], %s303
      %s305 = sshll.u32 [#allocation26], 4
      %s306 = int_to_ptr.vmem [resolvable:$true] %s305
      %311 = dma.hbm_to_vmem [thread:$0]  %s41, 1536, %s306, [#allocation25], 384, 384, 24
    $region85: #{decoder_forward.1} parent=1 // pred_fallthru
      _
    // Predicated region
    $region86: #{decoder_forward.1} parent=1 // pred_check
      _
    $region87: #{decoder_forward.1} parent=1 // pred_check_branch
      %313 = sbr.rel (0) target = $region89
    $region88: #{decoder_forward.1} parent=1 // pred_region
      %s315 = ssub.s32 48, 48
      %316 = vsyncadd [#allocation28], %s315
      %s318 = sshll.u32 [#allocation27], 4
      %s319 = int_to_ptr.vmem [resolvable:$true] %s318
      %321 = dma.hbm_to_vmem [thread:$0]  %s43, 48, %s319, [#allocation28]
    $region89: #{decoder_forward.1} parent=1 // pred_fallthru
      _
    // Predicated region
    $region90: #{decoder_forward.1} parent=1 // pred_check
      _
    $region91: #{decoder_forward.1} parent=1 // pred_check_branch
      %323 = sbr.rel (0) target = $region93
    $region92: #{decoder_forward.1} parent=1 // pred_region
      _
    $region93: #{decoder_forward.1} parent=1 // pred_fallthru
      _
    // Predicated region
    $region94: #{decoder_forward.1} parent=1 // pred_check
      _
    $region95: #{decoder_forward.1} parent=1 // pred_check_branch
      %325 = sbr.rel (0) target = $region97
    $region96: #{decoder_forward.1} parent=1 // pred_region
      %s327 = ssub.s32 512, 512
      %328 = vsyncadd [#allocation28], %s327
      %s329 = sshll.u32 [#allocation29], 4
      %s330 = int_to_ptr.vmem [resolvable:$true] %s329
      %335 = dma.hbm_to_vmem [thread:$0]  %s47, 512, %s330, [#allocation28], 128, 128, 8
    $region97: #{decoder_forward.1} parent=1 // pred_fallthru
      _
    // Predicated region
    $region98: #{decoder_forward.1} parent=1 // pred_check
      _
    $region99: #{decoder_forward.1} parent=1 // pred_check_branch
      %337 = sbr.rel (0) target = $region101
    $region100: #{decoder_forward.1} parent=1 // pred_region
      %s339 = ssub.s32 16, 16
      %340 = vsyncadd [#allocation31], %s339
      %s342 = sshll.u32 [#allocation30], 4
      %s343 = int_to_ptr.vmem [resolvable:$true] %s342
      %345 = dma.hbm_to_vmem [thread:$0]  %s49, 16, %s343, [#allocation31]
    $region101: #{decoder_forward.1} parent=1 // pred_fallthru
      _
    // Predicated region
    $region102: #{decoder_forward.1} parent=1 // pred_check
      _
    $region103: #{decoder_forward.1} parent=1 // pred_check_branch
      %347 = sbr.rel (0) target = $region105
    $region104: #{decoder_forward.1} parent=1 // pred_region
      %s349 = ssub.s32 512, 512
      %350 = vsyncadd [#allocation31], %s349
      %s351 = sshll.u32 [#allocation32], 4
      %s352 = int_to_ptr.vmem [resolvable:$true] %s351
      %357 = dma.hbm_to_vmem [thread:$0]  %s51, 512, %s352, [#allocation31], 128, 128, 8
    $region105: #{decoder_forward.1} parent=1 // pred_fallthru
      _
    // Predicated region
    $region106: #{decoder_forward.1} parent=1 // pred_check
      _
    $region107: #{decoder_forward.1} parent=1 // pred_check_branch
      %359 = sbr.rel (0) target = $region109
    $region108: #{decoder_forward.1} parent=1 // pred_region
      %s361 = ssub.s32 16, 16
      %362 = vsyncadd [#allocation34], %s361
      %s364 = sshll.u32 [#allocation33], 4
      %s365 = int_to_ptr.vmem [resolvable:$true] %s364
      %367 = dma.hbm_to_vmem [thread:$0]  %s53, 16, %s365, [#allocation34]
    $region109: #{decoder_forward.1} parent=1 // pred_fallthru
      _
    // Predicated region
    $region110: #{decoder_forward.1} parent=1 // pred_check
      _
    $region111: #{decoder_forward.1} parent=1 // pred_check_branch
      %369 = sbr.rel (0) target = $region113
    $region112: #{decoder_forward.1} parent=1 // pred_region
      %s371 = ssub.s32 16, 16
      %372 = vsyncadd [#allocation34], %s371
      %s374 = sshll.u32 [#allocation35], 4
      %s375 = int_to_ptr.vmem [resolvable:$true] %s374
      %377 = dma.hbm_to_vmem [thread:$0]  %s55, 16, %s375, [#allocation34]
    $region113: #{decoder_forward.1} parent=1 // pred_fallthru
      _
    // Predicated region
    $region114: #{decoder_forward.1} parent=1 // pred_check
      _
    $region115: #{decoder_forward.1} parent=1 // pred_check_branch
      %379 = sbr.rel (0) target = $region117
    $region116: #{decoder_forward.1} parent=1 // pred_region
      %s381 = ssub.s32 512, 512
      %382 = vsyncadd [#allocation37], %s381
      %s383 = sshll.u32 [#allocation36], 4
      %s384 = int_to_ptr.vmem [resolvable:$true] %s383
      %389 = dma.hbm_to_vmem [thread:$0]  %s57, 512, %s384, [#allocation37], 128, 128, 8
    $region117: #{decoder_forward.1} parent=1 // pred_fallthru
      _
    // Predicated region
    $region118: #{decoder_forward.1} parent=1 // pred_check
      _
    $region119: #{decoder_forward.1} parent=1 // pred_check_branch
      %391 = sbr.rel (0) target = $region121
    $region120: #{decoder_forward.1} parent=1 // pred_region
      %s393 = ssub.s32 512, 512
      %394 = vsyncadd [#allocation37], %s393
      %s395 = sshll.u32 [#allocation38], 4
      %s396 = int_to_ptr.vmem [resolvable:$true] %s395
      %401 = dma.hbm_to_vmem [thread:$0]  %s59, 512, %s396, [#allocation37], 128, 128, 8
    $region121: #{decoder_forward.1} parent=1 // pred_fallthru
      _
    // Predicated region
    $region122: #{decoder_forward.1} parent=1 // pred_check
      _
    $region123: #{decoder_forward.1} parent=1 // pred_check_branch
      %403 = sbr.rel (0) target = $region125
    $region124: #{decoder_forward.1} parent=1 // pred_region
      %s405 = ssub.s32 16, 16
      %406 = vsyncadd [#allocation40], %s405
      %s408 = sshll.u32 [#allocation39], 4
      %s409 = int_to_ptr.vmem [resolvable:$true] %s408
      %411 = dma.hbm_to_vmem [thread:$0]  %s61, 16, %s409, [#allocation40]
    $region125: #{decoder_forward.1} parent=1 // pred_fallthru
      _
    // Predicated region
    $region126: #{decoder_forward.1} parent=1 // pred_check
      _
    $region127: #{decoder_forward.1} parent=1 // pred_check_branch
      %413 = sbr.rel (0) target = $region129
    $region128: #{decoder_forward.1} parent=1 // pred_region
      _
    $region129: #{decoder_forward.1} parent=1 // pred_fallthru
      _
    // Predicated region
    $region130: #{decoder_forward.1} parent=1 // pred_check
      _
    $region131: #{decoder_forward.1} parent=1 // pred_check_branch
      %415 = sbr.rel (0) target = $region133
    $region132: #{decoder_forward.1} parent=1 // pred_region
      _
    $region133: #{decoder_forward.1} parent=1 // pred_fallthru
      _
    // Predicated region
    $region134: #{decoder_forward.1} parent=1 // pred_check
      _
    $region135: #{decoder_forward.1} parent=1 // pred_check_branch
      %417 = sbr.rel (0) target = $region137
    $region136: #{decoder_forward.1} parent=1 // pred_region
      %s419 = ssub.s32 64, 64
      %420 = vsyncadd [#allocation40], %s419
      %s422 = sshll.u32 [#allocation41], 4
      %s423 = int_to_ptr.vmem [resolvable:$true] %s422
      %425 = dma.hbm_to_vmem [thread:$0]  %s67, 64, %s423, [#allocation40]
    $region137: #{decoder_forward.1} parent=1 // pred_fallthru
      _
    // Predicated region
    $region138: #{decoder_forward.1} parent=1 // pred_check
      _
    $region139: #{decoder_forward.1} parent=1 // pred_check_branch
      %427 = sbr.rel (0) target = $region141
    $region140: #{decoder_forward.1} parent=1 // pred_region
      %s429 = ssub.s32 2048, 2048
      %430 = vsyncadd [#allocation43], %s429
      %s431 = sshll.u32 [#allocation42], 4
      %s432 = int_to_ptr.vmem [resolvable:$true] %s431
      %437 = dma.hbm_to_vmem [thread:$0]  %s69, 2048, %s432, [#allocation43], 512, 512, 32
    $region141: #{decoder_forward.1} parent=1 // pred_fallthru
      _
    // Predicated region
    $region142: #{decoder_forward.1} parent=1 // pred_check
      _
    $region143: #{decoder_forward.1} parent=1 // pred_check_branch
      %439 = sbr.rel (0) target = $region145
    $region144: #{decoder_forward.1} parent=1 // pred_region
      %s441 = ssub.s32 2048, 2048
      %442 = vsyncadd [#allocation43], %s441
      %s443 = sshll.u32 [#allocation44], 4
      %s444 = int_to_ptr.vmem [resolvable:$true] %s443
      %449 = dma.hbm_to_vmem [thread:$0]  %s71, 2048, %s444, [#allocation43], 512, 512, 32
    $region145: #{decoder_forward.1} parent=1 // pred_fallthru
      _
    // Predicated region
    $region146: #{decoder_forward.1} parent=1 // pred_check
      _
    $region147: #{decoder_forward.1} parent=1 // pred_check_branch
      %451 = sbr.rel (0) target = $region149
    $region148: #{decoder_forward.1} parent=1 // pred_region
      %s453 = ssub.s32 64, 64
      %454 = vsyncadd [#allocation46], %s453
      %s456 = sshll.u32 [#allocation45], 4
      %s457 = int_to_ptr.vmem [resolvable:$true] %s456
      %459 = dma.hbm_to_vmem [thread:$0]  %s73, 64, %s457, [#allocation46]
    $region149: #{decoder_forward.1} parent=1 // pred_fallthru
      _
    // Predicated region
    $region150: #{decoder_forward.1} parent=1 // pred_check
      _
    $region151: #{decoder_forward.1} parent=1 // pred_check_branch
      %461 = sbr.rel (0) target = $region153
    $region152: #{decoder_forward.1} parent=1 // pred_region
      _
    $region153: #{decoder_forward.1} parent=1 // pred_fallthru
      _
    // Predicated region
    $region154: #{decoder_forward.1} parent=1 // pred_check
      _
    $region155: #{decoder_forward.1} parent=1 // pred_check_branch
      %463 = sbr.rel (0) target = $region157
    $region156: #{decoder_forward.1} parent=1 // pred_region
      %s465 = ssub.s32 12288, 12288
      %466 = vsyncadd [#allocation46], %s465
      %s467 = sshll.u32 [#allocation47], 4
      %s468 = int_to_ptr.vmem [resolvable:$true] %s467
      %473 = dma.hbm_to_vmem [thread:$0]  %s77, 12288, %s468, [#allocation46], 512, 512, 32
    $region157: #{decoder_forward.1} parent=1 // pred_fallthru
      _
    // Predicated region
    $region158: #{decoder_forward.1} parent=1 // pred_check
      _
    $region159: #{decoder_forward.1} parent=1 // pred_check_branch
      %475 = sbr.rel (0) target = $region161
    $region160: #{decoder_forward.1} parent=1 // pred_region
      %s477 = ssub.s32 256, 256
      %478 = vsyncadd [#allocation49], %s477
      %s479 = sshll.u32 [#allocation48], 4
      %s480 = int_to_ptr.vmem [resolvable:$true] %s479
      %485 = dma.hbm_to_vmem [thread:$0]  %s79, 256, %s480, [#allocation49], 64, 64, 4
    $region161: #{decoder_forward.1} parent=1 // pred_fallthru
      _
    // Predicated region
    $region162: #{decoder_forward.1} parent=1 // pred_check
      _
    $region163: #{decoder_forward.1} parent=1 // pred_check_branch
      %487 = sbr.rel (0) target = $region165
    $region164: #{decoder_forward.1} parent=1 // pred_region
      _
    $region165: #{decoder_forward.1} parent=1 // pred_fallthru
      _
    // Predicated region
    $region166: #{decoder_forward.1} parent=1 // pred_check
      _
    $region167: #{decoder_forward.1} parent=1 // pred_check_branch
      %489 = sbr.rel (0) target = $region169
    $region168: #{decoder_forward.1} parent=1 // pred_region
      _
    $region169: #{decoder_forward.1} parent=1 // pred_fallthru
      _
    // Predicated region
    $region170: #{decoder_forward.1} parent=1 // pred_check
      _
    $region171: #{decoder_forward.1} parent=1 // pred_check_branch
      %491 = sbr.rel (0) target = $region173
    $region172: #{decoder_forward.1} parent=1 // pred_region
      %492 = dma.done [#allocation4], 32
    $region173: #{decoder_forward.1} parent=1 // pred_fallthru
      _
    // Predicated region
    $region174: #{decoder_forward.1} parent=1 // pred_check
      _
    $region175: #{decoder_forward.1} parent=1 // pred_check_branch
      %494 = sbr.rel (0) target = $region177
    $region176: #{decoder_forward.1} parent=1 // pred_region
      %495 = dma.done [#allocation7], 32
    $region177: #{decoder_forward.1} parent=1 // pred_fallthru
      _
    // Predicated region
    $region178: #{decoder_forward.1} parent=1 // pred_check
      _
    $region179: #{decoder_forward.1} parent=1 // pred_check_branch
      %497 = sbr.rel (0) target = $region181
    $region180: #{decoder_forward.1} parent=1 // pred_region
      %498 = dma.done [#allocation7], 256
    $region181: #{decoder_forward.1} parent=1 // pred_fallthru
      _
    // Predicated region
    $region182: #{decoder_forward.1} parent=1 // pred_check
      _
    $region183: #{decoder_forward.1} parent=1 // pred_check_branch
      %500 = sbr.rel (0) target = $region185
    $region184: #{decoder_forward.1} parent=1 // pred_region
      %501 = dma.done [#allocation10], 256
    $region185: #{decoder_forward.1} parent=1 // pred_fallthru
      _
    // Predicated region
    $region186: #{decoder_forward.1} parent=1 // pred_check
      _
    $region187: #{decoder_forward.1} parent=1 // pred_check_branch
      %503 = sbr.rel (0) target = $region189
    $region188: #{decoder_forward.1} parent=1 // pred_region
      %504 = dma.done [#allocation10], 32
    $region189: #{decoder_forward.1} parent=1 // pred_fallthru
      _
    // Predicated region
    $region190: #{decoder_forward.1} parent=1 // pred_check
      _
    $region191: #{decoder_forward.1} parent=1 // pred_check_branch
      %506 = sbr.rel (0) target = $region193
    $region192: #{decoder_forward.1} parent=1 // pred_region
      %507 = dma.done [#allocation13], 32
    $region193: #{decoder_forward.1} parent=1 // pred_fallthru
      _
    // Predicated region
    $region194: #{decoder_forward.1} parent=1 // pred_check
      _
    $region195: #{decoder_forward.1} parent=1 // pred_check_branch
      %509 = sbr.rel (0) target = $region197
    $region196: #{decoder_forward.1} parent=1 // pred_region
      %510 = dma.done [#allocation13], 128
    $region197: #{decoder_forward.1} parent=1 // pred_fallthru
      _
    // Predicated region
    $region198: #{decoder_forward.1} parent=1 // pred_check
      _
    $region199: #{decoder_forward.1} parent=1 // pred_check_branch
      %512 = sbr.rel (0) target = $region201
    $region200: #{decoder_forward.1} parent=1 // pred_region
      %513 = dma.done [#allocation16], 128
    $region201: #{decoder_forward.1} parent=1 // pred_fallthru
      _
    // Predicated region
    $region202: #{decoder_forward.1} parent=1 // pred_check
      _
    $region203: #{decoder_forward.1} parent=1 // pred_check_branch
      %515 = sbr.rel (0) target = $region205
    $region204: #{decoder_forward.1} parent=1 // pred_region
      %516 = dma.done [#allocation16], 256
    $region205: #{decoder_forward.1} parent=1 // pred_fallthru
      _
    // Predicated region
    $region206: #{decoder_forward.1} parent=1 // pred_check
      _
    $region207: #{decoder_forward.1} parent=1 // pred_check_branch
      %518 = sbr.rel (0) target = $region209
    $region208: #{decoder_forward.1} parent=1 // pred_region
      %519 = dma.done [#allocation19], 16
    $region209: #{decoder_forward.1} parent=1 // pred_fallthru
      _
    // Predicated region
    $region210: #{decoder_forward.1} parent=1 // pred_check
      _
    $region211: #{decoder_forward.1} parent=1 // pred_check_branch
      %521 = sbr.rel (0) target = $region213
    $region212: #{decoder_forward.1} parent=1 // pred_region
      %522 = dma.done [#allocation19], 16
    $region213: #{decoder_forward.1} parent=1 // pred_fallthru
      _
    // Predicated region
    $region214: #{decoder_forward.1} parent=1 // pred_check
      _
    $region215: #{decoder_forward.1} parent=1 // pred_check_branch
      %524 = sbr.rel (0) target = $region217
    $region216: #{decoder_forward.1} parent=1 // pred_region
      %525 = dma.done [#allocation22], 1536
    $region217: #{decoder_forward.1} parent=1 // pred_fallthru
      _
    // Predicated region
    $region218: #{decoder_forward.1} parent=1 // pred_check
      _
    $region219: #{decoder_forward.1} parent=1 // pred_check_branch
      %527 = sbr.rel (0) target = $region221
    $region220: #{decoder_forward.1} parent=1 // pred_region
      %528 = dma.done [#allocation22], 768
    $region221: #{decoder_forward.1} parent=1 // pred_fallthru
      _
    // Predicated region
    $region222: #{decoder_forward.1} parent=1 // pred_check
      _
    $region223: #{decoder_forward.1} parent=1 // pred_check_branch
      %530 = sbr.rel (0) target = $region225
    $region224: #{decoder_forward.1} parent=1 // pred_region
      %531 = dma.done [#allocation25], 48
    $region225: #{decoder_forward.1} parent=1 // pred_fallthru
      _
    // Predicated region
    $region226: #{decoder_forward.1} parent=1 // pred_check
      _
    $region227: #{decoder_forward.1} parent=1 // pred_check_branch
      %533 = sbr.rel (0) target = $region229
    $region228: #{decoder_forward.1} parent=1 // pred_region
      %534 = dma.done [#allocation25], 1536
    $region229: #{decoder_forward.1} parent=1 // pred_fallthru
      _
    // Predicated region
    $region230: #{decoder_forward.1} parent=1 // pred_check
      _
    $region231: #{decoder_forward.1} parent=1 // pred_check_branch
      %536 = sbr.rel (0) target = $region233
    $region232: #{decoder_forward.1} parent=1 // pred_region
      %537 = dma.done [#allocation28], 48
    $region233: #{decoder_forward.1} parent=1 // pred_fallthru
      _
    // Predicated region
    $region234: #{decoder_forward.1} parent=1 // pred_check
      _
    $region235: #{decoder_forward.1} parent=1 // pred_check_branch
      %539 = sbr.rel (0) target = $region237
    $region236: #{decoder_forward.1} parent=1 // pred_region
      %540 = dma.done [#allocation28], 512
    $region237: #{decoder_forward.1} parent=1 // pred_fallthru
      _
    // Predicated region
    $region238: #{decoder_forward.1} parent=1 // pred_check
      _
    $region239: #{decoder_forward.1} parent=1 // pred_check_branch
      %542 = sbr.rel (0) target = $region241
    $region240: #{decoder_forward.1} parent=1 // pred_region
      %543 = dma.done [#allocation31], 16
    $region241: #{decoder_forward.1} parent=1 // pred_fallthru
      _
    // Predicated region
    $region242: #{decoder_forward.1} parent=1 // pred_check
      _
    $region243: #{decoder_forward.1} parent=1 // pred_check_branch
      %545 = sbr.rel (0) target = $region245
    $region244: #{decoder_forward.1} parent=1 // pred_region
      %546 = dma.done [#allocation31], 512
    $region245: #{decoder_forward.1} parent=1 // pred_fallthru
      _
    // Predicated region
    $region246: #{decoder_forward.1} parent=1 // pred_check
      _
    $region247: #{decoder_forward.1} parent=1 // pred_check_branch
      %548 = sbr.rel (0) target = $region249
    $region248: #{decoder_forward.1} parent=1 // pred_region
      %549 = dma.done [#allocation34], 16
    $region249: #{decoder_forward.1} parent=1 // pred_fallthru
      _
    // Predicated region
    $region250: #{decoder_forward.1} parent=1 // pred_check
      _
    $region251: #{decoder_forward.1} parent=1 // pred_check_branch
      %551 = sbr.rel (0) target = $region253
    $region252: #{decoder_forward.1} parent=1 // pred_region
      %552 = dma.done [#allocation34], 16
    $region253: #{decoder_forward.1} parent=1 // pred_fallthru
      _
    // Predicated region
    $region254: #{decoder_forward.1} parent=1 // pred_check
      _
    $region255: #{decoder_forward.1} parent=1 // pred_check_branch
      %554 = sbr.rel (0) target = $region257
    $region256: #{decoder_forward.1} parent=1 // pred_region
      %555 = dma.done [#allocation37], 512
    $region257: #{decoder_forward.1} parent=1 // pred_fallthru
      _
    // Predicated region
    $region258: #{decoder_forward.1} parent=1 // pred_check
      _
    $region259: #{decoder_forward.1} parent=1 // pred_check_branch
      %557 = sbr.rel (0) target = $region261
    $region260: #{decoder_forward.1} parent=1 // pred_region
      %558 = dma.done [#allocation37], 512
    $region261: #{decoder_forward.1} parent=1 // pred_fallthru
      _
    // Predicated region
    $region262: #{decoder_forward.1} parent=1 // pred_check
      _
    $region263: #{decoder_forward.1} parent=1 // pred_check_branch
      %560 = sbr.rel (0) target = $region265
    $region264: #{decoder_forward.1} parent=1 // pred_region
      %561 = dma.done [#allocation40], 16
    $region265: #{decoder_forward.1} parent=1 // pred_fallthru
      _
    // Predicated region
    $region266: #{decoder_forward.1} parent=1 // pred_check
      _
    $region267: #{decoder_forward.1} parent=1 // pred_check_branch
      %563 = sbr.rel (0) target = $region269
    $region268: #{decoder_forward.1} parent=1 // pred_region
      %564 = dma.done [#allocation40], 64
    $region269: #{decoder_forward.1} parent=1 // pred_fallthru
      _
    // Predicated region
    $region270: #{decoder_forward.1} parent=1 // pred_check
      _
    $region271: #{decoder_forward.1} parent=1 // pred_check_branch
      %566 = sbr.rel (0) target = $region273
    $region272: #{decoder_forward.1} parent=1 // pred_region
      %567 = dma.done [#allocation43], 2048
    $region273: #{decoder_forward.1} parent=1 // pred_fallthru
      _
    // Predicated region
    $region274: #{decoder_forward.1} parent=1 // pred_check
      _
    $region275: #{decoder_forward.1} parent=1 // pred_check_branch
      %569 = sbr.rel (0) target = $region277
    $region276: #{decoder_forward.1} parent=1 // pred_region
      %570 = dma.done [#allocation43], 2048
    $region277: #{decoder_forward.1} parent=1 // pred_fallthru
      _
    // Predicated region
    $region278: #{decoder_forward.1} parent=1 // pred_check
      _
    $region279: #{decoder_forward.1} parent=1 // pred_check_branch
      %572 = sbr.rel (0) target = $region281
    $region280: #{decoder_forward.1} parent=1 // pred_region
      %573 = dma.done [#allocation46], 64
    $region281: #{decoder_forward.1} parent=1 // pred_fallthru
      _
    // Predicated region
    $region282: #{decoder_forward.1} parent=1 // pred_check
      _
    $region283: #{decoder_forward.1} parent=1 // pred_check_branch
      %575 = sbr.rel (0) target = $region285
    $region284: #{decoder_forward.1} parent=1 // pred_region
      %576 = dma.done [#allocation46], 12288
    $region285: #{decoder_forward.1} parent=1 // pred_fallthru
      _
    // Predicated region
    $region286: #{decoder_forward.1} parent=1 // pred_check
      _
    $region287: #{decoder_forward.1} parent=1 // pred_check_branch
      %578 = sbr.rel (0) target = $region289
    $region288: #{decoder_forward.1} parent=1 // pred_region
      %579 = dma.done [#allocation49], 256
    $region289: #{decoder_forward.1} parent=1 // pred_fallthru
      _
    %v580 = vld [vmem:[#allocation3] sm:$0x3]
    %v581 = vld [vmem:[#allocation17] sm:$0xff]
    %v582 = vld [vmem:[#allocation17 + $0x8] sm:$0xff]
    %v583 = vld [vmem:[#allocation18] sm:$0x1]
    %v585 = vlaneseq
    %v586 = vshrl.u32 %v585, 7
    %v587 = vsub.s32 0, %v586
    %v588 = vrot.slane %v583, %v587
    %vm590 = vcmask 130048
    %v592 = vsel %vm590, %v580, 0
    %594 = vmatprep.subr.mxu0 0.0
    %595 = vmatpush1.msra.mxu0 0.0
    %596 = vmatprep.subr.mxu0 0.0
    %597 = vmatpush1.msra.mxu0 0.0
    %598 = vmatprep.subr.mxu0 0.0
    %599 = vmatpush1.msra.mxu0 0.0
    %600 = vmatprep.subr.mxu0 0.0
    %601 = vmatpush1.msra.mxu0 0.0
    %602 = vmatprep.subr.mxu0 0.0
    %603 = vmatpush1.msra.mxu0 0.0
    %604 = vmatprep.subr.mxu0 0.0
    %605 = vmatpush1.msra.mxu0 0.0
    %606 = vmatprep.subr.mxu0 0.0
    %607 = vmatpush1.msra.mxu0 0.0
    %608 = vmatprep.subr.mxu0 0.0
    %609 = vmatpush1.msra.mxu0 0.0
    %610 = vmatprep.subr.mxu0 0.0
    %611 = vmatpush1.msra.mxu0 0.0
    %612 = vmatprep.subr.mxu0 0.0
    %613 = vmatpush1.msra.mxu0 0.0
    %614 = vmatprep.subr.mxu0 0.0
    %615 = vmatpush1.msra.mxu0 0.0
    %616 = vmatprep.subr.mxu0 0.0
    %617 = vmatpush1.msra.mxu0 0.0
    %618 = vmatprep.subr.mxu0 0.0
    %619 = vmatpush1.msra.mxu0 0.0
    %620 = vmatprep.subr.mxu0 0.0
    %621 = vmatpush1.msra.mxu0 0.0
    %622 = vmatprep.subr.mxu0 0.0
    %623 = vmatpush1.msra.mxu0 %v582
    %624 = vmatprep.subr.mxu0 0.0
    %625 = vmatpush1.msra.mxu0 %v581
    %626 = vmatprep.subr.mxu0 0.0
    %627 = vmatpush2.msra.mxu0 0.0
    %628 = vmatprep.subr.mxu0 0.0
    %629 = vmatpush2.msra.mxu0 0.0
    %630 = vmatprep.subr.mxu0 0.0
    %631 = vmatpush2.msra.mxu0 0.0
    %632 = vmatprep.subr.mxu0 0.0
    %633 = vmatpush2.msra.mxu0 0.0
    %634 = vmatprep.subr.mxu0 0.0
    %635 = vmatpush2.msra.mxu0 0.0
    %636 = vmatprep.subr.mxu0 0.0
    %637 = vmatpush2.msra.mxu0 0.0
    %638 = vmatprep.subr.mxu0 0.0
    %639 = vmatpush2.msra.mxu0 0.0
    %640 = vmatprep.subr.mxu0 0.0
    %641 = vmatpush2.msra.mxu0 0.0
    %642 = vmatprep.subr.mxu0 0.0
    %643 = vmatpush2.msra.mxu0 0.0
    %644 = vmatprep.subr.mxu0 0.0
    %645 = vmatpush2.msra.mxu0 0.0
    %646 = vmatprep.subr.mxu0 0.0
    %647 = vmatpush2.msra.mxu0 0.0
    %648 = vmatprep.subr.mxu0 0.0
    %649 = vmatpush2.msra.mxu0 0.0
    %650 = vmatprep.subr.mxu0 0.0
    %651 = vmatpush2.msra.mxu0 0.0
    %652 = vmatprep.subr.mxu0 0.0
    %653 = vmatpush2.msra.mxu0 0.0
    %654 = vmatprep.subr.mxu0 0.0
    %655 = vmatpush2.msra.mxu0 0.0
    %656 = vmatprep.subr.mxu0 0.0
    %657 = vmatpush2.msra.mxu0 0.0
    %658 = vmatprep.mubr.f32.mxu0 0.0
    %659 = vmatmul.mubr.f32.gmra.mxu0 %v592
    %v660 = vpop.f32.mrf.mxu0
    %v661 = vadd.f32 %v588, %v660
    %v662 = vpop.f32.mrf.mxu0
    %663 = vdwg.mxu0
    %v664 = vtanh.pop %v661
    %v665 = vld [vmem:[%s31] sm:$0xff]
    %v666 = vld [vmem:[%s31 + $0x8] sm:$0xff]
    %v667 = vld [vmem:[%s31 + $0x10] sm:$0xff]
    %v668 = vld [vmem:[%s31 + $0x18] sm:$0xff]
    %v669 = vld [vmem:[#allocation20] sm:$0x1]
    %v671 = vlaneseq
    %v672 = vshrl.u32 %v671, 7
    %v673 = vsub.s32 0, %v672
    %v674 = vrot.slane %v669, %v673
    %vm676 = vcmask 261120
    %v678 = vsel %vm676, %v664, 0
    %680 = vmatprep.subr.mxu0 0.0
    %681 = vmatpush1.msra.mxu0 0.0
    %682 = vmatprep.subr.mxu0 0.0
    %683 = vmatpush1.msra.mxu0 0.0
    %684 = vmatprep.subr.mxu0 0.0
    %685 = vmatpush1.msra.mxu0 0.0
    %686 = vmatprep.subr.mxu0 0.0
    %687 = vmatpush1.msra.mxu0 0.0
    %688 = vmatprep.subr.mxu0 0.0
    %689 = vmatpush1.msra.mxu0 0.0
    %690 = vmatprep.subr.mxu0 0.0
    %691 = vmatpush1.msra.mxu0 0.0
    %692 = vmatprep.subr.mxu0 0.0
    %693 = vmatpush1.msra.mxu0 0.0
    %694 = vmatprep.subr.mxu0 0.0
    %695 = vmatpush1.msra.mxu0 0.0
    %696 = vmatprep.subr.mxu0 0.0
    %697 = vmatpush1.msra.mxu0 0.0
    %698 = vmatprep.subr.mxu0 0.0
    %699 = vmatpush1.msra.mxu0 0.0
    %700 = vmatprep.subr.mxu0 0.0
    %701 = vmatpush1.msra.mxu0 0.0
    %702 = vmatprep.subr.mxu0 0.0
    %703 = vmatpush1.msra.mxu0 0.0
    %704 = vmatprep.subr.mxu0 0.0
    %705 = vmatpush1.msra.mxu0 %v668
    %706 = vmatprep.subr.mxu0 0.0
    %707 = vmatpush1.msra.mxu0 %v667
    %708 = vmatprep.subr.mxu0 0.0
    %709 = vmatpush1.msra.mxu0 %v666
    %710 = vmatprep.subr.mxu0 0.0
    %711 = vmatpush1.msra.mxu0 %v665
    %712 = vmatprep.subr.mxu0 0.0
    %713 = vmatpush2.msra.mxu0 0.0
    %714 = vmatprep.subr.mxu0 0.0
    %715 = vmatpush2.msra.mxu0 0.0
    %716 = vmatprep.subr.mxu0 0.0
    %717 = vmatpush2.msra.mxu0 0.0
    %718 = vmatprep.subr.mxu0 0.0
    %719 = vmatpush2.msra.mxu0 0.0
    %720 = vmatprep.subr.mxu0 0.0
    %721 = vmatpush2.msra.mxu0 0.0
    %722 = vmatprep.subr.mxu0 0.0
    %723 = vmatpush2.msra.mxu0 0.0
    %724 = vmatprep.subr.mxu0 0.0
    %725 = vmatpush2.msra.mxu0 0.0
    %726 = vmatprep.subr.mxu0 0.0
    %727 = vmatpush2.msra.mxu0 0.0
    %728 = vmatprep.subr.mxu0 0.0
    %729 = vmatpush2.msra.mxu0 0.0
    %730 = vmatprep.subr.mxu0 0.0
    %731 = vmatpush2.msra.mxu0 0.0
    %732 = vmatprep.subr.mxu0 0.0
    %733 = vmatpush2.msra.mxu0 0.0
    %734 = vmatprep.subr.mxu0 0.0
    %735 = vmatpush2.msra.mxu0 0.0
    %736 = vmatprep.subr.mxu0 0.0
    %737 = vmatpush2.msra.mxu0 0.0
    %738 = vmatprep.subr.mxu0 0.0
    %739 = vmatpush2.msra.mxu0 0.0
    %740 = vmatprep.subr.mxu0 0.0
    %741 = vmatpush2.msra.mxu0 0.0
    %742 = vmatprep.subr.mxu0 0.0
    %743 = vmatpush2.msra.mxu0 0.0
    %744 = vmatprep.mubr.f32.mxu0 0.0
    %745 = vmatmul.mubr.f32.gmra.mxu0 %v678
    %v746 = vpop.f32.mrf.mxu0
    %v747 = vadd.f32 %v674, %v746
    %v748 = vpop.f32.mrf.mxu0
    %749 = vdwg.mxu0
    %v750 = vtanh.pop %v747
    %v751 = vld [vmem:[#allocation6] sm:$0x3]
    %v752 = vld [vmem:[%s3] sm:$0x3]
    %v753 = vld [vmem:[#allocation21] sm:$0xff]
    %v754 = vld [vmem:[#allocation21 + $0x8] sm:$0xff]
    %v755 = vld [vmem:[#allocation21 + $0x10] sm:$0xff]
    %v756 = vld [vmem:[#allocation21 + $0x18] sm:$0xff]
    %v757 = vld [vmem:[#allocation21 + $0x20] sm:$0xff]
    %v758 = vld [vmem:[#allocation21 + $0x28] sm:$0xff]
    %v759 = vld [vmem:[#allocation21 + $0x30] sm:$0xff]
    %v760 = vld [vmem:[#allocation21 + $0x38] sm:$0xff]
    %v761 = vld [vmem:[#allocation21 + $0x40] sm:$0xff]
    %v762 = vld [vmem:[#allocation21 + $0x48] sm:$0xff]
    %v763 = vld [vmem:[#allocation21 + $0x50] sm:$0xff]
    %v764 = vld [vmem:[#allocation21 + $0x58] sm:$0xff]
    %v765 = vld [vmem:[#allocation23] sm:$0xff]
    %v766 = vld [vmem:[#allocation23 + $0x8] sm:$0xff]
    %v767 = vld [vmem:[#allocation23 + $0x10] sm:$0xff]
    %v768 = vld [vmem:[#allocation23 + $0x18] sm:$0xff]
    %v769 = vld [vmem:[#allocation23 + $0x20] sm:$0xff]
    %v770 = vld [vmem:[#allocation23 + $0x28] sm:$0xff]
    %v772 = vsel %vm590, %v750, 0
    %774 = vmatprep.subr.mxu0 0.0
    %775 = vmatpush1.msra.mxu0 0.0
    %776 = vmatprep.subr.mxu0 0.0
    %777 = vmatpush1.msra.mxu0 0.0
    %778 = vmatprep.subr.mxu0 0.0
    %779 = vmatpush1.msra.mxu0 0.0
    %780 = vmatprep.subr.mxu0 0.0
    %781 = vmatpush1.msra.mxu0 0.0
    %782 = vmatprep.subr.mxu0 0.0
    %783 = vmatpush1.msra.mxu0 0.0
    %784 = vmatprep.subr.mxu0 0.0
    %785 = vmatpush1.msra.mxu0 0.0
    %786 = vmatprep.subr.mxu0 0.0
    %787 = vmatpush1.msra.mxu0 0.0
    %788 = vmatprep.subr.mxu0 0.0
    %789 = vmatpush1.msra.mxu0 0.0
    %790 = vmatprep.subr.mxu0 0.0
    %791 = vmatpush1.msra.mxu0 0.0
    %792 = vmatprep.subr.mxu0 0.0
    %793 = vmatpush1.msra.mxu0 0.0
    %794 = vmatprep.subr.mxu0 0.0
    %795 = vmatpush1.msra.mxu0 0.0
    %796 = vmatprep.subr.mxu0 0.0
    %797 = vmatpush1.msra.mxu0 0.0
    %798 = vmatprep.subr.mxu0 0.0
    %799 = vmatpush1.msra.mxu0 0.0
    %800 = vmatprep.subr.mxu0 0.0
    %801 = vmatpush1.msra.mxu0 0.0
    %802 = vmatprep.subr.mxu0 %v769
    %803 = vmatpush1.msra.mxu0 %v768
    %804 = vmatprep.subr.mxu0 %v766
    %805 = vmatpush1.msra.mxu0 %v765
    %806 = vmatprep.subr.mxu0 0.0
    %807 = vmatpush2.msra.mxu0 0.0
    %808 = vmatprep.subr.mxu0 0.0
    %809 = vmatpush2.msra.mxu0 0.0
    %810 = vmatprep.subr.mxu0 0.0
    %811 = vmatpush2.msra.mxu0 0.0
    %812 = vmatprep.subr.mxu0 0.0
    %813 = vmatpush2.msra.mxu0 0.0
    %814 = vmatprep.subr.mxu0 0.0
    %815 = vmatpush2.msra.mxu0 0.0
    %816 = vmatprep.subr.mxu0 0.0
    %817 = vmatpush2.msra.mxu0 0.0
    %818 = vmatprep.subr.mxu0 0.0
    %819 = vmatpush2.msra.mxu0 0.0
    %820 = vmatprep.subr.mxu0 0.0
    %821 = vmatpush2.msra.mxu0 0.0
    %822 = vmatprep.subr.mxu0 0.0
    %823 = vmatpush2.msra.mxu0 0.0
    %824 = vmatprep.subr.mxu0 0.0
    %825 = vmatpush2.msra.mxu0 0.0
    %826 = vmatprep.subr.mxu0 0.0
    %827 = vmatpush2.msra.mxu0 0.0
    %828 = vmatprep.subr.mxu0 0.0
    %829 = vmatpush2.msra.mxu0 0.0
    %830 = vmatprep.subr.mxu0 0.0
    %831 = vmatpush2.msra.mxu0 0.0
    %832 = vmatprep.subr.mxu0 0.0
    %833 = vmatpush2.msra.mxu0 0.0
    %834 = vmatprep.subr.mxu0 0.0
    %835 = vmatpush2.msra.mxu0 0.0
    %836 = vmatprep.subr.mxu0 0.0
    %837 = vmatpush2.msra.mxu0 0.0
    %838 = vmatprep.mubr.f32.mxu0 0.0
    %839 = vmatmul.mubr.f32.gmra.mxu0 %v772
    %v840 = vpop.f32.mrf.mxu0
    %v841 = vadd.f32 0.0, %v840
    %v842 = vpop.f32.mrf.mxu0
    %v843 = vadd.f32 0.0, %v842
    %844 = vdwg.mxu0
    %845 = vmatprep.subr.mxu0 0.0
    %846 = vmatpush1.msra.mxu0 0.0
    %847 = vmatprep.subr.mxu0 0.0
    %848 = vmatpush1.msra.mxu0 0.0
    %849 = vmatprep.subr.mxu0 0.0
    %850 = vmatpush1.msra.mxu0 0.0
    %851 = vmatprep.subr.mxu0 0.0
    %852 = vmatpush1.msra.mxu0 0.0
    %853 = vmatprep.subr.mxu0 0.0
    %854 = vmatpush1.msra.mxu0 0.0
    %855 = vmatprep.subr.mxu0 0.0
    %856 = vmatpush1.msra.mxu0 0.0
    %857 = vmatprep.subr.mxu0 0.0
    %858 = vmatpush1.msra.mxu0 0.0
    %859 = vmatprep.subr.mxu0 0.0
    %860 = vmatpush1.msra.mxu0 0.0
    %861 = vmatprep.subr.mxu0 0.0
    %862 = vmatpush1.msra.mxu0 0.0
    %863 = vmatprep.subr.mxu0 0.0
    %864 = vmatpush1.msra.mxu0 0.0
    %865 = vmatprep.subr.mxu0 0.0
    %866 = vmatpush1.msra.mxu0 0.0
    %867 = vmatprep.subr.mxu0 0.0
    %868 = vmatpush1.msra.mxu0 0.0
    %869 = vmatprep.subr.mxu0 0.0
    %870 = vmatpush1.msra.mxu0 0.0
    %871 = vmatprep.subr.mxu0 0.0
    %872 = vmatpush1.msra.mxu0 0.0
    %873 = vmatprep.subr.mxu0 0.0
    %874 = vmatpush1.msra.mxu0 %v770
    %875 = vmatprep.subr.mxu0 0.0
    %876 = vmatpush1.msra.mxu0 %v767
    %877 = vmatprep.subr.mxu0 0.0
    %878 = vmatpush2.msra.mxu0 0.0
    %879 = vmatprep.subr.mxu0 0.0
    %880 = vmatpush2.msra.mxu0 0.0
    %881 = vmatprep.subr.mxu0 0.0
    %882 = vmatpush2.msra.mxu0 0.0
    %883 = vmatprep.subr.mxu0 0.0
    %884 = vmatpush2.msra.mxu0 0.0
    %885 = vmatprep.subr.mxu0 0.0
    %886 = vmatpush2.msra.mxu0 0.0
    %887 = vmatprep.subr.mxu0 0.0
    %888 = vmatpush2.msra.mxu0 0.0
    %889 = vmatprep.subr.mxu0 0.0
    %890 = vmatpush2.msra.mxu0 0.0
    %891 = vmatprep.subr.mxu0 0.0
    %892 = vmatpush2.msra.mxu0 0.0
    %893 = vmatprep.subr.mxu0 0.0
    %894 = vmatpush2.msra.mxu0 0.0
    %895 = vmatprep.subr.mxu0 0.0
    %896 = vmatpush2.msra.mxu0 0.0
    %897 = vmatprep.subr.mxu0 0.0
    %898 = vmatpush2.msra.mxu0 0.0
    %899 = vmatprep.subr.mxu0 0.0
    %900 = vmatpush2.msra.mxu0 0.0
    %901 = vmatprep.subr.mxu0 0.0
    %902 = vmatpush2.msra.mxu0 0.0
    %903 = vmatprep.subr.mxu0 0.0
    %904 = vmatpush2.msra.mxu0 0.0
    %905 = vmatprep.subr.mxu0 0.0
    %906 = vmatpush2.msra.mxu0 0.0
    %907 = vmatprep.subr.mxu0 0.0
    %908 = vmatpush2.msra.mxu0 0.0
    %909 = vmatprep.mubr.f32.mxu0 0.0
    %910 = vmatmul.mubr.f32.gmra.mxu0 %v772
    %v911 = vpop.f32.mrf.mxu0
    %v912 = vadd.f32 0.0, %v911
    %v913 = vpop.f32.mrf.mxu0
    %914 = vdwg.mxu0
    %v916 = vsel %vm676, %v752, 0
    %918 = vmatprep.subr.mxu0 0.0
    %919 = vmatpush1.msra.mxu0 0.0
    %920 = vmatprep.subr.mxu0 0.0
    %921 = vmatpush1.msra.mxu0 0.0
    %922 = vmatprep.subr.mxu0 0.0
    %923 = vmatpush1.msra.mxu0 0.0
    %924 = vmatprep.subr.mxu0 0.0
    %925 = vmatpush1.msra.mxu0 0.0
    %926 = vmatprep.subr.mxu0 0.0
    %927 = vmatpush1.msra.mxu0 0.0
    %928 = vmatprep.subr.mxu0 0.0
    %929 = vmatpush1.msra.mxu0 0.0
    %930 = vmatprep.subr.mxu0 0.0
    %931 = vmatpush1.msra.mxu0 0.0
    %932 = vmatprep.subr.mxu0 0.0
    %933 = vmatpush1.msra.mxu0 0.0
    %934 = vmatprep.subr.mxu0 0.0
    %935 = vmatpush1.msra.mxu0 0.0
    %936 = vmatprep.subr.mxu0 0.0
    %937 = vmatpush1.msra.mxu0 0.0
    %938 = vmatprep.subr.mxu0 0.0
    %939 = vmatpush1.msra.mxu0 0.0
    %940 = vmatprep.subr.mxu0 0.0
    %941 = vmatpush1.msra.mxu0 0.0
    %942 = vmatprep.subr.mxu0 %v763
    %943 = vmatpush1.msra.mxu0 %v762
    %944 = vmatprep.subr.mxu0 %v760
    %945 = vmatpush1.msra.mxu0 %v759
    %946 = vmatprep.subr.mxu0 %v757
    %947 = vmatpush1.msra.mxu0 %v756
    %948 = vmatprep.subr.mxu0 %v754
    %949 = vmatpush1.msra.mxu0 %v753
    %950 = vmatprep.subr.mxu0 0.0
    %951 = vmatpush2.msra.mxu0 0.0
    %952 = vmatprep.subr.mxu0 0.0
    %953 = vmatpush2.msra.mxu0 0.0
    %954 = vmatprep.subr.mxu0 0.0
    %955 = vmatpush2.msra.mxu0 0.0
    %956 = vmatprep.subr.mxu0 0.0
    %957 = vmatpush2.msra.mxu0 0.0
    %958 = vmatprep.subr.mxu0 0.0
    %959 = vmatpush2.msra.mxu0 0.0
    %960 = vmatprep.subr.mxu0 0.0
    %961 = vmatpush2.msra.mxu0 0.0
    %962 = vmatprep.subr.mxu0 0.0
    %963 = vmatpush2.msra.mxu0 0.0
    %964 = vmatprep.subr.mxu0 0.0
    %965 = vmatpush2.msra.mxu0 0.0
    %966 = vmatprep.subr.mxu0 0.0
    %967 = vmatpush2.msra.mxu0 0.0
    %968 = vmatprep.subr.mxu0 0.0
    %969 = vmatpush2.msra.mxu0 0.0
    %970 = vmatprep.subr.mxu0 0.0
    %971 = vmatpush2.msra.mxu0 0.0
    %972 = vmatprep.subr.mxu0 0.0
    %973 = vmatpush2.msra.mxu0 0.0
    %974 = vmatprep.subr.mxu0 0.0
    %975 = vmatpush2.msra.mxu0 0.0
    %976 = vmatprep.subr.mxu0 0.0
    %977 = vmatpush2.msra.mxu0 0.0
    %978 = vmatprep.subr.mxu0 0.0
    %979 = vmatpush2.msra.mxu0 0.0
    %980 = vmatprep.subr.mxu0 0.0
    %981 = vmatpush2.msra.mxu0 0.0
    %982 = vmatprep.mubr.f32.mxu0 0.0
    %983 = vmatmul.mubr.f32.gmra.mxu0 %v916
    %v984 = vpop.f32.mrf.mxu0
    %v985 = vadd.f32 %v841, %v984
    %v986 = vpop.f32.mrf.mxu0
    %v987 = vadd.f32 %v843, %v986
    %988 = vdwg.mxu0
    %989 = vmatprep.subr.mxu0 0.0
    %990 = vmatpush1.msra.mxu0 0.0
    %991 = vmatprep.subr.mxu0 0.0
    %992 = vmatpush1.msra.mxu0 0.0
    %993 = vmatprep.subr.mxu0 0.0
    %994 = vmatpush1.msra.mxu0 0.0
    %995 = vmatprep.subr.mxu0 0.0
    %996 = vmatpush1.msra.mxu0 0.0
    %997 = vmatprep.subr.mxu0 0.0
    %998 = vmatpush1.msra.mxu0 0.0
    %999 = vmatprep.subr.mxu0 0.0
    %1000 = vmatpush1.msra.mxu0 0.0
    %1001 = vmatprep.subr.mxu0 0.0
    %1002 = vmatpush1.msra.mxu0 0.0
    %1003 = vmatprep.subr.mxu0 0.0
    %1004 = vmatpush1.msra.mxu0 0.0
    %1005 = vmatprep.subr.mxu0 0.0
    %1006 = vmatpush1.msra.mxu0 0.0
    %1007 = vmatprep.subr.mxu0 0.0
    %1008 = vmatpush1.msra.mxu0 0.0
    %1009 = vmatprep.subr.mxu0 0.0
    %1010 = vmatpush1.msra.mxu0 0.0
    %1011 = vmatprep.subr.mxu0 0.0
    %1012 = vmatpush1.msra.mxu0 0.0
    %1013 = vmatprep.subr.mxu0 0.0
    %1014 = vmatpush1.msra.mxu0 %v764
    %1015 = vmatprep.subr.mxu0 0.0
    %1016 = vmatpush1.msra.mxu0 %v761
    %1017 = vmatprep.subr.mxu0 0.0
    %1018 = vmatpush1.msra.mxu0 %v758
    %1019 = vmatprep.subr.mxu0 0.0
    %1020 = vmatpush1.msra.mxu0 %v755
    %1021 = vmatprep.subr.mxu0 0.0
    %1022 = vmatpush2.msra.mxu0 0.0
    %1023 = vmatprep.subr.mxu0 0.0
    %1024 = vmatpush2.msra.mxu0 0.0
    %1025 = vmatprep.subr.mxu0 0.0
    %1026 = vmatpush2.msra.mxu0 0.0
    %1027 = vmatprep.subr.mxu0 0.0
    %1028 = vmatpush2.msra.mxu0 0.0
    %1029 = vmatprep.subr.mxu0 0.0
    %1030 = vmatpush2.msra.mxu0 0.0
    %1031 = vmatprep.subr.mxu0 0.0
    %1032 = vmatpush2.msra.mxu0 0.0
    %1033 = vmatprep.subr.mxu0 0.0
    %1034 = vmatpush2.msra.mxu0 0.0
    %1035 = vmatprep.subr.mxu0 0.0
    %1036 = vmatpush2.msra.mxu0 0.0
    %1037 = vmatprep.subr.mxu0 0.0
    %1038 = vmatpush2.msra.mxu0 0.0
    %1039 = vmatprep.subr.mxu0 0.0
    %1040 = vmatpush2.msra.mxu0 0.0
    %1041 = vmatprep.subr.mxu0 0.0
    %1042 = vmatpush2.msra.mxu0 0.0
    %1043 = vmatprep.subr.mxu0 0.0
    %1044 = vmatpush2.msra.mxu0 0.0
    %1045 = vmatprep.subr.mxu0 0.0
    %1046 = vmatpush2.msra.mxu0 0.0
    %1047 = vmatprep.subr.mxu0 0.0
    %1048 = vmatpush2.msra.mxu0 0.0
    %1049 = vmatprep.subr.mxu0 0.0
    %1050 = vmatpush2.msra.mxu0 0.0
    %1051 = vmatprep.subr.mxu0 0.0
    %1052 = vmatpush2.msra.mxu0 0.0
    %1053 = vmatprep.mubr.f32.mxu0 0.0
    %1054 = vmatmul.mubr.f32.gmra.mxu0 %v916
    %v1055 = vpop.f32.mrf.mxu0
    %v1056 = vadd.f32 %v912, %v1055
    %v1057 = vpop.f32.mrf.mxu0
    %1058 = vdwg.mxu0
    %v1059 = vld [vmem:[#allocation24] sm:$0x7]
    %v1061 = vlaneseq
    %v1062 = vshrl.u32 %v1061, 7
    %v1063 = vsub.s32 0, %v1062
    %v1064 = vrot.slane %v1059, %v1063
    %v1065 = vlaneseq
    %v1066 = vshrl.u32 %v1065, 7
    %v1067 = vsub.s32 1, %v1066
    %v1068 = vrot.slane %v1059, %v1067
    %v1069 = vlaneseq
    %v1070 = vshrl.u32 %v1069, 7
    %v1071 = vsub.s32 2, %v1070
    %v1072 = vrot.slane %v1059, %v1071
    %v1076 = vadd.f32 %v985, %v1064
    %v1077 = vadd.f32 %v987, %v1068
    %v1078 = vadd.f32 %v1056, %v1072
    %v1079 = vld [vmem:[#allocation26] sm:$0xff]
    %v1080 = vld [vmem:[#allocation26 + $0x8] sm:$0xff]
    %v1081 = vld [vmem:[#allocation26 + $0x10] sm:$0xff]
    %v1082 = vld [vmem:[#allocation26 + $0x18] sm:$0xff]
    %v1083 = vld [vmem:[#allocation26 + $0x20] sm:$0xff]
    %v1084 = vld [vmem:[#allocation26 + $0x28] sm:$0xff]
    %v1085 = vld [vmem:[#allocation26 + $0x30] sm:$0xff]
    %v1086 = vld [vmem:[#allocation26 + $0x38] sm:$0xff]
    %v1087 = vld [vmem:[#allocation26 + $0x40] sm:$0xff]
    %v1088 = vld [vmem:[#allocation26 + $0x48] sm:$0xff]
    %v1089 = vld [vmem:[#allocation26 + $0x50] sm:$0xff]
    %v1090 = vld [vmem:[#allocation26 + $0x58] sm:$0xff]
    %v1091 = vld [vmem:[#allocation27] sm:$0x7]
    %v1093 = vlaneseq
    %v1094 = vshrl.u32 %v1093, 7
    %v1095 = vsub.s32 0, %v1094
    %v1096 = vrot.slane %v1091, %v1095
    %v1097 = vlaneseq
    %v1098 = vshrl.u32 %v1097, 7
    %v1099 = vsub.s32 1, %v1098
    %v1100 = vrot.slane %v1091, %v1099
    %v1101 = vlaneseq
    %v1102 = vshrl.u32 %v1101, 7
    %v1103 = vsub.s32 2, %v1102
    %v1104 = vrot.slane %v1091, %v1103
    %v1109 = vsel %vm676, %v751, 0
    %1111 = vmatprep.subr.mxu0 0.0
    %1112 = vmatpush1.msra.mxu0 0.0
    %1113 = vmatprep.subr.mxu0 0.0
    %1114 = vmatpush1.msra.mxu0 0.0
    %1115 = vmatprep.subr.mxu0 0.0
    %1116 = vmatpush1.msra.mxu0 0.0
    %1117 = vmatprep.subr.mxu0 0.0
    %1118 = vmatpush1.msra.mxu0 0.0
    %1119 = vmatprep.subr.mxu0 0.0
    %1120 = vmatpush1.msra.mxu0 0.0
    %1121 = vmatprep.subr.mxu0 0.0
    %1122 = vmatpush1.msra.mxu0 0.0
    %1123 = vmatprep.subr.mxu0 0.0
    %1124 = vmatpush1.msra.mxu0 0.0
    %1125 = vmatprep.subr.mxu0 0.0
    %1126 = vmatpush1.msra.mxu0 0.0
    %1127 = vmatprep.subr.mxu0 0.0
    %1128 = vmatpush1.msra.mxu0 0.0
    %1129 = vmatprep.subr.mxu0 0.0
    %1130 = vmatpush1.msra.mxu0 0.0
    %1131 = vmatprep.subr.mxu0 0.0
    %1132 = vmatpush1.msra.mxu0 0.0
    %1133 = vmatprep.subr.mxu0 0.0
    %1134 = vmatpush1.msra.mxu0 0.0
    %1135 = vmatprep.subr.mxu0 %v1089
    %1136 = vmatpush1.msra.mxu0 %v1088
    %1137 = vmatprep.subr.mxu0 %v1086
    %1138 = vmatpush1.msra.mxu0 %v1085
    %1139 = vmatprep.subr.mxu0 %v1083
    %1140 = vmatpush1.msra.mxu0 %v1082
    %1141 = vmatprep.subr.mxu0 %v1080
    %1142 = vmatpush1.msra.mxu0 %v1079
    %1143 = vmatprep.subr.mxu0 0.0
    %1144 = vmatpush2.msra.mxu0 0.0
    %1145 = vmatprep.subr.mxu0 0.0
    %1146 = vmatpush2.msra.mxu0 0.0
    %1147 = vmatprep.subr.mxu0 0.0
    %1148 = vmatpush2.msra.mxu0 0.0
    %1149 = vmatprep.subr.mxu0 0.0
    %1150 = vmatpush2.msra.mxu0 0.0
    %1151 = vmatprep.subr.mxu0 0.0
    %1152 = vmatpush2.msra.mxu0 0.0
    %1153 = vmatprep.subr.mxu0 0.0
    %1154 = vmatpush2.msra.mxu0 0.0
    %1155 = vmatprep.subr.mxu0 0.0
    %1156 = vmatpush2.msra.mxu0 0.0
    %1157 = vmatprep.subr.mxu0 0.0
    %1158 = vmatpush2.msra.mxu0 0.0
    %1159 = vmatprep.subr.mxu0 0.0
    %1160 = vmatpush2.msra.mxu0 0.0
    %1161 = vmatprep.subr.mxu0 0.0
    %1162 = vmatpush2.msra.mxu0 0.0
    %1163 = vmatprep.subr.mxu0 0.0
    %1164 = vmatpush2.msra.mxu0 0.0
    %1165 = vmatprep.subr.mxu0 0.0
    %1166 = vmatpush2.msra.mxu0 0.0
    %1167 = vmatprep.subr.mxu0 0.0
    %1168 = vmatpush2.msra.mxu0 0.0
    %1169 = vmatprep.subr.mxu0 0.0
    %1170 = vmatpush2.msra.mxu0 0.0
    %1171 = vmatprep.subr.mxu0 0.0
    %1172 = vmatpush2.msra.mxu0 0.0
    %1173 = vmatprep.subr.mxu0 0.0
    %1174 = vmatpush2.msra.mxu0 0.0
    %1175 = vmatprep.mubr.f32.mxu0 0.0
    %1176 = vmatmul.mubr.f32.gmra.mxu0 %v1109
    %v1177 = vpop.f32.mrf.mxu0
    %v1178 = vadd.f32 %v1096, %v1177
    %v1179 = vpop.f32.mrf.mxu0
    %v1180 = vadd.f32 %v1100, %v1179
    %1181 = vdwg.mxu0
    %1182 = vmatprep.subr.mxu0 0.0
    %1183 = vmatpush1.msra.mxu0 0.0
    %1184 = vmatprep.subr.mxu0 0.0
    %1185 = vmatpush1.msra.mxu0 0.0
    %1186 = vmatprep.subr.mxu0 0.0
    %1187 = vmatpush1.msra.mxu0 0.0
    %1188 = vmatprep.subr.mxu0 0.0
    %1189 = vmatpush1.msra.mxu0 0.0
    %1190 = vmatprep.subr.mxu0 0.0
    %1191 = vmatpush1.msra.mxu0 0.0
    %1192 = vmatprep.subr.mxu0 0.0
    %1193 = vmatpush1.msra.mxu0 0.0
    %1194 = vmatprep.subr.mxu0 0.0
    %1195 = vmatpush1.msra.mxu0 0.0
    %1196 = vmatprep.subr.mxu0 0.0
    %1197 = vmatpush1.msra.mxu0 0.0
    %1198 = vmatprep.subr.mxu0 0.0
    %1199 = vmatpush1.msra.mxu0 0.0
    %1200 = vmatprep.subr.mxu0 0.0
    %1201 = vmatpush1.msra.mxu0 0.0
    %1202 = vmatprep.subr.mxu0 0.0
    %1203 = vmatpush1.msra.mxu0 0.0
    %1204 = vmatprep.subr.mxu0 0.0
    %1205 = vmatpush1.msra.mxu0 0.0
    %1206 = vmatprep.subr.mxu0 0.0
    %1207 = vmatpush1.msra.mxu0 %v1090
    %1208 = vmatprep.subr.mxu0 0.0
    %1209 = vmatpush1.msra.mxu0 %v1087
    %1210 = vmatprep.subr.mxu0 0.0
    %1211 = vmatpush1.msra.mxu0 %v1084
    %1212 = vmatprep.subr.mxu0 0.0
    %1213 = vmatpush1.msra.mxu0 %v1081
    %1214 = vmatprep.subr.mxu0 0.0
    %1215 = vmatpush2.msra.mxu0 0.0
    %1216 = vmatprep.subr.mxu0 0.0
    %1217 = vmatpush2.msra.mxu0 0.0
    %1218 = vmatprep.subr.mxu0 0.0
    %1219 = vmatpush2.msra.mxu0 0.0
    %1220 = vmatprep.subr.mxu0 0.0
    %1221 = vmatpush2.msra.mxu0 0.0
    %1222 = vmatprep.subr.mxu0 0.0
    %1223 = vmatpush2.msra.mxu0 0.0
    %1224 = vmatprep.subr.mxu0 0.0
    %1225 = vmatpush2.msra.mxu0 0.0
    %1226 = vmatprep.subr.mxu0 0.0
    %1227 = vmatpush2.msra.mxu0 0.0
    %1228 = vmatprep.subr.mxu0 0.0
    %1229 = vmatpush2.msra.mxu0 0.0
    %1230 = vmatprep.subr.mxu0 0.0
    %1231 = vmatpush2.msra.mxu0 0.0
    %1232 = vmatprep.subr.mxu0 0.0
    %1233 = vmatpush2.msra.mxu0 0.0
    %1234 = vmatprep.subr.mxu0 0.0
    %1235 = vmatpush2.msra.mxu0 0.0
    %1236 = vmatprep.subr.mxu0 0.0
    %1237 = vmatpush2.msra.mxu0 0.0
    %1238 = vmatprep.subr.mxu0 0.0
    %1239 = vmatpush2.msra.mxu0 0.0
    %1240 = vmatprep.subr.mxu0 0.0
    %1241 = vmatpush2.msra.mxu0 0.0
    %1242 = vmatprep.subr.mxu0 0.0
    %1243 = vmatpush2.msra.mxu0 0.0
    %1244 = vmatprep.subr.mxu0 0.0
    %1245 = vmatpush2.msra.mxu0 0.0
    %1246 = vmatprep.mubr.f32.mxu0 0.0
    %1247 = vmatmul.mubr.f32.gmra.mxu0 %v1109
    %v1248 = vpop.f32.mrf.mxu0
    %v1249 = vadd.f32 %v1104, %v1248
    %v1250 = vpop.f32.mrf.mxu0
    %1251 = vdwg.mxu0
    %v1252 = vadd.f32 %v1076, %v1178
    %v1253 = vxor.u32 %v1252, 2147483648
    %v1254 = vmul.f32 %v1253, 1.442695
    %v1255 = vpow.pop %v1254
    %v1256 = vadd.f32 %v1255, 1.0
    %v1257 = vrcp.pop %v1256
    %v1258 = vmul.f32 1.0, %v1257
    %v1259 = vadd.f32 %v1077, %v1180
    %v1260 = vxor.u32 %v1259, 2147483648
    %v1261 = vmul.f32 %v1260, 1.442695
    %v1262 = vpow.pop %v1261
    %v1263 = vadd.f32 %v1262, 1.0
    %v1264 = vrcp.pop %v1263
    %v1265 = vmul.f32 1.0, %v1264
    %v1266 = vmul.f32 %v1258, %v1249
    %v1267 = vadd.f32 %v1078, %v1266
    %v1268 = vtanh.pop %v1267
    %v1269 = vsub.f32 1.0, %v1265
    %v1270 = vmul.f32 %v1269, %v1268
    %v1271 = vmul.f32 %v1265, %v751
    %v1272 = vadd.f32 %v1270, %v1271
    %vm1273 = vcmask 254976
    %1274 = vst.msk [vmem:[#allocation50] sm:$0x3] %vm1273, %v1272
    %v1275 = vld [vmem:[#allocation32] sm:$0xff]
    %v1276 = vld [vmem:[#allocation32 + $0x8] sm:$0xff]
    %v1277 = vld [vmem:[#allocation32 + $0x10] sm:$0xff]
    %v1278 = vld [vmem:[#allocation32 + $0x18] sm:$0xff]
    %v1279 = vld [vmem:[#allocation33] sm:$0x1]
    %v1281 = vlaneseq
    %v1282 = vshrl.u32 %v1281, 7
    %v1283 = vsub.s32 0, %v1282
    %v1284 = vrot.slane %v1279, %v1283
    %v1287 = vsel %vm676, %v1272, 0
    %1289 = vmatprep.subr.mxu0 0.0
    %1290 = vmatpush1.msra.mxu0 0.0
    %1291 = vmatprep.subr.mxu0 0.0
    %1292 = vmatpush1.msra.mxu0 0.0
    %1293 = vmatprep.subr.mxu0 0.0
    %1294 = vmatpush1.msra.mxu0 0.0
    %1295 = vmatprep.subr.mxu0 0.0
    %1296 = vmatpush1.msra.mxu0 0.0
    %1297 = vmatprep.subr.mxu0 0.0
    %1298 = vmatpush1.msra.mxu0 0.0
    %1299 = vmatprep.subr.mxu0 0.0
    %1300 = vmatpush1.msra.mxu0 0.0
    %1301 = vmatprep.subr.mxu0 0.0
    %1302 = vmatpush1.msra.mxu0 0.0
    %1303 = vmatprep.subr.mxu0 0.0
    %1304 = vmatpush1.msra.mxu0 0.0
    %1305 = vmatprep.subr.mxu0 0.0
    %1306 = vmatpush1.msra.mxu0 0.0
    %1307 = vmatprep.subr.mxu0 0.0
    %1308 = vmatpush1.msra.mxu0 0.0
    %1309 = vmatprep.subr.mxu0 0.0
    %1310 = vmatpush1.msra.mxu0 0.0
    %1311 = vmatprep.subr.mxu0 0.0
    %1312 = vmatpush1.msra.mxu0 0.0
    %1313 = vmatprep.subr.mxu0 0.0
    %1314 = vmatpush1.msra.mxu0 %v1278
    %1315 = vmatprep.subr.mxu0 0.0
    %1316 = vmatpush1.msra.mxu0 %v1277
    %1317 = vmatprep.subr.mxu0 0.0
    %1318 = vmatpush1.msra.mxu0 %v1276
    %1319 = vmatprep.subr.mxu0 0.0
    %1320 = vmatpush1.msra.mxu0 %v1275
    %1321 = vmatprep.subr.mxu0 0.0
    %1322 = vmatpush2.msra.mxu0 0.0
    %1323 = vmatprep.subr.mxu0 0.0
    %1324 = vmatpush2.msra.mxu0 0.0
    %1325 = vmatprep.subr.mxu0 0.0
    %1326 = vmatpush2.msra.mxu0 0.0
    %1327 = vmatprep.subr.mxu0 0.0
    %1328 = vmatpush2.msra.mxu0 0.0
    %1329 = vmatprep.subr.mxu0 0.0
    %1330 = vmatpush2.msra.mxu0 0.0
    %1331 = vmatprep.subr.mxu0 0.0
    %1332 = vmatpush2.msra.mxu0 0.0
    %1333 = vmatprep.subr.mxu0 0.0
    %1334 = vmatpush2.msra.mxu0 0.0
    %1335 = vmatprep.subr.mxu0 0.0
    %1336 = vmatpush2.msra.mxu0 0.0
    %1337 = vmatprep.subr.mxu0 0.0
    %1338 = vmatpush2.msra.mxu0 0.0
    %1339 = vmatprep.subr.mxu0 0.0
    %1340 = vmatpush2.msra.mxu0 0.0
    %1341 = vmatprep.subr.mxu0 0.0
    %1342 = vmatpush2.msra.mxu0 0.0
    %1343 = vmatprep.subr.mxu0 0.0
    %1344 = vmatpush2.msra.mxu0 0.0
    %1345 = vmatprep.subr.mxu0 0.0
    %1346 = vmatpush2.msra.mxu0 0.0
    %1347 = vmatprep.subr.mxu0 0.0
    %1348 = vmatpush2.msra.mxu0 0.0
    %1349 = vmatprep.subr.mxu0 0.0
    %1350 = vmatpush2.msra.mxu0 0.0
    %1351 = vmatprep.subr.mxu0 0.0
    %1352 = vmatpush2.msra.mxu0 0.0
    %1353 = vmatprep.mubr.f32.mxu0 0.0
    %1354 = vmatmul.mubr.f32.gmra.mxu0 %v1287
    %v1355 = vpop.f32.mrf.mxu0
    %v1356 = vadd.f32 %v1284, %v1355
    %v1357 = vpop.f32.mrf.mxu0
    %1358 = vdwg.mxu0
    %v1359 = vld [vmem:[%s11] sm:$0xff]
    %v1360 = vld [vmem:[%s11 + $0x8] sm:$0xff]
    %v1361 = vld [vmem:[%s45] sm:$0xff]
    %v1362 = vld [vmem:[%s45 + $0x8] sm:$0xff]
    %v1363 = vld [vmem:[%s45 + $0x10] sm:$0xff]
    %v1364 = vld [vmem:[%s45 + $0x18] sm:$0xff]
    %v1365 = vld [vmem:[%s45 + $0x20] sm:$0xff]
    %v1366 = vld [vmem:[%s45 + $0x28] sm:$0xff]
    %v1367 = vld [vmem:[%s45 + $0x30] sm:$0xff]
    %v1368 = vld [vmem:[%s45 + $0x38] sm:$0x3f]
    %vm1369 = vcmask 506880
    %v1371 = vsel %vm1369, %v1359, 0
    %v1374 = vsel %vm1369, %v1360, 0
    %vm1376 = vcmask 1045504
    %v1378 = vsel %vm1376, %v1368, 0
    %1380 = vmatprep.subr.mxu0 0.0
    %1381 = vmatpush1.msra.mxu0 0.0
    %1382 = vmatprep.subr.mxu0 0.0
    %1383 = vmatpush1.msra.mxu0 0.0
    %1384 = vmatprep.subr.mxu0 0.0
    %1385 = vmatpush1.msra.mxu0 0.0
    %1386 = vmatprep.subr.mxu0 0.0
    %1387 = vmatpush1.msra.mxu0 0.0
    %1388 = vmatprep.subr.mxu0 0.0
    %1389 = vmatpush1.msra.mxu0 0.0
    %1390 = vmatprep.subr.mxu0 0.0
    %1391 = vmatpush1.msra.mxu0 0.0
    %1392 = vmatprep.subr.mxu0 0.0
    %1393 = vmatpush1.msra.mxu0 0.0
    %1394 = vmatprep.subr.mxu0 0.0
    %1395 = vmatpush1.msra.mxu0 0.0
    %1396 = vmatprep.subr.mxu0 0.0
    %1397 = vmatpush1.msra.mxu0 %v1378
    %1398 = vmatprep.subr.mxu0 0.0
    %1399 = vmatpush1.msra.mxu0 %v1367
    %1400 = vmatprep.subr.mxu0 0.0
    %1401 = vmatpush1.msra.mxu0 %v1366
    %1402 = vmatprep.subr.mxu0 0.0
    %1403 = vmatpush1.msra.mxu0 %v1365
    %1404 = vmatprep.subr.mxu0 0.0
    %1405 = vmatpush1.msra.mxu0 %v1364
    %1406 = vmatprep.subr.mxu0 0.0
    %1407 = vmatpush1.msra.mxu0 %v1363
    %1408 = vmatprep.subr.mxu0 0.0
    %1409 = vmatpush1.msra.mxu0 %v1362
    %1410 = vmatprep.subr.mxu0 0.0
    %1411 = vmatpush1.msra.mxu0 %v1361
    %1412 = vmatprep.subr.mxu0 0.0
    %1413 = vmatpush2.msra.mxu0 0.0
    %1414 = vmatprep.subr.mxu0 0.0
    %1415 = vmatpush2.msra.mxu0 0.0
    %1416 = vmatprep.subr.mxu0 0.0
    %1417 = vmatpush2.msra.mxu0 0.0
    %1418 = vmatprep.subr.mxu0 0.0
    %1419 = vmatpush2.msra.mxu0 0.0
    %1420 = vmatprep.subr.mxu0 0.0
    %1421 = vmatpush2.msra.mxu0 0.0
    %1422 = vmatprep.subr.mxu0 0.0
    %1423 = vmatpush2.msra.mxu0 0.0
    %1424 = vmatprep.subr.mxu0 0.0
    %1425 = vmatpush2.msra.mxu0 0.0
    %1426 = vmatprep.subr.mxu0 0.0
    %1427 = vmatpush2.msra.mxu0 0.0
    %1428 = vmatprep.subr.mxu0 0.0
    %1429 = vmatpush2.msra.mxu0 0.0
    %1430 = vmatprep.subr.mxu0 0.0
    %1431 = vmatpush2.msra.mxu0 0.0
    %1432 = vmatprep.subr.mxu0 0.0
    %1433 = vmatpush2.msra.mxu0 0.0
    %1434 = vmatprep.subr.mxu0 0.0
    %1435 = vmatpush2.msra.mxu0 0.0
    %1436 = vmatprep.subr.mxu0 0.0
    %1437 = vmatpush2.msra.mxu0 0.0
    %1438 = vmatprep.subr.mxu0 0.0
    %1439 = vmatpush2.msra.mxu0 0.0
    %1440 = vmatprep.subr.mxu0 0.0
    %1441 = vmatpush2.msra.mxu0 0.0
    %1442 = vmatprep.subr.mxu0 0.0
    %1443 = vmatpush2.msra.mxu0 0.0
    %1444 = vmatprep.mubr.f32.mxu0 0.0
    %1445 = vmatmul.mubr.f32.gmra.mxu0 %v1371
    %v1446 = vpop.f32.mrf.mxu0
    %v1447 = vadd.f32 0.0, %v1446
    %v1448 = vpop.f32.mrf.mxu0
    %1449 = vmatprep.mubr.f32.mxu0 0.0
    %1450 = vmatmul.mubr.f32.gmra.mxu0 %v1374
    %v1451 = vpop.f32.mrf.mxu0
    %v1452 = vadd.f32 0.0, %v1451
    %v1453 = vpop.f32.mrf.mxu0
    %1454 = vdwg.mxu0
    %v1455 = vld [vmem:[#allocation29] sm:$0xff]
    %v1456 = vld [vmem:[#allocation29 + $0x8] sm:$0xff]
    %v1457 = vld [vmem:[#allocation29 + $0x10] sm:$0xff]
    %v1458 = vld [vmem:[#allocation29 + $0x18] sm:$0xff]
    %v1459 = vld [vmem:[#allocation30] sm:$0x1]
    %v1461 = vlaneseq
    %v1462 = vshrl.u32 %v1461, 7
    %v1463 = vsub.s32 0, %v1462
    %v1464 = vrot.slane %v1459, %v1463
    %v1467 = vsel %vm676, %v1447, 0
    %v1470 = vsel %vm676, %v1452, 0
    %1472 = vmatprep.subr.mxu0 0.0
    %1473 = vmatpush1.msra.mxu0 0.0
    %1474 = vmatprep.subr.mxu0 0.0
    %1475 = vmatpush1.msra.mxu0 0.0
    %1476 = vmatprep.subr.mxu0 0.0
    %1477 = vmatpush1.msra.mxu0 0.0
    %1478 = vmatprep.subr.mxu0 0.0
    %1479 = vmatpush1.msra.mxu0 0.0
    %1480 = vmatprep.subr.mxu0 0.0
    %1481 = vmatpush1.msra.mxu0 0.0
    %1482 = vmatprep.subr.mxu0 0.0
    %1483 = vmatpush1.msra.mxu0 0.0
    %1484 = vmatprep.subr.mxu0 0.0
    %1485 = vmatpush1.msra.mxu0 0.0
    %1486 = vmatprep.subr.mxu0 0.0
    %1487 = vmatpush1.msra.mxu0 0.0
    %1488 = vmatprep.subr.mxu0 0.0
    %1489 = vmatpush1.msra.mxu0 0.0
    %1490 = vmatprep.subr.mxu0 0.0
    %1491 = vmatpush1.msra.mxu0 0.0
    %1492 = vmatprep.subr.mxu0 0.0
    %1493 = vmatpush1.msra.mxu0 0.0
    %1494 = vmatprep.subr.mxu0 0.0
    %1495 = vmatpush1.msra.mxu0 0.0
    %1496 = vmatprep.subr.mxu0 0.0
    %1497 = vmatpush1.msra.mxu0 %v1458
    %1498 = vmatprep.subr.mxu0 0.0
    %1499 = vmatpush1.msra.mxu0 %v1457
    %1500 = vmatprep.subr.mxu0 0.0
    %1501 = vmatpush1.msra.mxu0 %v1456
    %1502 = vmatprep.subr.mxu0 0.0
    %1503 = vmatpush1.msra.mxu0 %v1455
    %1504 = vmatprep.subr.mxu0 0.0
    %1505 = vmatpush2.msra.mxu0 0.0
    %1506 = vmatprep.subr.mxu0 0.0
    %1507 = vmatpush2.msra.mxu0 0.0
    %1508 = vmatprep.subr.mxu0 0.0
    %1509 = vmatpush2.msra.mxu0 0.0
    %1510 = vmatprep.subr.mxu0 0.0
    %1511 = vmatpush2.msra.mxu0 0.0
    %1512 = vmatprep.subr.mxu0 0.0
    %1513 = vmatpush2.msra.mxu0 0.0
    %1514 = vmatprep.subr.mxu0 0.0
    %1515 = vmatpush2.msra.mxu0 0.0
    %1516 = vmatprep.subr.mxu0 0.0
    %1517 = vmatpush2.msra.mxu0 0.0
    %1518 = vmatprep.subr.mxu0 0.0
    %1519 = vmatpush2.msra.mxu0 0.0
    %1520 = vmatprep.subr.mxu0 0.0
    %1521 = vmatpush2.msra.mxu0 0.0
    %1522 = vmatprep.subr.mxu0 0.0
    %1523 = vmatpush2.msra.mxu0 0.0
    %1524 = vmatprep.subr.mxu0 0.0
    %1525 = vmatpush2.msra.mxu0 0.0
    %1526 = vmatprep.subr.mxu0 0.0
    %1527 = vmatpush2.msra.mxu0 0.0
    %1528 = vmatprep.subr.mxu0 0.0
    %1529 = vmatpush2.msra.mxu0 0.0
    %1530 = vmatprep.subr.mxu0 0.0
    %1531 = vmatpush2.msra.mxu0 0.0
    %1532 = vmatprep.subr.mxu0 0.0
    %1533 = vmatpush2.msra.mxu0 0.0
    %1534 = vmatprep.subr.mxu0 0.0
    %1535 = vmatpush2.msra.mxu0 0.0
    %1536 = vmatprep.mubr.f32.mxu0 0.0
    %1537 = vmatmul.mubr.f32.gmra.mxu0 %v1467
    %v1538 = vpop.f32.mrf.mxu0
    %v1539 = vadd.f32 %v1464, %v1538
    %v1540 = vpop.f32.mrf.mxu0
    %1541 = vmatprep.mubr.f32.mxu0 0.0
    %1542 = vmatmul.mubr.f32.gmra.mxu0 %v1470
    %v1543 = vpop.f32.mrf.mxu0
    %v1544 = vadd.f32 %v1464, %v1543
    %v1545 = vpop.f32.mrf.mxu0
    %1546 = vdwg.mxu0
    %v1549 = vunpack.c.l.s4 1966171168
    %v1550 = vunpack.c.0.s8 %v1549
    %v1551 = vlaneseq
    %v1552 = vshrl.u32 %v1551, 7
    %v1553 = vsub.s32 %v1550, %v1552
    %v1554 = vrot.slane %v1356, %v1553
    %v1555 = vcombine.high %v1554, %v1554
    %v1557 = vunpack.c.l.s4 1966171168
    %v1558 = vunpack.c.0.s8 %v1557
    %v1559 = vlaneseq
    %v1560 = vshrl.u32 %v1559, 7
    %v1561 = vsub.s32 %v1558, %v1560
    %v1562 = vrot.slane %v1554, %v1561
    %v1564 = vunpack.c.l.s4 1966171168
    %v1565 = vunpack.c.0.s8 %v1564
    %v1566 = vlaneseq
    %v1567 = vshrl.u32 %v1566, 7
    %v1568 = vsub.s32 %v1565, %v1567
    %v1569 = vrot.slane %v1555, %v1568
    %v1570 = vld [vmem:[#allocation8] sm:$0xff]
    %v1571 = vld [vmem:[#allocation8 + $0x8] sm:$0xff]
    %v1572 = vlaneseq
    %v1573 = vshrl.u32 %v1572, 7
    %v1574 = vsub.s32 0, %v1573
    %v1575 = vrot.slane %v1562, %v1574
    %v1576 = vlaneseq
    %v1577 = vshrl.u32 %v1576, 7
    %v1578 = vsub.s32 0, %v1577
    %v1579 = vrot.slane %v1569, %v1578
    %v1582 = vadd.f32 %v1575, %v1570
    %v1583 = vadd.f32 %v1579, %v1571
    %v1584 = vadd.f32 %v1582, %v1539
    %v1585 = vadd.f32 %v1583, %v1544
    %v1586 = vtanh.pop %v1584
    %v1587 = vtanh.pop %v1585
    %v1588 = vld [vmem:[#allocation35] sm:$0x1]
    %v1590 = vlaneseq
    %v1591 = vshrl.u32 %v1590, 7
    %v1592 = vsub.s32 0, %v1591
    %v1593 = vrot.slane %v1588, %v1592
    %v1595 = vmul.f32 %v1586, %v1593
    %v1596 = vmul.f32 %v1587, %v1593
    %v1597 = vsel %vm676, %v1595, 0.0
    %1598 = vadd.xlane.f32.xlu0 %v1597
    %v1599 = vpop.xlane.xlu0 %1598
    %v1600 = vsel %vm676, %v1596, 0.0
    %1601 = vadd.xlane.f32.xlu0 %v1600
    %v1602 = vpop.xlane.xlu0 %1601
    %v1603 = vxor.u32 %v1599, 2147483648
    %v1604 = vxor.u32 %v1602, 2147483648
    %v1605 = vmul.f32 %v1603, 1.442695
    %v1606 = vpow.pop %v1605
    %v1607 = vmul.f32 %v1604, 1.442695
    %v1608 = vpow.pop %v1607
    %v1609 = vadd.f32 %v1606, 1.0
    %v1610 = vadd.f32 %v1608, 1.0
    %v1611 = vrcp.pop %v1609
    %v1612 = vmul.f32 1.0, %v1611
    %v1613 = vrcp.pop %v1610
    %v1614 = vmul.f32 1.0, %v1613
    %v1617 = vlaneseq
    %v1618 = vand.u32 %v1617, 127
    %v1619 = vlaneseq
    %v1620 = vshrl.u32 %v1619, 7
    %v1621 = vsub.s32 %v1618, %v1620
    %v1622 = vrot.slane %v1612, %v1621
    %v1623 = vlaneseq
    %v1624 = vshrl.u32 %v1623, 7
    %v1625 = vsub.s32 %v1618, %v1624
    %v1626 = vrot.slane %v1614, %v1625
    %vm1627 = vcmask 1041409
    %v1628 = vsel %vm1627, %v1626, %v1622
    %vm1630 = vcmask 58368
    %v1631 = vsel %vm1630, %v1628, 0.0
    %1632 = vadd.xlane.f32.xlu0 %v1631
    %v1633 = vpop.xlane.xlu0 %1632
    %v1634 = vrcp.pop %v1633
    %v1636 = vlaneseq
    %v1637 = vshrl.u32 %v1636, 7
    %v1638 = vsub.s32 0, %v1637
    %v1639 = vrot.slane %v1634, %v1638
    %v1640 = vlaneseq
    %v1641 = vshrl.u32 %v1640, 7
    %v1642 = vsub.s32 1, %v1641
    %v1643 = vrot.slane %v1634, %v1642
    %v1646 = vmul.f32 %v1612, %v1639
    %v1647 = vmul.f32 %v1614, %v1643
    %1650 = vset.pattern.permute.xlu0 0
    %1651 = vperm.xlu0 %1650, %v1646
    %v1652 = vpop.permute.xlu0 %1651
    %1653 = vset.pattern.permute.xlu0 0
    %1654 = vperm.xlu0 %1653, %v1647
    %v1655 = vpop.permute.xlu0 %1654
    %v1656 = vlaneseq
    %v1657 = vshrl.u32 %v1656, 7
    %v1658 = vsub.s32 %v1618, %v1657
    %v1659 = vrot.slane %v1652, %v1658
    %v1660 = vlaneseq
    %v1661 = vshrl.u32 %v1660, 7
    %v1662 = vsub.s32 %v1618, %v1661
    %v1663 = vrot.slane %v1655, %v1662
    %v1664 = vsel %vm1627, %v1663, %v1659
    %1666 = vst.msk [vmem:[%s87] sm:$0x3] %vm1630, %v1664
    %v1667 = vld [vmem:[%s13] sm:$0x3]
    %v1668 = vadd.f32 %v1667, %v1664
    %1669 = vst.msk [vmem:[#allocation51] sm:$0x3] %vm1630, %v1668
    %v1670 = vld [vmem:[#allocation9] sm:$0xff]
    %v1671 = vld [vmem:[#allocation9 + $0x8] sm:$0xff]
    %v1674 = vmul.f32 %v1652, %v1670
    %v1675 = vmul.f32 %v1655, %v1671
    %v1676 = vsel %vm676, %v1674, 0.0
    %v1677 = vrot.slane %v1676, 4
    %v1678 = vadd.f32 %v1676, %v1677
    %v1679 = vrot.slane %v1678, 2
    %v1680 = vadd.f32 %v1678, %v1679
    %v1681 = vrot.slane %v1680, 1
    %v1682 = vadd.f32 %v1680, %v1681
    %v1683 = vsel %vm676, %v1675, 0.0
    %v1684 = vrot.slane %v1683, 4
    %v1685 = vadd.f32 %v1683, %v1684
    %v1686 = vrot.slane %v1685, 2
    %v1687 = vadd.f32 %v1685, %v1686
    %v1688 = vrot.slane %v1687, 1
    %v1689 = vadd.f32 %v1687, %v1688
    %v1692 = vsel %vm1627, %v1689, %v1682
    %1694 = vst.msk [vmem:[#allocation53] sm:$0x3] %vm1273, %v1692
    %v1695 = vld [vmem:[#allocation36] sm:$0xff]
    %v1696 = vld [vmem:[#allocation36 + $0x8] sm:$0xff]
    %v1697 = vld [vmem:[#allocation36 + $0x10] sm:$0xff]
    %v1698 = vld [vmem:[#allocation36 + $0x18] sm:$0xff]
    %v1699 = vld [vmem:[#allocation38] sm:$0xff]
    %v1700 = vld [vmem:[#allocation38 + $0x8] sm:$0xff]
    %v1701 = vld [vmem:[#allocation38 + $0x10] sm:$0xff]
    %v1702 = vld [vmem:[#allocation38 + $0x18] sm:$0xff]
    %1703 = vmatprep.subr.mxu0 0.0
    %1704 = vmatpush1.msra.mxu0 0.0
    %1705 = vmatprep.subr.mxu0 0.0
    %1706 = vmatpush1.msra.mxu0 0.0
    %1707 = vmatprep.subr.mxu0 0.0
    %1708 = vmatpush1.msra.mxu0 0.0
    %1709 = vmatprep.subr.mxu0 0.0
    %1710 = vmatpush1.msra.mxu0 0.0
    %1711 = vmatprep.subr.mxu0 0.0
    %1712 = vmatpush1.msra.mxu0 0.0
    %1713 = vmatprep.subr.mxu0 0.0
    %1714 = vmatpush1.msra.mxu0 0.0
    %1715 = vmatprep.subr.mxu0 0.0
    %1716 = vmatpush1.msra.mxu0 0.0
    %1717 = vmatprep.subr.mxu0 0.0
    %1718 = vmatpush1.msra.mxu0 0.0
    %1719 = vmatprep.subr.mxu0 0.0
    %1720 = vmatpush1.msra.mxu0 0.0
    %1721 = vmatprep.subr.mxu0 0.0
    %1722 = vmatpush1.msra.mxu0 0.0
    %1723 = vmatprep.subr.mxu0 0.0
    %1724 = vmatpush1.msra.mxu0 0.0
    %1725 = vmatprep.subr.mxu0 0.0
    %1726 = vmatpush1.msra.mxu0 0.0
    %1727 = vmatprep.subr.mxu0 0.0
    %1728 = vmatpush1.msra.mxu0 %v1702
    %1729 = vmatprep.subr.mxu0 0.0
    %1730 = vmatpush1.msra.mxu0 %v1701
    %1731 = vmatprep.subr.mxu0 0.0
    %1732 = vmatpush1.msra.mxu0 %v1700
    %1733 = vmatprep.subr.mxu0 0.0
    %1734 = vmatpush1.msra.mxu0 %v1699
    %1735 = vmatprep.subr.mxu0 0.0
    %1736 = vmatpush2.msra.mxu0 0.0
    %1737 = vmatprep.subr.mxu0 0.0
    %1738 = vmatpush2.msra.mxu0 0.0
    %1739 = vmatprep.subr.mxu0 0.0
    %1740 = vmatpush2.msra.mxu0 0.0
    %1741 = vmatprep.subr.mxu0 0.0
    %1742 = vmatpush2.msra.mxu0 0.0
    %1743 = vmatprep.subr.mxu0 0.0
    %1744 = vmatpush2.msra.mxu0 0.0
    %1745 = vmatprep.subr.mxu0 0.0
    %1746 = vmatpush2.msra.mxu0 0.0
    %1747 = vmatprep.subr.mxu0 0.0
    %1748 = vmatpush2.msra.mxu0 0.0
    %1749 = vmatprep.subr.mxu0 0.0
    %1750 = vmatpush2.msra.mxu0 0.0
    %1751 = vmatprep.subr.mxu0 0.0
    %1752 = vmatpush2.msra.mxu0 0.0
    %1753 = vmatprep.subr.mxu0 0.0
    %1754 = vmatpush2.msra.mxu0 0.0
    %1755 = vmatprep.subr.mxu0 0.0
    %1756 = vmatpush2.msra.mxu0 0.0
    %1757 = vmatprep.subr.mxu0 0.0
    %1758 = vmatpush2.msra.mxu0 0.0
    %1759 = vmatprep.subr.mxu0 0.0
    %1760 = vmatpush2.msra.mxu0 0.0
    %1761 = vmatprep.subr.mxu0 0.0
    %1762 = vmatpush2.msra.mxu0 0.0
    %1763 = vmatprep.subr.mxu0 0.0
    %1764 = vmatpush2.msra.mxu0 0.0
    %1765 = vmatprep.subr.mxu0 0.0
    %1766 = vmatpush2.msra.mxu0 0.0
    %1767 = vmatprep.mubr.f32.mxu0 0.0
    %1768 = vmatmul.mubr.f32.gmra.mxu0 %v1287
    %v1769 = vpop.f32.mrf.mxu0
    %v1770 = vadd.f32 0.0, %v1769
    %v1771 = vpop.f32.mrf.mxu0
    %1772 = vdwg.mxu0
    %v1773 = vsel %vm676, %v1692, 0
    %1775 = vmatprep.subr.mxu0 0.0
    %1776 = vmatpush1.msra.mxu0 0.0
    %1777 = vmatprep.subr.mxu0 0.0
    %1778 = vmatpush1.msra.mxu0 0.0
    %1779 = vmatprep.subr.mxu0 0.0
    %1780 = vmatpush1.msra.mxu0 0.0
    %1781 = vmatprep.subr.mxu0 0.0
    %1782 = vmatpush1.msra.mxu0 0.0
    %1783 = vmatprep.subr.mxu0 0.0
    %1784 = vmatpush1.msra.mxu0 0.0
    %1785 = vmatprep.subr.mxu0 0.0
    %1786 = vmatpush1.msra.mxu0 0.0
    %1787 = vmatprep.subr.mxu0 0.0
    %1788 = vmatpush1.msra.mxu0 0.0
    %1789 = vmatprep.subr.mxu0 0.0
    %1790 = vmatpush1.msra.mxu0 0.0
    %1791 = vmatprep.subr.mxu0 0.0
    %1792 = vmatpush1.msra.mxu0 0.0
    %1793 = vmatprep.subr.mxu0 0.0
    %1794 = vmatpush1.msra.mxu0 0.0
    %1795 = vmatprep.subr.mxu0 0.0
    %1796 = vmatpush1.msra.mxu0 0.0
    %1797 = vmatprep.subr.mxu0 0.0
    %1798 = vmatpush1.msra.mxu0 0.0
    %1799 = vmatprep.subr.mxu0 0.0
    %1800 = vmatpush1.msra.mxu0 %v1698
    %1801 = vmatprep.subr.mxu0 0.0
    %1802 = vmatpush1.msra.mxu0 %v1697
    %1803 = vmatprep.subr.mxu0 0.0
    %1804 = vmatpush1.msra.mxu0 %v1696
    %1805 = vmatprep.subr.mxu0 0.0
    %1806 = vmatpush1.msra.mxu0 %v1695
    %1807 = vmatprep.subr.mxu0 0.0
    %1808 = vmatpush2.msra.mxu0 0.0
    %1809 = vmatprep.subr.mxu0 0.0
    %1810 = vmatpush2.msra.mxu0 0.0
    %1811 = vmatprep.subr.mxu0 0.0
    %1812 = vmatpush2.msra.mxu0 0.0
    %1813 = vmatprep.subr.mxu0 0.0
    %1814 = vmatpush2.msra.mxu0 0.0
    %1815 = vmatprep.subr.mxu0 0.0
    %1816 = vmatpush2.msra.mxu0 0.0
    %1817 = vmatprep.subr.mxu0 0.0
    %1818 = vmatpush2.msra.mxu0 0.0
    %1819 = vmatprep.subr.mxu0 0.0
    %1820 = vmatpush2.msra.mxu0 0.0
    %1821 = vmatprep.subr.mxu0 0.0
    %1822 = vmatpush2.msra.mxu0 0.0
    %1823 = vmatprep.subr.mxu0 0.0
    %1824 = vmatpush2.msra.mxu0 0.0
    %1825 = vmatprep.subr.mxu0 0.0
    %1826 = vmatpush2.msra.mxu0 0.0
    %1827 = vmatprep.subr.mxu0 0.0
    %1828 = vmatpush2.msra.mxu0 0.0
    %1829 = vmatprep.subr.mxu0 0.0
    %1830 = vmatpush2.msra.mxu0 0.0
    %1831 = vmatprep.subr.mxu0 0.0
    %1832 = vmatpush2.msra.mxu0 0.0
    %1833 = vmatprep.subr.mxu0 0.0
    %1834 = vmatpush2.msra.mxu0 0.0
    %1835 = vmatprep.subr.mxu0 0.0
    %1836 = vmatpush2.msra.mxu0 0.0
    %1837 = vmatprep.subr.mxu0 0.0
    %1838 = vmatpush2.msra.mxu0 0.0
    %1839 = vmatprep.mubr.f32.mxu0 0.0
    %1840 = vmatmul.mubr.f32.gmra.mxu0 %v1773
    %v1841 = vpop.f32.mrf.mxu0
    %v1842 = vadd.f32 %v1770, %v1841
    %v1843 = vpop.f32.mrf.mxu0
    %1844 = vdwg.mxu0
    %v1845 = vld [vmem:[#allocation39] sm:$0x1]
    %v1847 = vlaneseq
    %v1848 = vshrl.u32 %v1847, 7
    %v1849 = vsub.s32 0, %v1848
    %v1850 = vrot.slane %v1845, %v1849
    %v1852 = vadd.f32 %v1842, %v1850
    %v1853 = vld [vmem:[#allocation11] sm:$0x3]
    %v1854 = vld [vmem:[%s17] sm:$0x3]
    %v1855 = vld [vmem:[%s63] sm:$0xff]
    %v1856 = vld [vmem:[%s63 + $0x8] sm:$0xff]
    %v1857 = vld [vmem:[%s63 + $0x10] sm:$0xff]
    %v1858 = vld [vmem:[%s63 + $0x18] sm:$0xff]
    %v1859 = vld [vmem:[%s63 + $0x20] sm:$0xff]
    %v1860 = vld [vmem:[%s63 + $0x28] sm:$0xff]
    %v1861 = vld [vmem:[%s63 + $0x30] sm:$0xff]
    %v1862 = vld [vmem:[%s63 + $0x38] sm:$0xff]
    %v1863 = vld [vmem:[%s63 + $0x40] sm:$0xff]
    %v1864 = vld [vmem:[%s63 + $0x48] sm:$0xff]
    %v1865 = vld [vmem:[%s63 + $0x50] sm:$0xff]
    %v1866 = vld [vmem:[%s63 + $0x58] sm:$0xff]
    %v1867 = vld [vmem:[%s63 + $0x60] sm:$0xff]
    %v1868 = vld [vmem:[%s63 + $0x68] sm:$0xff]
    %v1869 = vld [vmem:[%s63 + $0x70] sm:$0xff]
    %v1870 = vld [vmem:[%s63 + $0x78] sm:$0xff]
    %v1871 = vld [vmem:[%s65] sm:$0xff]
    %v1872 = vld [vmem:[%s65 + $0x8] sm:$0xff]
    %v1873 = vld [vmem:[%s65 + $0x10] sm:$0xff]
    %v1874 = vld [vmem:[%s65 + $0x18] sm:$0xff]
    %v1875 = vld [vmem:[%s65 + $0x20] sm:$0xff]
    %v1876 = vld [vmem:[%s65 + $0x28] sm:$0xff]
    %v1877 = vld [vmem:[%s65 + $0x30] sm:$0xff]
    %v1878 = vld [vmem:[%s65 + $0x38] sm:$0xff]
    %v1879 = vld [vmem:[%s65 + $0x40] sm:$0xff]
    %v1880 = vld [vmem:[%s65 + $0x48] sm:$0xff]
    %v1881 = vld [vmem:[%s65 + $0x50] sm:$0xff]
    %v1882 = vld [vmem:[%s65 + $0x58] sm:$0xff]
    %v1883 = vld [vmem:[%s65 + $0x60] sm:$0xff]
    %v1884 = vld [vmem:[%s65 + $0x68] sm:$0xff]
    %v1885 = vld [vmem:[%s65 + $0x70] sm:$0xff]
    %v1886 = vld [vmem:[%s65 + $0x78] sm:$0xff]
    %v1887 = vld [vmem:[#allocation41] sm:$0xf]
    %v1889 = vsel %vm676, %v1853, 0
    %1891 = vmatprep.subr.mxu0 0.0
    %1892 = vmatpush1.msra.mxu0 0.0
    %1893 = vmatprep.subr.mxu0 0.0
    %1894 = vmatpush1.msra.mxu0 0.0
    %1895 = vmatprep.subr.mxu0 0.0
    %1896 = vmatpush1.msra.mxu0 0.0
    %1897 = vmatprep.subr.mxu0 0.0
    %1898 = vmatpush1.msra.mxu0 0.0
    %1899 = vmatprep.subr.mxu0 0.0
    %1900 = vmatpush1.msra.mxu0 0.0
    %1901 = vmatprep.subr.mxu0 0.0
    %1902 = vmatpush1.msra.mxu0 0.0
    %1903 = vmatprep.subr.mxu0 0.0
    %1904 = vmatpush1.msra.mxu0 0.0
    %1905 = vmatprep.subr.mxu0 0.0
    %1906 = vmatpush1.msra.mxu0 0.0
    %1907 = vmatprep.subr.mxu0 0.0
    %1908 = vmatpush1.msra.mxu0 0.0
    %1909 = vmatprep.subr.mxu0 0.0
    %1910 = vmatpush1.msra.mxu0 0.0
    %1911 = vmatprep.subr.mxu0 0.0
    %1912 = vmatpush1.msra.mxu0 0.0
    %1913 = vmatprep.subr.mxu0 0.0
    %1914 = vmatpush1.msra.mxu0 0.0
    %1915 = vmatprep.subr.mxu0 %v1884
    %1916 = vmatpush1.msra.mxu0 %v1883
    %1917 = vmatprep.subr.mxu0 %v1880
    %1918 = vmatpush1.msra.mxu0 %v1879
    %1919 = vmatprep.subr.mxu0 %v1876
    %1920 = vmatpush1.msra.mxu0 %v1875
    %1921 = vmatprep.subr.mxu0 %v1872
    %1922 = vmatpush1.msra.mxu0 %v1871
    %1923 = vmatprep.subr.mxu0 0.0
    %1924 = vmatpush2.msra.mxu0 0.0
    %1925 = vmatprep.subr.mxu0 0.0
    %1926 = vmatpush2.msra.mxu0 0.0
    %1927 = vmatprep.subr.mxu0 0.0
    %1928 = vmatpush2.msra.mxu0 0.0
    %1929 = vmatprep.subr.mxu0 0.0
    %1930 = vmatpush2.msra.mxu0 0.0
    %1931 = vmatprep.subr.mxu0 0.0
    %1932 = vmatpush2.msra.mxu0 0.0
    %1933 = vmatprep.subr.mxu0 0.0
    %1934 = vmatpush2.msra.mxu0 0.0
    %1935 = vmatprep.subr.mxu0 0.0
    %1936 = vmatpush2.msra.mxu0 0.0
    %1937 = vmatprep.subr.mxu0 0.0
    %1938 = vmatpush2.msra.mxu0 0.0
    %1939 = vmatprep.subr.mxu0 0.0
    %1940 = vmatpush2.msra.mxu0 0.0
    %1941 = vmatprep.subr.mxu0 0.0
    %1942 = vmatpush2.msra.mxu0 0.0
    %1943 = vmatprep.subr.mxu0 0.0
    %1944 = vmatpush2.msra.mxu0 0.0
    %1945 = vmatprep.subr.mxu0 0.0
    %1946 = vmatpush2.msra.mxu0 0.0
    %1947 = vmatprep.subr.mxu0 0.0
    %1948 = vmatpush2.msra.mxu0 0.0
    %1949 = vmatprep.subr.mxu0 0.0
    %1950 = vmatpush2.msra.mxu0 0.0
    %1951 = vmatprep.subr.mxu0 0.0
    %1952 = vmatpush2.msra.mxu0 0.0
    %1953 = vmatprep.subr.mxu0 0.0
    %1954 = vmatpush2.msra.mxu0 0.0
    %1955 = vmatprep.mubr.f32.mxu0 0.0
    %1956 = vmatmul.mubr.f32.gmra.mxu0 %v1889
    %v1957 = vpop.f32.mrf.mxu0
    %v1958 = vadd.f32 0.0, %v1957
    %v1959 = vpop.f32.mrf.mxu0
    %v1960 = vadd.f32 0.0, %v1959
    %1961 = vdwg.mxu0
    %1962 = vmatprep.subr.mxu0 0.0
    %1963 = vmatpush1.msra.mxu0 0.0
    %1964 = vmatprep.subr.mxu0 0.0
    %1965 = vmatpush1.msra.mxu0 0.0
    %1966 = vmatprep.subr.mxu0 0.0
    %1967 = vmatpush1.msra.mxu0 0.0
    %1968 = vmatprep.subr.mxu0 0.0
    %1969 = vmatpush1.msra.mxu0 0.0
    %1970 = vmatprep.subr.mxu0 0.0
    %1971 = vmatpush1.msra.mxu0 0.0
    %1972 = vmatprep.subr.mxu0 0.0
    %1973 = vmatpush1.msra.mxu0 0.0
    %1974 = vmatprep.subr.mxu0 0.0
    %1975 = vmatpush1.msra.mxu0 0.0
    %1976 = vmatprep.subr.mxu0 0.0
    %1977 = vmatpush1.msra.mxu0 0.0
    %1978 = vmatprep.subr.mxu0 0.0
    %1979 = vmatpush1.msra.mxu0 0.0
    %1980 = vmatprep.subr.mxu0 0.0
    %1981 = vmatpush1.msra.mxu0 0.0
    %1982 = vmatprep.subr.mxu0 0.0
    %1983 = vmatpush1.msra.mxu0 0.0
    %1984 = vmatprep.subr.mxu0 0.0
    %1985 = vmatpush1.msra.mxu0 0.0
    %1986 = vmatprep.subr.mxu0 %v1886
    %1987 = vmatpush1.msra.mxu0 %v1885
    %1988 = vmatprep.subr.mxu0 %v1882
    %1989 = vmatpush1.msra.mxu0 %v1881
    %1990 = vmatprep.subr.mxu0 %v1878
    %1991 = vmatpush1.msra.mxu0 %v1877
    %1992 = vmatprep.subr.mxu0 %v1874
    %1993 = vmatpush1.msra.mxu0 %v1873
    %1994 = vmatprep.subr.mxu0 0.0
    %1995 = vmatpush2.msra.mxu0 0.0
    %1996 = vmatprep.subr.mxu0 0.0
    %1997 = vmatpush2.msra.mxu0 0.0
    %1998 = vmatprep.subr.mxu0 0.0
    %1999 = vmatpush2.msra.mxu0 0.0
    %2000 = vmatprep.subr.mxu0 0.0
    %2001 = vmatpush2.msra.mxu0 0.0
    %2002 = vmatprep.subr.mxu0 0.0
    %2003 = vmatpush2.msra.mxu0 0.0
    %2004 = vmatprep.subr.mxu0 0.0
    %2005 = vmatpush2.msra.mxu0 0.0
    %2006 = vmatprep.subr.mxu0 0.0
    %2007 = vmatpush2.msra.mxu0 0.0
    %2008 = vmatprep.subr.mxu0 0.0
    %2009 = vmatpush2.msra.mxu0 0.0
    %2010 = vmatprep.subr.mxu0 0.0
    %2011 = vmatpush2.msra.mxu0 0.0
    %2012 = vmatprep.subr.mxu0 0.0
    %2013 = vmatpush2.msra.mxu0 0.0
    %2014 = vmatprep.subr.mxu0 0.0
    %2015 = vmatpush2.msra.mxu0 0.0
    %2016 = vmatprep.subr.mxu0 0.0
    %2017 = vmatpush2.msra.mxu0 0.0
    %2018 = vmatprep.subr.mxu0 0.0
    %2019 = vmatpush2.msra.mxu0 0.0
    %2020 = vmatprep.subr.mxu0 0.0
    %2021 = vmatpush2.msra.mxu0 0.0
    %2022 = vmatprep.subr.mxu0 0.0
    %2023 = vmatpush2.msra.mxu0 0.0
    %2024 = vmatprep.subr.mxu0 0.0
    %2025 = vmatpush2.msra.mxu0 0.0
    %2026 = vmatprep.mubr.f32.mxu0 0.0
    %2027 = vmatmul.mubr.f32.gmra.mxu0 %v1889
    %v2028 = vpop.f32.mrf.mxu0
    %v2029 = vadd.f32 0.0, %v2028
    %v2030 = vpop.f32.mrf.mxu0
    %v2031 = vadd.f32 0.0, %v2030
    %2032 = vdwg.mxu0
    %v2034 = vsel %vm676, %v1852, 0
    %2036 = vmatprep.subr.mxu0 0.0
    %2037 = vmatpush1.msra.mxu0 0.0
    %2038 = vmatprep.subr.mxu0 0.0
    %2039 = vmatpush1.msra.mxu0 0.0
    %2040 = vmatprep.subr.mxu0 0.0
    %2041 = vmatpush1.msra.mxu0 0.0
    %2042 = vmatprep.subr.mxu0 0.0
    %2043 = vmatpush1.msra.mxu0 0.0
    %2044 = vmatprep.subr.mxu0 0.0
    %2045 = vmatpush1.msra.mxu0 0.0
    %2046 = vmatprep.subr.mxu0 0.0
    %2047 = vmatpush1.msra.mxu0 0.0
    %2048 = vmatprep.subr.mxu0 0.0
    %2049 = vmatpush1.msra.mxu0 0.0
    %2050 = vmatprep.subr.mxu0 0.0
    %2051 = vmatpush1.msra.mxu0 0.0
    %2052 = vmatprep.subr.mxu0 0.0
    %2053 = vmatpush1.msra.mxu0 0.0
    %2054 = vmatprep.subr.mxu0 0.0
    %2055 = vmatpush1.msra.mxu0 0.0
    %2056 = vmatprep.subr.mxu0 0.0
    %2057 = vmatpush1.msra.mxu0 0.0
    %2058 = vmatprep.subr.mxu0 0.0
    %2059 = vmatpush1.msra.mxu0 0.0
    %2060 = vmatprep.subr.mxu0 %v1868
    %2061 = vmatpush1.msra.mxu0 %v1867
    %2062 = vmatprep.subr.mxu0 %v1864
    %2063 = vmatpush1.msra.mxu0 %v1863
    %2064 = vmatprep.subr.mxu0 %v1860
    %2065 = vmatpush1.msra.mxu0 %v1859
    %2066 = vmatprep.subr.mxu0 %v1856
    %2067 = vmatpush1.msra.mxu0 %v1855
    %2068 = vmatprep.subr.mxu0 0.0
    %2069 = vmatpush2.msra.mxu0 0.0
    %2070 = vmatprep.subr.mxu0 0.0
    %2071 = vmatpush2.msra.mxu0 0.0
    %2072 = vmatprep.subr.mxu0 0.0
    %2073 = vmatpush2.msra.mxu0 0.0
    %2074 = vmatprep.subr.mxu0 0.0
    %2075 = vmatpush2.msra.mxu0 0.0
    %2076 = vmatprep.subr.mxu0 0.0
    %2077 = vmatpush2.msra.mxu0 0.0
    %2078 = vmatprep.subr.mxu0 0.0
    %2079 = vmatpush2.msra.mxu0 0.0
    %2080 = vmatprep.subr.mxu0 0.0
    %2081 = vmatpush2.msra.mxu0 0.0
    %2082 = vmatprep.subr.mxu0 0.0
    %2083 = vmatpush2.msra.mxu0 0.0
    %2084 = vmatprep.subr.mxu0 0.0
    %2085 = vmatpush2.msra.mxu0 0.0
    %2086 = vmatprep.subr.mxu0 0.0
    %2087 = vmatpush2.msra.mxu0 0.0
    %2088 = vmatprep.subr.mxu0 0.0
    %2089 = vmatpush2.msra.mxu0 0.0
    %2090 = vmatprep.subr.mxu0 0.0
    %2091 = vmatpush2.msra.mxu0 0.0
    %2092 = vmatprep.subr.mxu0 0.0
    %2093 = vmatpush2.msra.mxu0 0.0
    %2094 = vmatprep.subr.mxu0 0.0
    %2095 = vmatpush2.msra.mxu0 0.0
    %2096 = vmatprep.subr.mxu0 0.0
    %2097 = vmatpush2.msra.mxu0 0.0
    %2098 = vmatprep.subr.mxu0 0.0
    %2099 = vmatpush2.msra.mxu0 0.0
    %2100 = vmatprep.mubr.f32.mxu0 0.0
    %2101 = vmatmul.mubr.f32.gmra.mxu0 %v2034
    %v2102 = vpop.f32.mrf.mxu0
    %v2103 = vadd.f32 %v1958, %v2102
    %v2104 = vpop.f32.mrf.mxu0
    %v2105 = vadd.f32 %v1960, %v2104
    %2106 = vdwg.mxu0
    %2107 = vmatprep.subr.mxu0 0.0
    %2108 = vmatpush1.msra.mxu0 0.0
    %2109 = vmatprep.subr.mxu0 0.0
    %2110 = vmatpush1.msra.mxu0 0.0
    %2111 = vmatprep.subr.mxu0 0.0
    %2112 = vmatpush1.msra.mxu0 0.0
    %2113 = vmatprep.subr.mxu0 0.0
    %2114 = vmatpush1.msra.mxu0 0.0
    %2115 = vmatprep.subr.mxu0 0.0
    %2116 = vmatpush1.msra.mxu0 0.0
    %2117 = vmatprep.subr.mxu0 0.0
    %2118 = vmatpush1.msra.mxu0 0.0
    %2119 = vmatprep.subr.mxu0 0.0
    %2120 = vmatpush1.msra.mxu0 0.0
    %2121 = vmatprep.subr.mxu0 0.0
    %2122 = vmatpush1.msra.mxu0 0.0
    %2123 = vmatprep.subr.mxu0 0.0
    %2124 = vmatpush1.msra.mxu0 0.0
    %2125 = vmatprep.subr.mxu0 0.0
    %2126 = vmatpush1.msra.mxu0 0.0
    %2127 = vmatprep.subr.mxu0 0.0
    %2128 = vmatpush1.msra.mxu0 0.0
    %2129 = vmatprep.subr.mxu0 0.0
    %2130 = vmatpush1.msra.mxu0 0.0
    %2131 = vmatprep.subr.mxu0 %v1870
    %2132 = vmatpush1.msra.mxu0 %v1869
    %2133 = vmatprep.subr.mxu0 %v1866
    %2134 = vmatpush1.msra.mxu0 %v1865
    %2135 = vmatprep.subr.mxu0 %v1862
    %2136 = vmatpush1.msra.mxu0 %v1861
    %2137 = vmatprep.subr.mxu0 %v1858
    %2138 = vmatpush1.msra.mxu0 %v1857
    %2139 = vmatprep.subr.mxu0 0.0
    %2140 = vmatpush2.msra.mxu0 0.0
    %2141 = vmatprep.subr.mxu0 0.0
    %2142 = vmatpush2.msra.mxu0 0.0
    %2143 = vmatprep.subr.mxu0 0.0
    %2144 = vmatpush2.msra.mxu0 0.0
    %2145 = vmatprep.subr.mxu0 0.0
    %2146 = vmatpush2.msra.mxu0 0.0
    %2147 = vmatprep.subr.mxu0 0.0
    %2148 = vmatpush2.msra.mxu0 0.0
    %2149 = vmatprep.subr.mxu0 0.0
    %2150 = vmatpush2.msra.mxu0 0.0
    %2151 = vmatprep.subr.mxu0 0.0
    %2152 = vmatpush2.msra.mxu0 0.0
    %2153 = vmatprep.subr.mxu0 0.0
    %2154 = vmatpush2.msra.mxu0 0.0
    %2155 = vmatprep.subr.mxu0 0.0
    %2156 = vmatpush2.msra.mxu0 0.0
    %2157 = vmatprep.subr.mxu0 0.0
    %2158 = vmatpush2.msra.mxu0 0.0
    %2159 = vmatprep.subr.mxu0 0.0
    %2160 = vmatpush2.msra.mxu0 0.0
    %2161 = vmatprep.subr.mxu0 0.0
    %2162 = vmatpush2.msra.mxu0 0.0
    %2163 = vmatprep.subr.mxu0 0.0
    %2164 = vmatpush2.msra.mxu0 0.0
    %2165 = vmatprep.subr.mxu0 0.0
    %2166 = vmatpush2.msra.mxu0 0.0
    %2167 = vmatprep.subr.mxu0 0.0
    %2168 = vmatpush2.msra.mxu0 0.0
    %2169 = vmatprep.subr.mxu0 0.0
    %2170 = vmatpush2.msra.mxu0 0.0
    %2171 = vmatprep.mubr.f32.mxu0 0.0
    %2172 = vmatmul.mubr.f32.gmra.mxu0 %v2034
    %v2173 = vpop.f32.mrf.mxu0
    %v2174 = vadd.f32 %v2029, %v2173
    %v2175 = vpop.f32.mrf.mxu0
    %v2176 = vadd.f32 %v2031, %v2175
    %2177 = vdwg.mxu0
    %v2179 = vlaneseq
    %v2180 = vshrl.u32 %v2179, 7
    %v2181 = vsub.s32 0, %v2180
    %v2182 = vrot.slane %v1887, %v2181
    %v2183 = vlaneseq
    %v2184 = vshrl.u32 %v2183, 7
    %v2185 = vsub.s32 1, %v2184
    %v2186 = vrot.slane %v1887, %v2185
    %v2187 = vlaneseq
    %v2188 = vshrl.u32 %v2187, 7
    %v2189 = vsub.s32 2, %v2188
    %v2190 = vrot.slane %v1887, %v2189
    %v2191 = vlaneseq
    %v2192 = vshrl.u32 %v2191, 7
    %v2193 = vsub.s32 3, %v2192
    %v2194 = vrot.slane %v1887, %v2193
    %v2199 = vadd.f32 %v2103, %v2182
    %v2200 = vadd.f32 %v2105, %v2186
    %v2201 = vadd.f32 %v2174, %v2190
    %v2202 = vadd.f32 %v2176, %v2194
    %v2203 = vxor.u32 %v2199, 2147483648
    %v2204 = vmul.f32 %v2203, 1.442695
    %v2205 = vpow.pop %v2204
    %v2206 = vadd.f32 %v2205, 1.0
    %v2207 = vrcp.pop %v2206
    %v2208 = vmul.f32 1.0, %v2207
    %v2209 = vxor.u32 %v2200, 2147483648
    %v2210 = vmul.f32 %v2209, 1.442695
    %v2211 = vpow.pop %v2210
    %v2212 = vadd.f32 %v2211, 1.0
    %v2213 = vrcp.pop %v2212
    %v2214 = vmul.f32 1.0, %v2213
    %v2215 = vtanh.pop %v2201
    %v2216 = vxor.u32 %v2202, 2147483648
    %v2217 = vmul.f32 %v2216, 1.442695
    %v2218 = vpow.pop %v2217
    %v2219 = vadd.f32 %v2218, 1.0
    %v2220 = vrcp.pop %v2219
    %v2221 = vmul.f32 1.0, %v2220
    %v2222 = vmul.f32 %v2214, %v1854
    %v2223 = vmul.f32 %v2208, %v2215
    %v2224 = vadd.f32 %v2222, %v2223
    %v2225 = vtanh.pop %v2224
    %v2226 = vmul.f32 %v2221, %v2225
    %v2227 = vadd.f32 %v1852, %v2226
    %v2228 = vld [vmem:[#allocation12] sm:$0x3]
    %v2229 = vld [vmem:[%s21] sm:$0x3]
    %v2230 = vld [vmem:[#allocation42] sm:$0xff]
    %v2231 = vld [vmem:[#allocation42 + $0x8] sm:$0xff]
    %v2232 = vld [vmem:[#allocation42 + $0x10] sm:$0xff]
    %v2233 = vld [vmem:[#allocation42 + $0x18] sm:$0xff]
    %v2234 = vld [vmem:[#allocation42 + $0x20] sm:$0xff]
    %v2235 = vld [vmem:[#allocation42 + $0x28] sm:$0xff]
    %v2236 = vld [vmem:[#allocation42 + $0x30] sm:$0xff]
    %v2237 = vld [vmem:[#allocation42 + $0x38] sm:$0xff]
    %v2238 = vld [vmem:[#allocation42 + $0x40] sm:$0xff]
    %v2239 = vld [vmem:[#allocation42 + $0x48] sm:$0xff]
    %v2240 = vld [vmem:[#allocation42 + $0x50] sm:$0xff]
    %v2241 = vld [vmem:[#allocation42 + $0x58] sm:$0xff]
    %v2242 = vld [vmem:[#allocation42 + $0x60] sm:$0xff]
    %v2243 = vld [vmem:[#allocation42 + $0x68] sm:$0xff]
    %v2244 = vld [vmem:[#allocation42 + $0x70] sm:$0xff]
    %v2245 = vld [vmem:[#allocation42 + $0x78] sm:$0xff]
    %v2246 = vld [vmem:[#allocation44] sm:$0xff]
    %v2247 = vld [vmem:[#allocation44 + $0x8] sm:$0xff]
    %v2248 = vld [vmem:[#allocation44 + $0x10] sm:$0xff]
    %v2249 = vld [vmem:[#allocation44 + $0x18] sm:$0xff]
    %v2250 = vld [vmem:[#allocation44 + $0x20] sm:$0xff]
    %v2251 = vld [vmem:[#allocation44 + $0x28] sm:$0xff]
    %v2252 = vld [vmem:[#allocation44 + $0x30] sm:$0xff]
    %v2253 = vld [vmem:[#allocation44 + $0x38] sm:$0xff]
    %v2254 = vld [vmem:[#allocation44 + $0x40] sm:$0xff]
    %v2255 = vld [vmem:[#allocation44 + $0x48] sm:$0xff]
    %v2256 = vld [vmem:[#allocation44 + $0x50] sm:$0xff]
    %v2257 = vld [vmem:[#allocation44 + $0x58] sm:$0xff]
    %v2258 = vld [vmem:[#allocation44 + $0x60] sm:$0xff]
    %v2259 = vld [vmem:[#allocation44 + $0x68] sm:$0xff]
    %v2260 = vld [vmem:[#allocation44 + $0x70] sm:$0xff]
    %v2261 = vld [vmem:[#allocation44 + $0x78] sm:$0xff]
    %v2262 = vld [vmem:[#allocation45] sm:$0xf]
    %v2264 = vsel %vm676, %v2228, 0
    %2266 = vmatprep.subr.mxu0 0.0
    %2267 = vmatpush1.msra.mxu0 0.0
    %2268 = vmatprep.subr.mxu0 0.0
    %2269 = vmatpush1.msra.mxu0 0.0
    %2270 = vmatprep.subr.mxu0 0.0
    %2271 = vmatpush1.msra.mxu0 0.0
    %2272 = vmatprep.subr.mxu0 0.0
    %2273 = vmatpush1.msra.mxu0 0.0
    %2274 = vmatprep.subr.mxu0 0.0
    %2275 = vmatpush1.msra.mxu0 0.0
    %2276 = vmatprep.subr.mxu0 0.0
    %2277 = vmatpush1.msra.mxu0 0.0
    %2278 = vmatprep.subr.mxu0 0.0
    %2279 = vmatpush1.msra.mxu0 0.0
    %2280 = vmatprep.subr.mxu0 0.0
    %2281 = vmatpush1.msra.mxu0 0.0
    %2282 = vmatprep.subr.mxu0 0.0
    %2283 = vmatpush1.msra.mxu0 0.0
    %2284 = vmatprep.subr.mxu0 0.0
    %2285 = vmatpush1.msra.mxu0 0.0
    %2286 = vmatprep.subr.mxu0 0.0
    %2287 = vmatpush1.msra.mxu0 0.0
    %2288 = vmatprep.subr.mxu0 0.0
    %2289 = vmatpush1.msra.mxu0 0.0
    %2290 = vmatprep.subr.mxu0 %v2259
    %2291 = vmatpush1.msra.mxu0 %v2258
    %2292 = vmatprep.subr.mxu0 %v2255
    %2293 = vmatpush1.msra.mxu0 %v2254
    %2294 = vmatprep.subr.mxu0 %v2251
    %2295 = vmatpush1.msra.mxu0 %v2250
    %2296 = vmatprep.subr.mxu0 %v2247
    %2297 = vmatpush1.msra.mxu0 %v2246
    %2298 = vmatprep.subr.mxu0 0.0
    %2299 = vmatpush2.msra.mxu0 0.0
    %2300 = vmatprep.subr.mxu0 0.0
    %2301 = vmatpush2.msra.mxu0 0.0
    %2302 = vmatprep.subr.mxu0 0.0
    %2303 = vmatpush2.msra.mxu0 0.0
    %2304 = vmatprep.subr.mxu0 0.0
    %2305 = vmatpush2.msra.mxu0 0.0
    %2306 = vmatprep.subr.mxu0 0.0
    %2307 = vmatpush2.msra.mxu0 0.0
    %2308 = vmatprep.subr.mxu0 0.0
    %2309 = vmatpush2.msra.mxu0 0.0
    %2310 = vmatprep.subr.mxu0 0.0
    %2311 = vmatpush2.msra.mxu0 0.0
    %2312 = vmatprep.subr.mxu0 0.0
    %2313 = vmatpush2.msra.mxu0 0.0
    %2314 = vmatprep.subr.mxu0 0.0
    %2315 = vmatpush2.msra.mxu0 0.0
    %2316 = vmatprep.subr.mxu0 0.0
    %2317 = vmatpush2.msra.mxu0 0.0
    %2318 = vmatprep.subr.mxu0 0.0
    %2319 = vmatpush2.msra.mxu0 0.0
    %2320 = vmatprep.subr.mxu0 0.0
    %2321 = vmatpush2.msra.mxu0 0.0
    %2322 = vmatprep.subr.mxu0 0.0
    %2323 = vmatpush2.msra.mxu0 0.0
    %2324 = vmatprep.subr.mxu0 0.0
    %2325 = vmatpush2.msra.mxu0 0.0
    %2326 = vmatprep.subr.mxu0 0.0
    %2327 = vmatpush2.msra.mxu0 0.0
    %2328 = vmatprep.subr.mxu0 0.0
    %2329 = vmatpush2.msra.mxu0 0.0
    %2330 = vmatprep.mubr.f32.mxu0 0.0
    %2331 = vmatmul.mubr.f32.gmra.mxu0 %v2264
    %v2332 = vpop.f32.mrf.mxu0
    %v2333 = vadd.f32 0.0, %v2332
    %v2334 = vpop.f32.mrf.mxu0
    %v2335 = vadd.f32 0.0, %v2334
    %2336 = vdwg.mxu0
    %2337 = vmatprep.subr.mxu0 0.0
    %2338 = vmatpush1.msra.mxu0 0.0
    %2339 = vmatprep.subr.mxu0 0.0
    %2340 = vmatpush1.msra.mxu0 0.0
    %2341 = vmatprep.subr.mxu0 0.0
    %2342 = vmatpush1.msra.mxu0 0.0
    %2343 = vmatprep.subr.mxu0 0.0
    %2344 = vmatpush1.msra.mxu0 0.0
    %2345 = vmatprep.subr.mxu0 0.0
    %2346 = vmatpush1.msra.mxu0 0.0
    %2347 = vmatprep.subr.mxu0 0.0
    %2348 = vmatpush1.msra.mxu0 0.0
    %2349 = vmatprep.subr.mxu0 0.0
    %2350 = vmatpush1.msra.mxu0 0.0
    %2351 = vmatprep.subr.mxu0 0.0
    %2352 = vmatpush1.msra.mxu0 0.0
    %2353 = vmatprep.subr.mxu0 0.0
    %2354 = vmatpush1.msra.mxu0 0.0
    %2355 = vmatprep.subr.mxu0 0.0
    %2356 = vmatpush1.msra.mxu0 0.0
    %2357 = vmatprep.subr.mxu0 0.0
    %2358 = vmatpush1.msra.mxu0 0.0
    %2359 = vmatprep.subr.mxu0 0.0
    %2360 = vmatpush1.msra.mxu0 0.0
    %2361 = vmatprep.subr.mxu0 %v2261
    %2362 = vmatpush1.msra.mxu0 %v2260
    %2363 = vmatprep.subr.mxu0 %v2257
    %2364 = vmatpush1.msra.mxu0 %v2256
    %2365 = vmatprep.subr.mxu0 %v2253
    %2366 = vmatpush1.msra.mxu0 %v2252
    %2367 = vmatprep.subr.mxu0 %v2249
    %2368 = vmatpush1.msra.mxu0 %v2248
    %2369 = vmatprep.subr.mxu0 0.0
    %2370 = vmatpush2.msra.mxu0 0.0
    %2371 = vmatprep.subr.mxu0 0.0
    %2372 = vmatpush2.msra.mxu0 0.0
    %2373 = vmatprep.subr.mxu0 0.0
    %2374 = vmatpush2.msra.mxu0 0.0
    %2375 = vmatprep.subr.mxu0 0.0
    %2376 = vmatpush2.msra.mxu0 0.0
    %2377 = vmatprep.subr.mxu0 0.0
    %2378 = vmatpush2.msra.mxu0 0.0
    %2379 = vmatprep.subr.mxu0 0.0
    %2380 = vmatpush2.msra.mxu0 0.0
    %2381 = vmatprep.subr.mxu0 0.0
    %2382 = vmatpush2.msra.mxu0 0.0
    %2383 = vmatprep.subr.mxu0 0.0
    %2384 = vmatpush2.msra.mxu0 0.0
    %2385 = vmatprep.subr.mxu0 0.0
    %2386 = vmatpush2.msra.mxu0 0.0
    %2387 = vmatprep.subr.mxu0 0.0
    %2388 = vmatpush2.msra.mxu0 0.0
    %2389 = vmatprep.subr.mxu0 0.0
    %2390 = vmatpush2.msra.mxu0 0.0
    %2391 = vmatprep.subr.mxu0 0.0
    %2392 = vmatpush2.msra.mxu0 0.0
    %2393 = vmatprep.subr.mxu0 0.0
    %2394 = vmatpush2.msra.mxu0 0.0
    %2395 = vmatprep.subr.mxu0 0.0
    %2396 = vmatpush2.msra.mxu0 0.0
    %2397 = vmatprep.subr.mxu0 0.0
    %2398 = vmatpush2.msra.mxu0 0.0
    %2399 = vmatprep.subr.mxu0 0.0
    %2400 = vmatpush2.msra.mxu0 0.0
    %2401 = vmatprep.mubr.f32.mxu0 0.0
    %2402 = vmatmul.mubr.f32.gmra.mxu0 %v2264
    %v2403 = vpop.f32.mrf.mxu0
    %v2404 = vadd.f32 0.0, %v2403
    %v2405 = vpop.f32.mrf.mxu0
    %v2406 = vadd.f32 0.0, %v2405
    %2407 = vdwg.mxu0
    %v2409 = vsel %vm676, %v2227, 0
    %2411 = vmatprep.subr.mxu0 0.0
    %2412 = vmatpush1.msra.mxu0 0.0
    %2413 = vmatprep.subr.mxu0 0.0
    %2414 = vmatpush1.msra.mxu0 0.0
    %2415 = vmatprep.subr.mxu0 0.0
    %2416 = vmatpush1.msra.mxu0 0.0
    %2417 = vmatprep.subr.mxu0 0.0
    %2418 = vmatpush1.msra.mxu0 0.0
    %2419 = vmatprep.subr.mxu0 0.0
    %2420 = vmatpush1.msra.mxu0 0.0
    %2421 = vmatprep.subr.mxu0 0.0
    %2422 = vmatpush1.msra.mxu0 0.0
    %2423 = vmatprep.subr.mxu0 0.0
    %2424 = vmatpush1.msra.mxu0 0.0
    %2425 = vmatprep.subr.mxu0 0.0
    %2426 = vmatpush1.msra.mxu0 0.0
    %2427 = vmatprep.subr.mxu0 0.0
    %2428 = vmatpush1.msra.mxu0 0.0
    %2429 = vmatprep.subr.mxu0 0.0
    %2430 = vmatpush1.msra.mxu0 0.0
    %2431 = vmatprep.subr.mxu0 0.0
    %2432 = vmatpush1.msra.mxu0 0.0
    %2433 = vmatprep.subr.mxu0 0.0
    %2434 = vmatpush1.msra.mxu0 0.0
    %2435 = vmatprep.subr.mxu0 %v2243
    %2436 = vmatpush1.msra.mxu0 %v2242
    %2437 = vmatprep.subr.mxu0 %v2239
    %2438 = vmatpush1.msra.mxu0 %v2238
    %2439 = vmatprep.subr.mxu0 %v2235
    %2440 = vmatpush1.msra.mxu0 %v2234
    %2441 = vmatprep.subr.mxu0 %v2231
    %2442 = vmatpush1.msra.mxu0 %v2230
    %2443 = vmatprep.subr.mxu0 0.0
    %2444 = vmatpush2.msra.mxu0 0.0
    %2445 = vmatprep.subr.mxu0 0.0
    %2446 = vmatpush2.msra.mxu0 0.0
    %2447 = vmatprep.subr.mxu0 0.0
    %2448 = vmatpush2.msra.mxu0 0.0
    %2449 = vmatprep.subr.mxu0 0.0
    %2450 = vmatpush2.msra.mxu0 0.0
    %2451 = vmatprep.subr.mxu0 0.0
    %2452 = vmatpush2.msra.mxu0 0.0
    %2453 = vmatprep.subr.mxu0 0.0
    %2454 = vmatpush2.msra.mxu0 0.0
    %2455 = vmatprep.subr.mxu0 0.0
    %2456 = vmatpush2.msra.mxu0 0.0
    %2457 = vmatprep.subr.mxu0 0.0
    %2458 = vmatpush2.msra.mxu0 0.0
    %2459 = vmatprep.subr.mxu0 0.0
    %2460 = vmatpush2.msra.mxu0 0.0
    %2461 = vmatprep.subr.mxu0 0.0
    %2462 = vmatpush2.msra.mxu0 0.0
    %2463 = vmatprep.subr.mxu0 0.0
    %2464 = vmatpush2.msra.mxu0 0.0
    %2465 = vmatprep.subr.mxu0 0.0
    %2466 = vmatpush2.msra.mxu0 0.0
    %2467 = vmatprep.subr.mxu0 0.0
    %2468 = vmatpush2.msra.mxu0 0.0
    %2469 = vmatprep.subr.mxu0 0.0
    %2470 = vmatpush2.msra.mxu0 0.0
    %2471 = vmatprep.subr.mxu0 0.0
    %2472 = vmatpush2.msra.mxu0 0.0
    %2473 = vmatprep.subr.mxu0 0.0
    %2474 = vmatpush2.msra.mxu0 0.0
    %2475 = vmatprep.mubr.f32.mxu0 0.0
    %2476 = vmatmul.mubr.f32.gmra.mxu0 %v2409
    %v2477 = vpop.f32.mrf.mxu0
    %v2478 = vadd.f32 %v2333, %v2477
    %v2479 = vpop.f32.mrf.mxu0
    %v2480 = vadd.f32 %v2335, %v2479
    %2481 = vdwg.mxu0
    %2482 = vmatprep.subr.mxu0 0.0
    %2483 = vmatpush1.msra.mxu0 0.0
    %2484 = vmatprep.subr.mxu0 0.0
    %2485 = vmatpush1.msra.mxu0 0.0
    %2486 = vmatprep.subr.mxu0 0.0
    %2487 = vmatpush1.msra.mxu0 0.0
    %2488 = vmatprep.subr.mxu0 0.0
    %2489 = vmatpush1.msra.mxu0 0.0
    %2490 = vmatprep.subr.mxu0 0.0
    %2491 = vmatpush1.msra.mxu0 0.0
    %2492 = vmatprep.subr.mxu0 0.0
    %2493 = vmatpush1.msra.mxu0 0.0
    %2494 = vmatprep.subr.mxu0 0.0
    %2495 = vmatpush1.msra.mxu0 0.0
    %2496 = vmatprep.subr.mxu0 0.0
    %2497 = vmatpush1.msra.mxu0 0.0
    %2498 = vmatprep.subr.mxu0 0.0
    %2499 = vmatpush1.msra.mxu0 0.0
    %2500 = vmatprep.subr.mxu0 0.0
    %2501 = vmatpush1.msra.mxu0 0.0
    %2502 = vmatprep.subr.mxu0 0.0
    %2503 = vmatpush1.msra.mxu0 0.0
    %2504 = vmatprep.subr.mxu0 0.0
    %2505 = vmatpush1.msra.mxu0 0.0
    %2506 = vmatprep.subr.mxu0 %v2245
    %2507 = vmatpush1.msra.mxu0 %v2244
    %2508 = vmatprep.subr.mxu0 %v2241
    %2509 = vmatpush1.msra.mxu0 %v2240
    %2510 = vmatprep.subr.mxu0 %v2237
    %2511 = vmatpush1.msra.mxu0 %v2236
    %2512 = vmatprep.subr.mxu0 %v2233
    %2513 = vmatpush1.msra.mxu0 %v2232
    %2514 = vmatprep.subr.mxu0 0.0
    %2515 = vmatpush2.msra.mxu0 0.0
    %2516 = vmatprep.subr.mxu0 0.0
    %2517 = vmatpush2.msra.mxu0 0.0
    %2518 = vmatprep.subr.mxu0 0.0
    %2519 = vmatpush2.msra.mxu0 0.0
    %2520 = vmatprep.subr.mxu0 0.0
    %2521 = vmatpush2.msra.mxu0 0.0
    %2522 = vmatprep.subr.mxu0 0.0
    %2523 = vmatpush2.msra.mxu0 0.0
    %2524 = vmatprep.subr.mxu0 0.0
    %2525 = vmatpush2.msra.mxu0 0.0
    %2526 = vmatprep.subr.mxu0 0.0
    %2527 = vmatpush2.msra.mxu0 0.0
    %2528 = vmatprep.subr.mxu0 0.0
    %2529 = vmatpush2.msra.mxu0 0.0
    %2530 = vmatprep.subr.mxu0 0.0
    %2531 = vmatpush2.msra.mxu0 0.0
    %2532 = vmatprep.subr.mxu0 0.0
    %2533 = vmatpush2.msra.mxu0 0.0
    %2534 = vmatprep.subr.mxu0 0.0
    %2535 = vmatpush2.msra.mxu0 0.0
    %2536 = vmatprep.subr.mxu0 0.0
    %2537 = vmatpush2.msra.mxu0 0.0
    %2538 = vmatprep.subr.mxu0 0.0
    %2539 = vmatpush2.msra.mxu0 0.0
    %2540 = vmatprep.subr.mxu0 0.0
    %2541 = vmatpush2.msra.mxu0 0.0
    %2542 = vmatprep.subr.mxu0 0.0
    %2543 = vmatpush2.msra.mxu0 0.0
    %2544 = vmatprep.subr.mxu0 0.0
    %2545 = vmatpush2.msra.mxu0 0.0
    %2546 = vmatprep.mubr.f32.mxu0 0.0
    %2547 = vmatmul.mubr.f32.gmra.mxu0 %v2409
    %v2548 = vpop.f32.mrf.mxu0
    %v2549 = vadd.f32 %v2404, %v2548
    %v2550 = vpop.f32.mrf.mxu0
    %v2551 = vadd.f32 %v2406, %v2550
    %2552 = vdwg.mxu0
    %v2554 = vlaneseq
    %v2555 = vshrl.u32 %v2554, 7
    %v2556 = vsub.s32 0, %v2555
    %v2557 = vrot.slane %v2262, %v2556
    %v2558 = vlaneseq
    %v2559 = vshrl.u32 %v2558, 7
    %v2560 = vsub.s32 1, %v2559
    %v2561 = vrot.slane %v2262, %v2560
    %v2562 = vlaneseq
    %v2563 = vshrl.u32 %v2562, 7
    %v2564 = vsub.s32 2, %v2563
    %v2565 = vrot.slane %v2262, %v2564
    %v2566 = vlaneseq
    %v2567 = vshrl.u32 %v2566, 7
    %v2568 = vsub.s32 3, %v2567
    %v2569 = vrot.slane %v2262, %v2568
    %v2574 = vadd.f32 %v2478, %v2557
    %v2575 = vadd.f32 %v2480, %v2561
    %v2576 = vadd.f32 %v2549, %v2565
    %v2577 = vadd.f32 %v2551, %v2569
    %v2578 = vxor.u32 %v2574, 2147483648
    %v2579 = vmul.f32 %v2578, 1.442695
    %v2580 = vpow.pop %v2579
    %v2581 = vadd.f32 %v2580, 1.0
    %v2582 = vrcp.pop %v2581
    %v2583 = vmul.f32 1.0, %v2582
    %v2584 = vxor.u32 %v2575, 2147483648
    %v2585 = vmul.f32 %v2584, 1.442695
    %v2586 = vpow.pop %v2585
    %v2587 = vadd.f32 %v2586, 1.0
    %v2588 = vrcp.pop %v2587
    %v2589 = vmul.f32 1.0, %v2588
    %v2590 = vtanh.pop %v2576
    %v2591 = vxor.u32 %v2577, 2147483648
    %v2592 = vmul.f32 %v2591, 1.442695
    %v2593 = vpow.pop %v2592
    %v2594 = vadd.f32 %v2593, 1.0
    %v2595 = vrcp.pop %v2594
    %v2596 = vmul.f32 1.0, %v2595
    %v2597 = vmul.f32 %v2589, %v2229
    %v2598 = vmul.f32 %v2583, %v2590
    %v2599 = vadd.f32 %v2597, %v2598
    %v2600 = vtanh.pop %v2599
    %v2601 = vmul.f32 %v2596, %v2600
    %v2602 = vadd.f32 %v2227, %v2601
    %2603 = vst.msk [vmem:[#allocation54] sm:$0x3] %vm1273, %v2226
    %2604 = vst.msk [vmem:[#allocation56] sm:$0x3] %vm1273, %v2224
    %2605 = vst.msk [vmem:[#allocation57] sm:$0x3] %vm1273, %v2601
    %2606 = vst.msk [vmem:[#allocation59] sm:$0x3] %vm1273, %v2599
    %2608 = vrot.lane.b32.xlu0 %v2602, 16
    %v2609 = vpop.permute.xlu0 %2608
    %v2611 = vsel %vm590, %v580, %v2609
    %v2612 = vld [vmem:[#allocation14] sm:$0x3]
    %v2613 = vld [vmem:[#allocation15] sm:$0x3]
    %v2614 = vld [vmem:[%s75] sm:$0xff]
    %v2615 = vld [vmem:[%s75 + $0x8] sm:$0xff]
    %v2616 = vld [vmem:[%s75 + $0x10] sm:$0xff]
    %v2617 = vld [vmem:[%s75 + $0x18] sm:$0xff]
    %v2618 = vld [vmem:[%s75 + $0x20] sm:$0xff]
    %v2619 = vld [vmem:[%s75 + $0x28] sm:$0xff]
    %v2620 = vld [vmem:[%s75 + $0x30] sm:$0xff]
    %v2621 = vld [vmem:[%s75 + $0x38] sm:$0xff]
    %v2622 = vld [vmem:[%s75 + $0x40] sm:$0xff]
    %v2623 = vld [vmem:[%s75 + $0x48] sm:$0xff]
    %v2624 = vld [vmem:[%s75 + $0x50] sm:$0xff]
    %v2625 = vld [vmem:[%s75 + $0x58] sm:$0xff]
    %v2626 = vld [vmem:[%s75 + $0x60] sm:$0xff]
    %v2627 = vld [vmem:[%s75 + $0x68] sm:$0xff]
    %v2628 = vld [vmem:[%s75 + $0x70] sm:$0xff]
    %v2629 = vld [vmem:[%s75 + $0x78] sm:$0xff]
    %v2630 = vld [vmem:[%s75 + $0x80] sm:$0xff]
    %v2631 = vld [vmem:[%s75 + $0x88] sm:$0xff]
    %v2632 = vld [vmem:[%s75 + $0x90] sm:$0xff]
    %v2633 = vld [vmem:[%s75 + $0x98] sm:$0xff]
    %v2634 = vld [vmem:[%s75 + $0xa0] sm:$0xff]
    %v2635 = vld [vmem:[%s75 + $0xa8] sm:$0xff]
    %v2636 = vld [vmem:[%s75 + $0xb0] sm:$0xff]
    %v2637 = vld [vmem:[%s75 + $0xb8] sm:$0xff]
    %v2638 = vld [vmem:[#allocation47] sm:$0xff]
    %v2639 = vld [vmem:[#allocation47 + $0x8] sm:$0xff]
    %v2640 = vld [vmem:[#allocation47 + $0x10] sm:$0xff]
    %v2641 = vld [vmem:[#allocation47 + $0x18] sm:$0xff]
    %v2642 = vld [vmem:[#allocation47 + $0x20] sm:$0xff]
    %v2643 = vld [vmem:[#allocation47 + $0x28] sm:$0xff]
    %v2644 = vld [vmem:[#allocation47 + $0x30] sm:$0xff]
    %v2645 = vld [vmem:[#allocation47 + $0x38] sm:$0xff]
    %v2646 = vld [vmem:[#allocation47 + $0x40] sm:$0xff]
    %v2647 = vld [vmem:[#allocation47 + $0x48] sm:$0xff]
    %v2648 = vld [vmem:[#allocation47 + $0x50] sm:$0xff]
    %v2649 = vld [vmem:[#allocation47 + $0x58] sm:$0xff]
    %v2650 = vld [vmem:[#allocation47 + $0x60] sm:$0xff]
    %v2651 = vld [vmem:[#allocation47 + $0x68] sm:$0xff]
    %v2652 = vld [vmem:[#allocation47 + $0x70] sm:$0xff]
    %v2653 = vld [vmem:[#allocation47 + $0x78] sm:$0xff]
    %v2654 = vld [vmem:[#allocation47 + $0x80] sm:$0xff]
    %v2655 = vld [vmem:[#allocation47 + $0x88] sm:$0xff]
    %v2656 = vld [vmem:[#allocation47 + $0x90] sm:$0xff]
    %v2657 = vld [vmem:[#allocation47 + $0x98] sm:$0xff]
    %v2658 = vld [vmem:[#allocation47 + $0xa0] sm:$0xff]
    %v2659 = vld [vmem:[#allocation47 + $0xa8] sm:$0xff]
    %v2660 = vld [vmem:[#allocation47 + $0xb0] sm:$0xff]
    %v2661 = vld [vmem:[#allocation47 + $0xb8] sm:$0xff]
    %v2662 = vld [vmem:[#allocation48] sm:$0xf]
    %vm2663 = vcmask 392192
    %v2665 = vsel %vm2663, %v2612, 0
    %2667 = vmatprep.subr.mxu0 0.0
    %2668 = vmatpush1.msra.mxu0 0.0
    %2669 = vmatprep.subr.mxu0 0.0
    %2670 = vmatpush1.msra.mxu0 0.0
    %2671 = vmatprep.subr.mxu0 0.0
    %2672 = vmatpush1.msra.mxu0 0.0
    %2673 = vmatprep.subr.mxu0 0.0
    %2674 = vmatpush1.msra.mxu0 0.0
    %2675 = vmatprep.subr.mxu0 0.0
    %2676 = vmatpush1.msra.mxu0 0.0
    %2677 = vmatprep.subr.mxu0 0.0
    %2678 = vmatpush1.msra.mxu0 0.0
    %2679 = vmatprep.subr.mxu0 0.0
    %2680 = vmatpush1.msra.mxu0 0.0
    %2681 = vmatprep.subr.mxu0 0.0
    %2682 = vmatpush1.msra.mxu0 0.0
    %2683 = vmatprep.subr.mxu0 0.0
    %2684 = vmatpush1.msra.mxu0 0.0
    %2685 = vmatprep.subr.mxu0 0.0
    %2686 = vmatpush1.msra.mxu0 0.0
    %2687 = vmatprep.subr.mxu0 %v2659
    %2688 = vmatpush1.msra.mxu0 %v2658
    %2689 = vmatprep.subr.mxu0 %v2655
    %2690 = vmatpush1.msra.mxu0 %v2654
    %2691 = vmatprep.subr.mxu0 %v2651
    %2692 = vmatpush1.msra.mxu0 %v2650
    %2693 = vmatprep.subr.mxu0 %v2647
    %2694 = vmatpush1.msra.mxu0 %v2646
    %2695 = vmatprep.subr.mxu0 %v2643
    %2696 = vmatpush1.msra.mxu0 %v2642
    %2697 = vmatprep.subr.mxu0 %v2639
    %2698 = vmatpush1.msra.mxu0 %v2638
    %2699 = vmatprep.subr.mxu0 0.0
    %2700 = vmatpush2.msra.mxu0 0.0
    %2701 = vmatprep.subr.mxu0 0.0
    %2702 = vmatpush2.msra.mxu0 0.0
    %2703 = vmatprep.subr.mxu0 0.0
    %2704 = vmatpush2.msra.mxu0 0.0
    %2705 = vmatprep.subr.mxu0 0.0
    %2706 = vmatpush2.msra.mxu0 0.0
    %2707 = vmatprep.subr.mxu0 0.0
    %2708 = vmatpush2.msra.mxu0 0.0
    %2709 = vmatprep.subr.mxu0 0.0
    %2710 = vmatpush2.msra.mxu0 0.0
    %2711 = vmatprep.subr.mxu0 0.0
    %2712 = vmatpush2.msra.mxu0 0.0
    %2713 = vmatprep.subr.mxu0 0.0
    %2714 = vmatpush2.msra.mxu0 0.0
    %2715 = vmatprep.subr.mxu0 0.0
    %2716 = vmatpush2.msra.mxu0 0.0
    %2717 = vmatprep.subr.mxu0 0.0
    %2718 = vmatpush2.msra.mxu0 0.0
    %2719 = vmatprep.subr.mxu0 0.0
    %2720 = vmatpush2.msra.mxu0 0.0
    %2721 = vmatprep.subr.mxu0 0.0
    %2722 = vmatpush2.msra.mxu0 0.0
    %2723 = vmatprep.subr.mxu0 0.0
    %2724 = vmatpush2.msra.mxu0 0.0
    %2725 = vmatprep.subr.mxu0 0.0
    %2726 = vmatpush2.msra.mxu0 0.0
    %2727 = vmatprep.subr.mxu0 0.0
    %2728 = vmatpush2.msra.mxu0 0.0
    %2729 = vmatprep.subr.mxu0 0.0
    %2730 = vmatpush2.msra.mxu0 0.0
    %2731 = vmatprep.mubr.f32.mxu0 0.0
    %2732 = vmatmul.mubr.f32.gmra.mxu0 %v2665
    %v2733 = vpop.f32.mrf.mxu0
    %v2734 = vadd.f32 0.0, %v2733
    %v2735 = vpop.f32.mrf.mxu0
    %v2736 = vadd.f32 0.0, %v2735
    %2737 = vdwg.mxu0
    %2738 = vmatprep.subr.mxu0 0.0
    %2739 = vmatpush1.msra.mxu0 0.0
    %2740 = vmatprep.subr.mxu0 0.0
    %2741 = vmatpush1.msra.mxu0 0.0
    %2742 = vmatprep.subr.mxu0 0.0
    %2743 = vmatpush1.msra.mxu0 0.0
    %2744 = vmatprep.subr.mxu0 0.0
    %2745 = vmatpush1.msra.mxu0 0.0
    %2746 = vmatprep.subr.mxu0 0.0
    %2747 = vmatpush1.msra.mxu0 0.0
    %2748 = vmatprep.subr.mxu0 0.0
    %2749 = vmatpush1.msra.mxu0 0.0
    %2750 = vmatprep.subr.mxu0 0.0
    %2751 = vmatpush1.msra.mxu0 0.0
    %2752 = vmatprep.subr.mxu0 0.0
    %2753 = vmatpush1.msra.mxu0 0.0
    %2754 = vmatprep.subr.mxu0 0.0
    %2755 = vmatpush1.msra.mxu0 0.0
    %2756 = vmatprep.subr.mxu0 0.0
    %2757 = vmatpush1.msra.mxu0 0.0
    %2758 = vmatprep.subr.mxu0 %v2661
    %2759 = vmatpush1.msra.mxu0 %v2660
    %2760 = vmatprep.subr.mxu0 %v2657
    %2761 = vmatpush1.msra.mxu0 %v2656
    %2762 = vmatprep.subr.mxu0 %v2653
    %2763 = vmatpush1.msra.mxu0 %v2652
    %2764 = vmatprep.subr.mxu0 %v2649
    %2765 = vmatpush1.msra.mxu0 %v2648
    %2766 = vmatprep.subr.mxu0 %v2645
    %2767 = vmatpush1.msra.mxu0 %v2644
    %2768 = vmatprep.subr.mxu0 %v2641
    %2769 = vmatpush1.msra.mxu0 %v2640
    %2770 = vmatprep.subr.mxu0 0.0
    %2771 = vmatpush2.msra.mxu0 0.0
    %2772 = vmatprep.subr.mxu0 0.0
    %2773 = vmatpush2.msra.mxu0 0.0
    %2774 = vmatprep.subr.mxu0 0.0
    %2775 = vmatpush2.msra.mxu0 0.0
    %2776 = vmatprep.subr.mxu0 0.0
    %2777 = vmatpush2.msra.mxu0 0.0
    %2778 = vmatprep.subr.mxu0 0.0
    %2779 = vmatpush2.msra.mxu0 0.0
    %2780 = vmatprep.subr.mxu0 0.0
    %2781 = vmatpush2.msra.mxu0 0.0
    %2782 = vmatprep.subr.mxu0 0.0
    %2783 = vmatpush2.msra.mxu0 0.0
    %2784 = vmatprep.subr.mxu0 0.0
    %2785 = vmatpush2.msra.mxu0 0.0
    %2786 = vmatprep.subr.mxu0 0.0
    %2787 = vmatpush2.msra.mxu0 0.0
    %2788 = vmatprep.subr.mxu0 0.0
    %2789 = vmatpush2.msra.mxu0 0.0
    %2790 = vmatprep.subr.mxu0 0.0
    %2791 = vmatpush2.msra.mxu0 0.0
    %2792 = vmatprep.subr.mxu0 0.0
    %2793 = vmatpush2.msra.mxu0 0.0
    %2794 = vmatprep.subr.mxu0 0.0
    %2795 = vmatpush2.msra.mxu0 0.0
    %2796 = vmatprep.subr.mxu0 0.0
    %2797 = vmatpush2.msra.mxu0 0.0
    %2798 = vmatprep.subr.mxu0 0.0
    %2799 = vmatpush2.msra.mxu0 0.0
    %2800 = vmatprep.subr.mxu0 0.0
    %2801 = vmatpush2.msra.mxu0 0.0
    %2802 = vmatprep.mubr.f32.mxu0 0.0
    %2803 = vmatmul.mubr.f32.gmra.mxu0 %v2665
    %v2804 = vpop.f32.mrf.mxu0
    %v2805 = vadd.f32 0.0, %v2804
    %v2806 = vpop.f32.mrf.mxu0
    %v2807 = vadd.f32 0.0, %v2806
    %2808 = vdwg.mxu0
    %v2810 = vsel %vm2663, %v2611, 0
    %2812 = vmatprep.subr.mxu0 0.0
    %2813 = vmatpush1.msra.mxu0 0.0
    %2814 = vmatprep.subr.mxu0 0.0
    %2815 = vmatpush1.msra.mxu0 0.0
    %2816 = vmatprep.subr.mxu0 0.0
    %2817 = vmatpush1.msra.mxu0 0.0
    %2818 = vmatprep.subr.mxu0 0.0
    %2819 = vmatpush1.msra.mxu0 0.0
    %2820 = vmatprep.subr.mxu0 0.0
    %2821 = vmatpush1.msra.mxu0 0.0
    %2822 = vmatprep.subr.mxu0 0.0
    %2823 = vmatpush1.msra.mxu0 0.0
    %2824 = vmatprep.subr.mxu0 0.0
    %2825 = vmatpush1.msra.mxu0 0.0
    %2826 = vmatprep.subr.mxu0 0.0
    %2827 = vmatpush1.msra.mxu0 0.0
    %2828 = vmatprep.subr.mxu0 0.0
    %2829 = vmatpush1.msra.mxu0 0.0
    %2830 = vmatprep.subr.mxu0 0.0
    %2831 = vmatpush1.msra.mxu0 0.0
    %2832 = vmatprep.subr.mxu0 %v2635
    %2833 = vmatpush1.msra.mxu0 %v2634
    %2834 = vmatprep.subr.mxu0 %v2631
    %2835 = vmatpush1.msra.mxu0 %v2630
    %2836 = vmatprep.subr.mxu0 %v2627
    %2837 = vmatpush1.msra.mxu0 %v2626
    %2838 = vmatprep.subr.mxu0 %v2623
    %2839 = vmatpush1.msra.mxu0 %v2622
    %2840 = vmatprep.subr.mxu0 %v2619
    %2841 = vmatpush1.msra.mxu0 %v2618
    %2842 = vmatprep.subr.mxu0 %v2615
    %2843 = vmatpush1.msra.mxu0 %v2614
    %2844 = vmatprep.subr.mxu0 0.0
    %2845 = vmatpush2.msra.mxu0 0.0
    %2846 = vmatprep.subr.mxu0 0.0
    %2847 = vmatpush2.msra.mxu0 0.0
    %2848 = vmatprep.subr.mxu0 0.0
    %2849 = vmatpush2.msra.mxu0 0.0
    %2850 = vmatprep.subr.mxu0 0.0
    %2851 = vmatpush2.msra.mxu0 0.0
    %2852 = vmatprep.subr.mxu0 0.0
    %2853 = vmatpush2.msra.mxu0 0.0
    %2854 = vmatprep.subr.mxu0 0.0
    %2855 = vmatpush2.msra.mxu0 0.0
    %2856 = vmatprep.subr.mxu0 0.0
    %2857 = vmatpush2.msra.mxu0 0.0
    %2858 = vmatprep.subr.mxu0 0.0
    %2859 = vmatpush2.msra.mxu0 0.0
    %2860 = vmatprep.subr.mxu0 0.0
    %2861 = vmatpush2.msra.mxu0 0.0
    %2862 = vmatprep.subr.mxu0 0.0
    %2863 = vmatpush2.msra.mxu0 0.0
    %2864 = vmatprep.subr.mxu0 0.0
    %2865 = vmatpush2.msra.mxu0 0.0
    %2866 = vmatprep.subr.mxu0 0.0
    %2867 = vmatpush2.msra.mxu0 0.0
    %2868 = vmatprep.subr.mxu0 0.0
    %2869 = vmatpush2.msra.mxu0 0.0
    %2870 = vmatprep.subr.mxu0 0.0
    %2871 = vmatpush2.msra.mxu0 0.0
    %2872 = vmatprep.subr.mxu0 0.0
    %2873 = vmatpush2.msra.mxu0 0.0
    %2874 = vmatprep.subr.mxu0 0.0
    %2875 = vmatpush2.msra.mxu0 0.0
    %2876 = vmatprep.mubr.f32.mxu0 0.0
    %2877 = vmatmul.mubr.f32.gmra.mxu0 %v2810
    %v2878 = vpop.f32.mrf.mxu0
    %v2879 = vadd.f32 %v2734, %v2878
    %v2880 = vpop.f32.mrf.mxu0
    %v2881 = vadd.f32 %v2736, %v2880
    %2882 = vdwg.mxu0
    %2883 = vmatprep.subr.mxu0 0.0
    %2884 = vmatpush1.msra.mxu0 0.0
    %2885 = vmatprep.subr.mxu0 0.0
    %2886 = vmatpush1.msra.mxu0 0.0
    %2887 = vmatprep.subr.mxu0 0.0
    %2888 = vmatpush1.msra.mxu0 0.0
    %2889 = vmatprep.subr.mxu0 0.0
    %2890 = vmatpush1.msra.mxu0 0.0
    %2891 = vmatprep.subr.mxu0 0.0
    %2892 = vmatpush1.msra.mxu0 0.0
    %2893 = vmatprep.subr.mxu0 0.0
    %2894 = vmatpush1.msra.mxu0 0.0
    %2895 = vmatprep.subr.mxu0 0.0
    %2896 = vmatpush1.msra.mxu0 0.0
    %2897 = vmatprep.subr.mxu0 0.0
    %2898 = vmatpush1.msra.mxu0 0.0
    %2899 = vmatprep.subr.mxu0 0.0
    %2900 = vmatpush1.msra.mxu0 0.0
    %2901 = vmatprep.subr.mxu0 0.0
    %2902 = vmatpush1.msra.mxu0 0.0
    %2903 = vmatprep.subr.mxu0 %v2637
    %2904 = vmatpush1.msra.mxu0 %v2636
    %2905 = vmatprep.subr.mxu0 %v2633
    %2906 = vmatpush1.msra.mxu0 %v2632
    %2907 = vmatprep.subr.mxu0 %v2629
    %2908 = vmatpush1.msra.mxu0 %v2628
    %2909 = vmatprep.subr.mxu0 %v2625
    %2910 = vmatpush1.msra.mxu0 %v2624
    %2911 = vmatprep.subr.mxu0 %v2621
    %2912 = vmatpush1.msra.mxu0 %v2620
    %2913 = vmatprep.subr.mxu0 %v2617
    %2914 = vmatpush1.msra.mxu0 %v2616
    %2915 = vmatprep.subr.mxu0 0.0
    %2916 = vmatpush2.msra.mxu0 0.0
    %2917 = vmatprep.subr.mxu0 0.0
    %2918 = vmatpush2.msra.mxu0 0.0
    %2919 = vmatprep.subr.mxu0 0.0
    %2920 = vmatpush2.msra.mxu0 0.0
    %2921 = vmatprep.subr.mxu0 0.0
    %2922 = vmatpush2.msra.mxu0 0.0
    %2923 = vmatprep.subr.mxu0 0.0
    %2924 = vmatpush2.msra.mxu0 0.0
    %2925 = vmatprep.subr.mxu0 0.0
    %2926 = vmatpush2.msra.mxu0 0.0
    %2927 = vmatprep.subr.mxu0 0.0
    %2928 = vmatpush2.msra.mxu0 0.0
    %2929 = vmatprep.subr.mxu0 0.0
    %2930 = vmatpush2.msra.mxu0 0.0
    %2931 = vmatprep.subr.mxu0 0.0
    %2932 = vmatpush2.msra.mxu0 0.0
    %2933 = vmatprep.subr.mxu0 0.0
    %2934 = vmatpush2.msra.mxu0 0.0
    %2935 = vmatprep.subr.mxu0 0.0
    %2936 = vmatpush2.msra.mxu0 0.0
    %2937 = vmatprep.subr.mxu0 0.0
    %2938 = vmatpush2.msra.mxu0 0.0
    %2939 = vmatprep.subr.mxu0 0.0
    %2940 = vmatpush2.msra.mxu0 0.0
    %2941 = vmatprep.subr.mxu0 0.0
    %2942 = vmatpush2.msra.mxu0 0.0
    %2943 = vmatprep.subr.mxu0 0.0
    %2944 = vmatpush2.msra.mxu0 0.0
    %2945 = vmatprep.subr.mxu0 0.0
    %2946 = vmatpush2.msra.mxu0 0.0
    %2947 = vmatprep.mubr.f32.mxu0 0.0
    %2948 = vmatmul.mubr.f32.gmra.mxu0 %v2810
    %v2949 = vpop.f32.mrf.mxu0
    %v2950 = vadd.f32 %v2805, %v2949
    %v2951 = vpop.f32.mrf.mxu0
    %v2952 = vadd.f32 %v2807, %v2951
    %2953 = vdwg.mxu0
    %v2955 = vlaneseq
    %v2956 = vshrl.u32 %v2955, 7
    %v2957 = vsub.s32 0, %v2956
    %v2958 = vrot.slane %v2662, %v2957
    %v2959 = vlaneseq
    %v2960 = vshrl.u32 %v2959, 7
    %v2961 = vsub.s32 1, %v2960
    %v2962 = vrot.slane %v2662, %v2961
    %v2963 = vlaneseq
    %v2964 = vshrl.u32 %v2963, 7
    %v2965 = vsub.s32 2, %v2964
    %v2966 = vrot.slane %v2662, %v2965
    %v2967 = vlaneseq
    %v2968 = vshrl.u32 %v2967, 7
    %v2969 = vsub.s32 3, %v2968
    %v2970 = vrot.slane %v2662, %v2969
    %v2975 = vadd.f32 %v2879, %v2958
    %v2976 = vadd.f32 %v2881, %v2962
    %v2977 = vadd.f32 %v2950, %v2966
    %v2978 = vadd.f32 %v2952, %v2970
    %v2979 = vxor.u32 %v2975, 2147483648
    %v2980 = vmul.f32 %v2979, 1.442695
    %v2981 = vpow.pop %v2980
    %v2982 = vadd.f32 %v2981, 1.0
    %v2983 = vrcp.pop %v2982
    %v2984 = vmul.f32 1.0, %v2983
    %v2985 = vxor.u32 %v2976, 2147483648
    %v2986 = vmul.f32 %v2985, 1.442695
    %v2987 = vpow.pop %v2986
    %v2988 = vadd.f32 %v2987, 1.0
    %v2989 = vrcp.pop %v2988
    %v2990 = vmul.f32 1.0, %v2989
    %v2991 = vtanh.pop %v2977
    %v2992 = vxor.u32 %v2978, 2147483648
    %v2993 = vmul.f32 %v2992, 1.442695
    %v2994 = vpow.pop %v2993
    %v2995 = vadd.f32 %v2994, 1.0
    %v2996 = vrcp.pop %v2995
    %v2997 = vmul.f32 1.0, %v2996
    %v2998 = vmul.f32 %v2990, %v2613
    %v2999 = vmul.f32 %v2984, %v2991
    %v3000 = vadd.f32 %v2998, %v2999
    %v3001 = vtanh.pop %v3000
    %v3002 = vmul.f32 %v2997, %v3001
    %vm3003 = vcmask 386048
    %3004 = vst.msk [vmem:[#allocation60] sm:$0x3] %vm3003, %v3002
    %3005 = vst.msk [vmem:[#allocation62] sm:$0x3] %vm3003, %v3000
    %v3006 = vadd.f32 %v2611, %v3002
    %s3007 = scalar_lea.vmem [#allocation14], 2
    %v3008 = vld [vmem:[%s3007] sm:$0x3]
    %s3009 = scalar_lea.vmem [#allocation15], 2
    %v3010 = vld [vmem:[%s3009] sm:$0x3]
    %s3011 = scalar_lea.vmem %s75, 192
    %v3012 = vld [vmem:[%s3011] sm:$0xff]
    %v3013 = vld [vmem:[%s3011 + $0x8] sm:$0xff]
    %v3014 = vld [vmem:[%s3011 + $0x10] sm:$0xff]
    %v3015 = vld [vmem:[%s3011 + $0x18] sm:$0xff]
    %v3016 = vld [vmem:[%s3011 + $0x20] sm:$0xff]
    %v3017 = vld [vmem:[%s3011 + $0x28] sm:$0xff]
    %v3018 = vld [vmem:[%s3011 + $0x30] sm:$0xff]
    %v3019 = vld [vmem:[%s3011 + $0x38] sm:$0xff]
    %v3020 = vld [vmem:[%s3011 + $0x40] sm:$0xff]
    %v3021 = vld [vmem:[%s3011 + $0x48] sm:$0xff]
    %v3022 = vld [vmem:[%s3011 + $0x50] sm:$0xff]
    %v3023 = vld [vmem:[%s3011 + $0x58] sm:$0xff]
    %v3024 = vld [vmem:[%s3011 + $0x60] sm:$0xff]
    %v3025 = vld [vmem:[%s3011 + $0x68] sm:$0xff]
    %v3026 = vld [vmem:[%s3011 + $0x70] sm:$0xff]
    %v3027 = vld [vmem:[%s3011 + $0x78] sm:$0xff]
    %v3028 = vld [vmem:[%s3011 + $0x80] sm:$0xff]
    %v3029 = vld [vmem:[%s3011 + $0x88] sm:$0xff]
    %v3030 = vld [vmem:[%s3011 + $0x90] sm:$0xff]
    %v3031 = vld [vmem:[%s3011 + $0x98] sm:$0xff]
    %v3032 = vld [vmem:[%s3011 + $0xa0] sm:$0xff]
    %v3033 = vld [vmem:[%s3011 + $0xa8] sm:$0xff]
    %v3034 = vld [vmem:[%s3011 + $0xb0] sm:$0xff]
    %v3035 = vld [vmem:[%s3011 + $0xb8] sm:$0xff]
    %s3036 = scalar_lea.vmem [#allocation47], 192
    %v3037 = vld [vmem:[%s3036] sm:$0xff]
    %v3038 = vld [vmem:[%s3036 + $0x8] sm:$0xff]
    %v3039 = vld [vmem:[%s3036 + $0x10] sm:$0xff]
    %v3040 = vld [vmem:[%s3036 + $0x18] sm:$0xff]
    %v3041 = vld [vmem:[%s3036 + $0x20] sm:$0xff]
    %v3042 = vld [vmem:[%s3036 + $0x28] sm:$0xff]
    %v3043 = vld [vmem:[%s3036 + $0x30] sm:$0xff]
    %v3044 = vld [vmem:[%s3036 + $0x38] sm:$0xff]
    %v3045 = vld [vmem:[%s3036 + $0x40] sm:$0xff]
    %v3046 = vld [vmem:[%s3036 + $0x48] sm:$0xff]
    %v3047 = vld [vmem:[%s3036 + $0x50] sm:$0xff]
    %v3048 = vld [vmem:[%s3036 + $0x58] sm:$0xff]
    %v3049 = vld [vmem:[%s3036 + $0x60] sm:$0xff]
    %v3050 = vld [vmem:[%s3036 + $0x68] sm:$0xff]
    %v3051 = vld [vmem:[%s3036 + $0x70] sm:$0xff]
    %v3052 = vld [vmem:[%s3036 + $0x78] sm:$0xff]
    %v3053 = vld [vmem:[%s3036 + $0x80] sm:$0xff]
    %v3054 = vld [vmem:[%s3036 + $0x88] sm:$0xff]
    %v3055 = vld [vmem:[%s3036 + $0x90] sm:$0xff]
    %v3056 = vld [vmem:[%s3036 + $0x98] sm:$0xff]
    %v3057 = vld [vmem:[%s3036 + $0xa0] sm:$0xff]
    %v3058 = vld [vmem:[%s3036 + $0xa8] sm:$0xff]
    %v3059 = vld [vmem:[%s3036 + $0xb0] sm:$0xff]
    %v3060 = vld [vmem:[%s3036 + $0xb8] sm:$0xff]
    %s3061 = scalar_lea.vmem [#allocation48], 4
    %v3062 = vld [vmem:[%s3061] sm:$0xf]
    %v3064 = vsel %vm2663, %v3008, 0
    %3066 = vmatprep.subr.mxu0 0.0
    %3067 = vmatpush1.msra.mxu0 0.0
    %3068 = vmatprep.subr.mxu0 0.0
    %3069 = vmatpush1.msra.mxu0 0.0
    %3070 = vmatprep.subr.mxu0 0.0
    %3071 = vmatpush1.msra.mxu0 0.0
    %3072 = vmatprep.subr.mxu0 0.0
    %3073 = vmatpush1.msra.mxu0 0.0
    %3074 = vmatprep.subr.mxu0 0.0
    %3075 = vmatpush1.msra.mxu0 0.0
    %3076 = vmatprep.subr.mxu0 0.0
    %3077 = vmatpush1.msra.mxu0 0.0
    %3078 = vmatprep.subr.mxu0 0.0
    %3079 = vmatpush1.msra.mxu0 0.0
    %3080 = vmatprep.subr.mxu0 0.0
    %3081 = vmatpush1.msra.mxu0 0.0
    %3082 = vmatprep.subr.mxu0 0.0
    %3083 = vmatpush1.msra.mxu0 0.0
    %3084 = vmatprep.subr.mxu0 0.0
    %3085 = vmatpush1.msra.mxu0 0.0
    %3086 = vmatprep.subr.mxu0 %v3058
    %3087 = vmatpush1.msra.mxu0 %v3057
    %3088 = vmatprep.subr.mxu0 %v3054
    %3089 = vmatpush1.msra.mxu0 %v3053
    %3090 = vmatprep.subr.mxu0 %v3050
    %3091 = vmatpush1.msra.mxu0 %v3049
    %3092 = vmatprep.subr.mxu0 %v3046
    %3093 = vmatpush1.msra.mxu0 %v3045
    %3094 = vmatprep.subr.mxu0 %v3042
    %3095 = vmatpush1.msra.mxu0 %v3041
    %3096 = vmatprep.subr.mxu0 %v3038
    %3097 = vmatpush1.msra.mxu0 %v3037
    %3098 = vmatprep.subr.mxu0 0.0
    %3099 = vmatpush2.msra.mxu0 0.0
    %3100 = vmatprep.subr.mxu0 0.0
    %3101 = vmatpush2.msra.mxu0 0.0
    %3102 = vmatprep.subr.mxu0 0.0
    %3103 = vmatpush2.msra.mxu0 0.0
    %3104 = vmatprep.subr.mxu0 0.0
    %3105 = vmatpush2.msra.mxu0 0.0
    %3106 = vmatprep.subr.mxu0 0.0
    %3107 = vmatpush2.msra.mxu0 0.0
    %3108 = vmatprep.subr.mxu0 0.0
    %3109 = vmatpush2.msra.mxu0 0.0
    %3110 = vmatprep.subr.mxu0 0.0
    %3111 = vmatpush2.msra.mxu0 0.0
    %3112 = vmatprep.subr.mxu0 0.0
    %3113 = vmatpush2.msra.mxu0 0.0
    %3114 = vmatprep.subr.mxu0 0.0
    %3115 = vmatpush2.msra.mxu0 0.0
    %3116 = vmatprep.subr.mxu0 0.0
    %3117 = vmatpush2.msra.mxu0 0.0
    %3118 = vmatprep.subr.mxu0 0.0
    %3119 = vmatpush2.msra.mxu0 0.0
    %3120 = vmatprep.subr.mxu0 0.0
    %3121 = vmatpush2.msra.mxu0 0.0
    %3122 = vmatprep.subr.mxu0 0.0
    %3123 = vmatpush2.msra.mxu0 0.0
    %3124 = vmatprep.subr.mxu0 0.0
    %3125 = vmatpush2.msra.mxu0 0.0
    %3126 = vmatprep.subr.mxu0 0.0
    %3127 = vmatpush2.msra.mxu0 0.0
    %3128 = vmatprep.subr.mxu0 0.0
    %3129 = vmatpush2.msra.mxu0 0.0
    %3130 = vmatprep.mubr.f32.mxu0 0.0
    %3131 = vmatmul.mubr.f32.gmra.mxu0 %v3064
    %v3132 = vpop.f32.mrf.mxu0
    %v3133 = vadd.f32 0.0, %v3132
    %v3134 = vpop.f32.mrf.mxu0
    %v3135 = vadd.f32 0.0, %v3134
    %3136 = vdwg.mxu0
    %3137 = vmatprep.subr.mxu0 0.0
    %3138 = vmatpush1.msra.mxu0 0.0
    %3139 = vmatprep.subr.mxu0 0.0
    %3140 = vmatpush1.msra.mxu0 0.0
    %3141 = vmatprep.subr.mxu0 0.0
    %3142 = vmatpush1.msra.mxu0 0.0
    %3143 = vmatprep.subr.mxu0 0.0
    %3144 = vmatpush1.msra.mxu0 0.0
    %3145 = vmatprep.subr.mxu0 0.0
    %3146 = vmatpush1.msra.mxu0 0.0
    %3147 = vmatprep.subr.mxu0 0.0
    %3148 = vmatpush1.msra.mxu0 0.0
    %3149 = vmatprep.subr.mxu0 0.0
    %3150 = vmatpush1.msra.mxu0 0.0
    %3151 = vmatprep.subr.mxu0 0.0
    %3152 = vmatpush1.msra.mxu0 0.0
    %3153 = vmatprep.subr.mxu0 0.0
    %3154 = vmatpush1.msra.mxu0 0.0
    %3155 = vmatprep.subr.mxu0 0.0
    %3156 = vmatpush1.msra.mxu0 0.0
    %3157 = vmatprep.subr.mxu0 %v3060
    %3158 = vmatpush1.msra.mxu0 %v3059
    %3159 = vmatprep.subr.mxu0 %v3056
    %3160 = vmatpush1.msra.mxu0 %v3055
    %3161 = vmatprep.subr.mxu0 %v3052
    %3162 = vmatpush1.msra.mxu0 %v3051
    %3163 = vmatprep.subr.mxu0 %v3048
    %3164 = vmatpush1.msra.mxu0 %v3047
    %3165 = vmatprep.subr.mxu0 %v3044
    %3166 = vmatpush1.msra.mxu0 %v3043
    %3167 = vmatprep.subr.mxu0 %v3040
    %3168 = vmatpush1.msra.mxu0 %v3039
    %3169 = vmatprep.subr.mxu0 0.0
    %3170 = vmatpush2.msra.mxu0 0.0
    %3171 = vmatprep.subr.mxu0 0.0
    %3172 = vmatpush2.msra.mxu0 0.0
    %3173 = vmatprep.subr.mxu0 0.0
    %3174 = vmatpush2.msra.mxu0 0.0
    %3175 = vmatprep.subr.mxu0 0.0
    %3176 = vmatpush2.msra.mxu0 0.0
    %3177 = vmatprep.subr.mxu0 0.0
    %3178 = vmatpush2.msra.mxu0 0.0
    %3179 = vmatprep.subr.mxu0 0.0
    %3180 = vmatpush2.msra.mxu0 0.0
    %3181 = vmatprep.subr.mxu0 0.0
    %3182 = vmatpush2.msra.mxu0 0.0
    %3183 = vmatprep.subr.mxu0 0.0
    %3184 = vmatpush2.msra.mxu0 0.0
    %3185 = vmatprep.subr.mxu0 0.0
    %3186 = vmatpush2.msra.mxu0 0.0
    %3187 = vmatprep.subr.mxu0 0.0
    %3188 = vmatpush2.msra.mxu0 0.0
    %3189 = vmatprep.subr.mxu0 0.0
    %3190 = vmatpush2.msra.mxu0 0.0
    %3191 = vmatprep.subr.mxu0 0.0
    %3192 = vmatpush2.msra.mxu0 0.0
    %3193 = vmatprep.subr.mxu0 0.0
    %3194 = vmatpush2.msra.mxu0 0.0
    %3195 = vmatprep.subr.mxu0 0.0
    %3196 = vmatpush2.msra.mxu0 0.0
    %3197 = vmatprep.subr.mxu0 0.0
    %3198 = vmatpush2.msra.mxu0 0.0
    %3199 = vmatprep.subr.mxu0 0.0
    %3200 = vmatpush2.msra.mxu0 0.0
    %3201 = vmatprep.mubr.f32.mxu0 0.0
    %3202 = vmatmul.mubr.f32.gmra.mxu0 %v3064
    %v3203 = vpop.f32.mrf.mxu0
    %v3204 = vadd.f32 0.0, %v3203
    %v3205 = vpop.f32.mrf.mxu0
    %v3206 = vadd.f32 0.0, %v3205
    %3207 = vdwg.mxu0
    %v3209 = vsel %vm2663, %v3006, 0
    %3211 = vmatprep.subr.mxu0 0.0
    %3212 = vmatpush1.msra.mxu0 0.0
    %3213 = vmatprep.subr.mxu0 0.0
    %3214 = vmatpush1.msra.mxu0 0.0
    %3215 = vmatprep.subr.mxu0 0.0
    %3216 = vmatpush1.msra.mxu0 0.0
    %3217 = vmatprep.subr.mxu0 0.0
    %3218 = vmatpush1.msra.mxu0 0.0
    %3219 = vmatprep.subr.mxu0 0.0
    %3220 = vmatpush1.msra.mxu0 0.0
    %3221 = vmatprep.subr.mxu0 0.0
    %3222 = vmatpush1.msra.mxu0 0.0
    %3223 = vmatprep.subr.mxu0 0.0
    %3224 = vmatpush1.msra.mxu0 0.0
    %3225 = vmatprep.subr.mxu0 0.0
    %3226 = vmatpush1.msra.mxu0 0.0
    %3227 = vmatprep.subr.mxu0 0.0
    %3228 = vmatpush1.msra.mxu0 0.0
    %3229 = vmatprep.subr.mxu0 0.0
    %3230 = vmatpush1.msra.mxu0 0.0
    %3231 = vmatprep.subr.mxu0 %v3033
    %3232 = vmatpush1.msra.mxu0 %v3032
    %3233 = vmatprep.subr.mxu0 %v3029
    %3234 = vmatpush1.msra.mxu0 %v3028
    %3235 = vmatprep.subr.mxu0 %v3025
    %3236 = vmatpush1.msra.mxu0 %v3024
    %3237 = vmatprep.subr.mxu0 %v3021
    %3238 = vmatpush1.msra.mxu0 %v3020
    %3239 = vmatprep.subr.mxu0 %v3017
    %3240 = vmatpush1.msra.mxu0 %v3016
    %3241 = vmatprep.subr.mxu0 %v3013
    %3242 = vmatpush1.msra.mxu0 %v3012
    %3243 = vmatprep.subr.mxu0 0.0
    %3244 = vmatpush2.msra.mxu0 0.0
    %3245 = vmatprep.subr.mxu0 0.0
    %3246 = vmatpush2.msra.mxu0 0.0
    %3247 = vmatprep.subr.mxu0 0.0
    %3248 = vmatpush2.msra.mxu0 0.0
    %3249 = vmatprep.subr.mxu0 0.0
    %3250 = vmatpush2.msra.mxu0 0.0
    %3251 = vmatprep.subr.mxu0 0.0
    %3252 = vmatpush2.msra.mxu0 0.0
    %3253 = vmatprep.subr.mxu0 0.0
    %3254 = vmatpush2.msra.mxu0 0.0
    %3255 = vmatprep.subr.mxu0 0.0
    %3256 = vmatpush2.msra.mxu0 0.0
    %3257 = vmatprep.subr.mxu0 0.0
    %3258 = vmatpush2.msra.mxu0 0.0
    %3259 = vmatprep.subr.mxu0 0.0
    %3260 = vmatpush2.msra.mxu0 0.0
    %3261 = vmatprep.subr.mxu0 0.0
    %3262 = vmatpush2.msra.mxu0 0.0
    %3263 = vmatprep.subr.mxu0 0.0
    %3264 = vmatpush2.msra.mxu0 0.0
    %3265 = vmatprep.subr.mxu0 0.0
    %3266 = vmatpush2.msra.mxu0 0.0
    %3267 = vmatprep.subr.mxu0 0.0
    %3268 = vmatpush2.msra.mxu0 0.0
    %3269 = vmatprep.subr.mxu0 0.0
    %3270 = vmatpush2.msra.mxu0 0.0
    %3271 = vmatprep.subr.mxu0 0.0
    %3272 = vmatpush2.msra.mxu0 0.0
    %3273 = vmatprep.subr.mxu0 0.0
    %3274 = vmatpush2.msra.mxu0 0.0
    %3275 = vmatprep.mubr.f32.mxu0 0.0
    %3276 = vmatmul.mubr.f32.gmra.mxu0 %v3209
    %v3277 = vpop.f32.mrf.mxu0
    %v3278 = vadd.f32 %v3133, %v3277
    %v3279 = vpop.f32.mrf.mxu0
    %v3280 = vadd.f32 %v3135, %v3279
    %3281 = vdwg.mxu0
    %3282 = vmatprep.subr.mxu0 0.0
    %3283 = vmatpush1.msra.mxu0 0.0
    %3284 = vmatprep.subr.mxu0 0.0
    %3285 = vmatpush1.msra.mxu0 0.0
    %3286 = vmatprep.subr.mxu0 0.0
    %3287 = vmatpush1.msra.mxu0 0.0
    %3288 = vmatprep.subr.mxu0 0.0
    %3289 = vmatpush1.msra.mxu0 0.0
    %3290 = vmatprep.subr.mxu0 0.0
    %3291 = vmatpush1.msra.mxu0 0.0
    %3292 = vmatprep.subr.mxu0 0.0
    %3293 = vmatpush1.msra.mxu0 0.0
    %3294 = vmatprep.subr.mxu0 0.0
    %3295 = vmatpush1.msra.mxu0 0.0
    %3296 = vmatprep.subr.mxu0 0.0
    %3297 = vmatpush1.msra.mxu0 0.0
    %3298 = vmatprep.subr.mxu0 0.0
    %3299 = vmatpush1.msra.mxu0 0.0
    %3300 = vmatprep.subr.mxu0 0.0
    %3301 = vmatpush1.msra.mxu0 0.0
    %3302 = vmatprep.subr.mxu0 %v3035
    %3303 = vmatpush1.msra.mxu0 %v3034
    %3304 = vmatprep.subr.mxu0 %v3031
    %3305 = vmatpush1.msra.mxu0 %v3030
    %3306 = vmatprep.subr.mxu0 %v3027
    %3307 = vmatpush1.msra.mxu0 %v3026
    %3308 = vmatprep.subr.mxu0 %v3023
    %3309 = vmatpush1.msra.mxu0 %v3022
    %3310 = vmatprep.subr.mxu0 %v3019
    %3311 = vmatpush1.msra.mxu0 %v3018
    %3312 = vmatprep.subr.mxu0 %v3015
    %3313 = vmatpush1.msra.mxu0 %v3014
    %3314 = vmatprep.subr.mxu0 0.0
    %3315 = vmatpush2.msra.mxu0 0.0
    %3316 = vmatprep.subr.mxu0 0.0
    %3317 = vmatpush2.msra.mxu0 0.0
    %3318 = vmatprep.subr.mxu0 0.0
    %3319 = vmatpush2.msra.mxu0 0.0
    %3320 = vmatprep.subr.mxu0 0.0
    %3321 = vmatpush2.msra.mxu0 0.0
    %3322 = vmatprep.subr.mxu0 0.0
    %3323 = vmatpush2.msra.mxu0 0.0
    %3324 = vmatprep.subr.mxu0 0.0
    %3325 = vmatpush2.msra.mxu0 0.0
    %3326 = vmatprep.subr.mxu0 0.0
    %3327 = vmatpush2.msra.mxu0 0.0
    %3328 = vmatprep.subr.mxu0 0.0
    %3329 = vmatpush2.msra.mxu0 0.0
    %3330 = vmatprep.subr.mxu0 0.0
    %3331 = vmatpush2.msra.mxu0 0.0
    %3332 = vmatprep.subr.mxu0 0.0
    %3333 = vmatpush2.msra.mxu0 0.0
    %3334 = vmatprep.subr.mxu0 0.0
    %3335 = vmatpush2.msra.mxu0 0.0
    %3336 = vmatprep.subr.mxu0 0.0
    %3337 = vmatpush2.msra.mxu0 0.0
    %3338 = vmatprep.subr.mxu0 0.0
    %3339 = vmatpush2.msra.mxu0 0.0
    %3340 = vmatprep.subr.mxu0 0.0
    %3341 = vmatpush2.msra.mxu0 0.0
    %3342 = vmatprep.subr.mxu0 0.0
    %3343 = vmatpush2.msra.mxu0 0.0
    %3344 = vmatprep.subr.mxu0 0.0
    %3345 = vmatpush2.msra.mxu0 0.0
    %3346 = vmatprep.mubr.f32.mxu0 0.0
    %3347 = vmatmul.mubr.f32.gmra.mxu0 %v3209
    %v3348 = vpop.f32.mrf.mxu0
    %v3349 = vadd.f32 %v3204, %v3348
    %v3350 = vpop.f32.mrf.mxu0
    %v3351 = vadd.f32 %v3206, %v3350
    %3352 = vdwg.mxu0
    %v3354 = vlaneseq
    %v3355 = vshrl.u32 %v3354, 7
    %v3356 = vsub.s32 0, %v3355
    %v3357 = vrot.slane %v3062, %v3356
    %v3358 = vlaneseq
    %v3359 = vshrl.u32 %v3358, 7
    %v3360 = vsub.s32 1, %v3359
    %v3361 = vrot.slane %v3062, %v3360
    %v3362 = vlaneseq
    %v3363 = vshrl.u32 %v3362, 7
    %v3364 = vsub.s32 2, %v3363
    %v3365 = vrot.slane %v3062, %v3364
    %v3366 = vlaneseq
    %v3367 = vshrl.u32 %v3366, 7
    %v3368 = vsub.s32 3, %v3367
    %v3369 = vrot.slane %v3062, %v3368
    %v3374 = vadd.f32 %v3278, %v3357
    %v3375 = vadd.f32 %v3280, %v3361
    %v3376 = vadd.f32 %v3349, %v3365
    %v3377 = vadd.f32 %v3351, %v3369
    %v3378 = vxor.u32 %v3374, 2147483648
    %v3379 = vmul.f32 %v3378, 1.442695
    %v3380 = vpow.pop %v3379
    %v3381 = vadd.f32 %v3380, 1.0
    %v3382 = vrcp.pop %v3381
    %v3383 = vmul.f32 1.0, %v3382
    %v3384 = vxor.u32 %v3375, 2147483648
    %v3385 = vmul.f32 %v3384, 1.442695
    %v3386 = vpow.pop %v3385
    %v3387 = vadd.f32 %v3386, 1.0
    %v3388 = vrcp.pop %v3387
    %v3389 = vmul.f32 1.0, %v3388
    %v3390 = vtanh.pop %v3376
    %v3391 = vxor.u32 %v3377, 2147483648
    %v3392 = vmul.f32 %v3391, 1.442695
    %v3393 = vpow.pop %v3392
    %v3394 = vadd.f32 %v3393, 1.0
    %v3395 = vrcp.pop %v3394
    %v3396 = vmul.f32 1.0, %v3395
    %v3397 = vmul.f32 %v3389, %v3010
    %v3398 = vmul.f32 %v3383, %v3390
    %v3399 = vadd.f32 %v3397, %v3398
    %v3400 = vtanh.pop %v3399
    %v3401 = vmul.f32 %v3396, %v3400
    %s3402 = scalar_lea.vmem [#allocation60], 2
    %3403 = vst.msk [vmem:[%s3402] sm:$0x3] %vm3003, %v3401
    %s3404 = scalar_lea.vmem [#allocation62], 2
    %3405 = vst.msk [vmem:[%s3404] sm:$0x3] %vm3003, %v3399
    %v3406 = vadd.f32 %v3006, %v3401
    %s3407 = scalar_lea.vmem [#allocation14], 4
    %v3408 = vld [vmem:[%s3407] sm:$0x3]
    %s3409 = scalar_lea.vmem [#allocation15], 4
    %v3410 = vld [vmem:[%s3409] sm:$0x3]
    %s3411 = scalar_lea.vmem %s75, 384
    %v3412 = vld [vmem:[%s3411] sm:$0xff]
    %v3413 = vld [vmem:[%s3411 + $0x8] sm:$0xff]
    %v3414 = vld [vmem:[%s3411 + $0x10] sm:$0xff]
    %v3415 = vld [vmem:[%s3411 + $0x18] sm:$0xff]
    %v3416 = vld [vmem:[%s3411 + $0x20] sm:$0xff]
    %v3417 = vld [vmem:[%s3411 + $0x28] sm:$0xff]
    %v3418 = vld [vmem:[%s3411 + $0x30] sm:$0xff]
    %v3419 = vld [vmem:[%s3411 + $0x38] sm:$0xff]
    %v3420 = vld [vmem:[%s3411 + $0x40] sm:$0xff]
    %v3421 = vld [vmem:[%s3411 + $0x48] sm:$0xff]
    %v3422 = vld [vmem:[%s3411 + $0x50] sm:$0xff]
    %v3423 = vld [vmem:[%s3411 + $0x58] sm:$0xff]
    %v3424 = vld [vmem:[%s3411 + $0x60] sm:$0xff]
    %v3425 = vld [vmem:[%s3411 + $0x68] sm:$0xff]
    %v3426 = vld [vmem:[%s3411 + $0x70] sm:$0xff]
    %v3427 = vld [vmem:[%s3411 + $0x78] sm:$0xff]
    %v3428 = vld [vmem:[%s3411 + $0x80] sm:$0xff]
    %v3429 = vld [vmem:[%s3411 + $0x88] sm:$0xff]
    %v3430 = vld [vmem:[%s3411 + $0x90] sm:$0xff]
    %v3431 = vld [vmem:[%s3411 + $0x98] sm:$0xff]
    %v3432 = vld [vmem:[%s3411 + $0xa0] sm:$0xff]
    %v3433 = vld [vmem:[%s3411 + $0xa8] sm:$0xff]
    %v3434 = vld [vmem:[%s3411 + $0xb0] sm:$0xff]
    %v3435 = vld [vmem:[%s3411 + $0xb8] sm:$0xff]
    %s3436 = scalar_lea.vmem [#allocation47], 384
    %v3437 = vld [vmem:[%s3436] sm:$0xff]
    %v3438 = vld [vmem:[%s3436 + $0x8] sm:$0xff]
    %v3439 = vld [vmem:[%s3436 + $0x10] sm:$0xff]
    %v3440 = vld [vmem:[%s3436 + $0x18] sm:$0xff]
    %v3441 = vld [vmem:[%s3436 + $0x20] sm:$0xff]
    %v3442 = vld [vmem:[%s3436 + $0x28] sm:$0xff]
    %v3443 = vld [vmem:[%s3436 + $0x30] sm:$0xff]
    %v3444 = vld [vmem:[%s3436 + $0x38] sm:$0xff]
    %v3445 = vld [vmem:[%s3436 + $0x40] sm:$0xff]
    %v3446 = vld [vmem:[%s3436 + $0x48] sm:$0xff]
    %v3447 = vld [vmem:[%s3436 + $0x50] sm:$0xff]
    %v3448 = vld [vmem:[%s3436 + $0x58] sm:$0xff]
    %v3449 = vld [vmem:[%s3436 + $0x60] sm:$0xff]
    %v3450 = vld [vmem:[%s3436 + $0x68] sm:$0xff]
    %v3451 = vld [vmem:[%s3436 + $0x70] sm:$0xff]
    %v3452 = vld [vmem:[%s3436 + $0x78] sm:$0xff]
    %v3453 = vld [vmem:[%s3436 + $0x80] sm:$0xff]
    %v3454 = vld [vmem:[%s3436 + $0x88] sm:$0xff]
    %v3455 = vld [vmem:[%s3436 + $0x90] sm:$0xff]
    %v3456 = vld [vmem:[%s3436 + $0x98] sm:$0xff]
    %v3457 = vld [vmem:[%s3436 + $0xa0] sm:$0xff]
    %v3458 = vld [vmem:[%s3436 + $0xa8] sm:$0xff]
    %v3459 = vld [vmem:[%s3436 + $0xb0] sm:$0xff]
    %v3460 = vld [vmem:[%s3436 + $0xb8] sm:$0xff]
    %s3461 = scalar_lea.vmem [#allocation48], 8
    %v3462 = vld [vmem:[%s3461] sm:$0xf]
    %v3464 = vsel %vm2663, %v3408, 0
    %3466 = vmatprep.subr.mxu0 0.0
    %3467 = vmatpush1.msra.mxu0 0.0
    %3468 = vmatprep.subr.mxu0 0.0
    %3469 = vmatpush1.msra.mxu0 0.0
    %3470 = vmatprep.subr.mxu0 0.0
    %3471 = vmatpush1.msra.mxu0 0.0
    %3472 = vmatprep.subr.mxu0 0.0
    %3473 = vmatpush1.msra.mxu0 0.0
    %3474 = vmatprep.subr.mxu0 0.0
    %3475 = vmatpush1.msra.mxu0 0.0
    %3476 = vmatprep.subr.mxu0 0.0
    %3477 = vmatpush1.msra.mxu0 0.0
    %3478 = vmatprep.subr.mxu0 0.0
    %3479 = vmatpush1.msra.mxu0 0.0
    %3480 = vmatprep.subr.mxu0 0.0
    %3481 = vmatpush1.msra.mxu0 0.0
    %3482 = vmatprep.subr.mxu0 0.0
    %3483 = vmatpush1.msra.mxu0 0.0
    %3484 = vmatprep.subr.mxu0 0.0
    %3485 = vmatpush1.msra.mxu0 0.0
    %3486 = vmatprep.subr.mxu0 %v3458
    %3487 = vmatpush1.msra.mxu0 %v3457
    %3488 = vmatprep.subr.mxu0 %v3454
    %3489 = vmatpush1.msra.mxu0 %v3453
    %3490 = vmatprep.subr.mxu0 %v3450
    %3491 = vmatpush1.msra.mxu0 %v3449
    %3492 = vmatprep.subr.mxu0 %v3446
    %3493 = vmatpush1.msra.mxu0 %v3445
    %3494 = vmatprep.subr.mxu0 %v3442
    %3495 = vmatpush1.msra.mxu0 %v3441
    %3496 = vmatprep.subr.mxu0 %v3438
    %3497 = vmatpush1.msra.mxu0 %v3437
    %3498 = vmatprep.subr.mxu0 0.0
    %3499 = vmatpush2.msra.mxu0 0.0
    %3500 = vmatprep.subr.mxu0 0.0
    %3501 = vmatpush2.msra.mxu0 0.0
    %3502 = vmatprep.subr.mxu0 0.0
    %3503 = vmatpush2.msra.mxu0 0.0
    %3504 = vmatprep.subr.mxu0 0.0
    %3505 = vmatpush2.msra.mxu0 0.0
    %3506 = vmatprep.subr.mxu0 0.0
    %3507 = vmatpush2.msra.mxu0 0.0
    %3508 = vmatprep.subr.mxu0 0.0
    %3509 = vmatpush2.msra.mxu0 0.0
    %3510 = vmatprep.subr.mxu0 0.0
    %3511 = vmatpush2.msra.mxu0 0.0
    %3512 = vmatprep.subr.mxu0 0.0
    %3513 = vmatpush2.msra.mxu0 0.0
    %3514 = vmatprep.subr.mxu0 0.0
    %3515 = vmatpush2.msra.mxu0 0.0
    %3516 = vmatprep.subr.mxu0 0.0
    %3517 = vmatpush2.msra.mxu0 0.0
    %3518 = vmatprep.subr.mxu0 0.0
    %3519 = vmatpush2.msra.mxu0 0.0
    %3520 = vmatprep.subr.mxu0 0.0
    %3521 = vmatpush2.msra.mxu0 0.0
    %3522 = vmatprep.subr.mxu0 0.0
    %3523 = vmatpush2.msra.mxu0 0.0
    %3524 = vmatprep.subr.mxu0 0.0
    %3525 = vmatpush2.msra.mxu0 0.0
    %3526 = vmatprep.subr.mxu0 0.0
    %3527 = vmatpush2.msra.mxu0 0.0
    %3528 = vmatprep.subr.mxu0 0.0
    %3529 = vmatpush2.msra.mxu0 0.0
    %3530 = vmatprep.mubr.f32.mxu0 0.0
    %3531 = vmatmul.mubr.f32.gmra.mxu0 %v3464
    %v3532 = vpop.f32.mrf.mxu0
    %v3533 = vadd.f32 0.0, %v3532
    %v3534 = vpop.f32.mrf.mxu0
    %v3535 = vadd.f32 0.0, %v3534
    %3536 = vdwg.mxu0
    %3537 = vmatprep.subr.mxu0 0.0
    %3538 = vmatpush1.msra.mxu0 0.0
    %3539 = vmatprep.subr.mxu0 0.0
    %3540 = vmatpush1.msra.mxu0 0.0
    %3541 = vmatprep.subr.mxu0 0.0
    %3542 = vmatpush1.msra.mxu0 0.0
    %3543 = vmatprep.subr.mxu0 0.0
    %3544 = vmatpush1.msra.mxu0 0.0
    %3545 = vmatprep.subr.mxu0 0.0
    %3546 = vmatpush1.msra.mxu0 0.0
    %3547 = vmatprep.subr.mxu0 0.0
    %3548 = vmatpush1.msra.mxu0 0.0
    %3549 = vmatprep.subr.mxu0 0.0
    %3550 = vmatpush1.msra.mxu0 0.0
    %3551 = vmatprep.subr.mxu0 0.0
    %3552 = vmatpush1.msra.mxu0 0.0
    %3553 = vmatprep.subr.mxu0 0.0
    %3554 = vmatpush1.msra.mxu0 0.0
    %3555 = vmatprep.subr.mxu0 0.0
    %3556 = vmatpush1.msra.mxu0 0.0
    %3557 = vmatprep.subr.mxu0 %v3460
    %3558 = vmatpush1.msra.mxu0 %v3459
    %3559 = vmatprep.subr.mxu0 %v3456
    %3560 = vmatpush1.msra.mxu0 %v3455
    %3561 = vmatprep.subr.mxu0 %v3452
    %3562 = vmatpush1.msra.mxu0 %v3451
    %3563 = vmatprep.subr.mxu0 %v3448
    %3564 = vmatpush1.msra.mxu0 %v3447
    %3565 = vmatprep.subr.mxu0 %v3444
    %3566 = vmatpush1.msra.mxu0 %v3443
    %3567 = vmatprep.subr.mxu0 %v3440
    %3568 = vmatpush1.msra.mxu0 %v3439
    %3569 = vmatprep.subr.mxu0 0.0
    %3570 = vmatpush2.msra.mxu0 0.0
    %3571 = vmatprep.subr.mxu0 0.0
    %3572 = vmatpush2.msra.mxu0 0.0
    %3573 = vmatprep.subr.mxu0 0.0
    %3574 = vmatpush2.msra.mxu0 0.0
    %3575 = vmatprep.subr.mxu0 0.0
    %3576 = vmatpush2.msra.mxu0 0.0
    %3577 = vmatprep.subr.mxu0 0.0
    %3578 = vmatpush2.msra.mxu0 0.0
    %3579 = vmatprep.subr.mxu0 0.0
    %3580 = vmatpush2.msra.mxu0 0.0
    %3581 = vmatprep.subr.mxu0 0.0
    %3582 = vmatpush2.msra.mxu0 0.0
    %3583 = vmatprep.subr.mxu0 0.0
    %3584 = vmatpush2.msra.mxu0 0.0
    %3585 = vmatprep.subr.mxu0 0.0
    %3586 = vmatpush2.msra.mxu0 0.0
    %3587 = vmatprep.subr.mxu0 0.0
    %3588 = vmatpush2.msra.mxu0 0.0
    %3589 = vmatprep.subr.mxu0 0.0
    %3590 = vmatpush2.msra.mxu0 0.0
    %3591 = vmatprep.subr.mxu0 0.0
    %3592 = vmatpush2.msra.mxu0 0.0
    %3593 = vmatprep.subr.mxu0 0.0
    %3594 = vmatpush2.msra.mxu0 0.0
    %3595 = vmatprep.subr.mxu0 0.0
    %3596 = vmatpush2.msra.mxu0 0.0
    %3597 = vmatprep.subr.mxu0 0.0
    %3598 = vmatpush2.msra.mxu0 0.0
    %3599 = vmatprep.subr.mxu0 0.0
    %3600 = vmatpush2.msra.mxu0 0.0
    %3601 = vmatprep.mubr.f32.mxu0 0.0
    %3602 = vmatmul.mubr.f32.gmra.mxu0 %v3464
    %v3603 = vpop.f32.mrf.mxu0
    %v3604 = vadd.f32 0.0, %v3603
    %v3605 = vpop.f32.mrf.mxu0
    %v3606 = vadd.f32 0.0, %v3605
    %3607 = vdwg.mxu0
    %v3609 = vsel %vm2663, %v3406, 0
    %3611 = vmatprep.subr.mxu0 0.0
    %3612 = vmatpush1.msra.mxu0 0.0
    %3613 = vmatprep.subr.mxu0 0.0
    %3614 = vmatpush1.msra.mxu0 0.0
    %3615 = vmatprep.subr.mxu0 0.0
    %3616 = vmatpush1.msra.mxu0 0.0
    %3617 = vmatprep.subr.mxu0 0.0
    %3618 = vmatpush1.msra.mxu0 0.0
    %3619 = vmatprep.subr.mxu0 0.0
    %3620 = vmatpush1.msra.mxu0 0.0
    %3621 = vmatprep.subr.mxu0 0.0
    %3622 = vmatpush1.msra.mxu0 0.0
    %3623 = vmatprep.subr.mxu0 0.0
    %3624 = vmatpush1.msra.mxu0 0.0
    %3625 = vmatprep.subr.mxu0 0.0
    %3626 = vmatpush1.msra.mxu0 0.0
    %3627 = vmatprep.subr.mxu0 0.0
    %3628 = vmatpush1.msra.mxu0 0.0
    %3629 = vmatprep.subr.mxu0 0.0
    %3630 = vmatpush1.msra.mxu0 0.0
    %3631 = vmatprep.subr.mxu0 %v3433
    %3632 = vmatpush1.msra.mxu0 %v3432
    %3633 = vmatprep.subr.mxu0 %v3429
    %3634 = vmatpush1.msra.mxu0 %v3428
    %3635 = vmatprep.subr.mxu0 %v3425
    %3636 = vmatpush1.msra.mxu0 %v3424
    %3637 = vmatprep.subr.mxu0 %v3421
    %3638 = vmatpush1.msra.mxu0 %v3420
    %3639 = vmatprep.subr.mxu0 %v3417
    %3640 = vmatpush1.msra.mxu0 %v3416
    %3641 = vmatprep.subr.mxu0 %v3413
    %3642 = vmatpush1.msra.mxu0 %v3412
    %3643 = vmatprep.subr.mxu0 0.0
    %3644 = vmatpush2.msra.mxu0 0.0
    %3645 = vmatprep.subr.mxu0 0.0
    %3646 = vmatpush2.msra.mxu0 0.0
    %3647 = vmatprep.subr.mxu0 0.0
    %3648 = vmatpush2.msra.mxu0 0.0
    %3649 = vmatprep.subr.mxu0 0.0
    %3650 = vmatpush2.msra.mxu0 0.0
    %3651 = vmatprep.subr.mxu0 0.0
    %3652 = vmatpush2.msra.mxu0 0.0
    %3653 = vmatprep.subr.mxu0 0.0
    %3654 = vmatpush2.msra.mxu0 0.0
    %3655 = vmatprep.subr.mxu0 0.0
    %3656 = vmatpush2.msra.mxu0 0.0
    %3657 = vmatprep.subr.mxu0 0.0
    %3658 = vmatpush2.msra.mxu0 0.0
    %3659 = vmatprep.subr.mxu0 0.0
    %3660 = vmatpush2.msra.mxu0 0.0
    %3661 = vmatprep.subr.mxu0 0.0
    %3662 = vmatpush2.msra.mxu0 0.0
    %3663 = vmatprep.subr.mxu0 0.0
    %3664 = vmatpush2.msra.mxu0 0.0
    %3665 = vmatprep.subr.mxu0 0.0
    %3666 = vmatpush2.msra.mxu0 0.0
    %3667 = vmatprep.subr.mxu0 0.0
    %3668 = vmatpush2.msra.mxu0 0.0
    %3669 = vmatprep.subr.mxu0 0.0
    %3670 = vmatpush2.msra.mxu0 0.0
    %3671 = vmatprep.subr.mxu0 0.0
    %3672 = vmatpush2.msra.mxu0 0.0
    %3673 = vmatprep.subr.mxu0 0.0
    %3674 = vmatpush2.msra.mxu0 0.0
    %3675 = vmatprep.mubr.f32.mxu0 0.0
    %3676 = vmatmul.mubr.f32.gmra.mxu0 %v3609
    %v3677 = vpop.f32.mrf.mxu0
    %v3678 = vadd.f32 %v3533, %v3677
    %v3679 = vpop.f32.mrf.mxu0
    %v3680 = vadd.f32 %v3535, %v3679
    %3681 = vdwg.mxu0
    %3682 = vmatprep.subr.mxu0 0.0
    %3683 = vmatpush1.msra.mxu0 0.0
    %3684 = vmatprep.subr.mxu0 0.0
    %3685 = vmatpush1.msra.mxu0 0.0
    %3686 = vmatprep.subr.mxu0 0.0
    %3687 = vmatpush1.msra.mxu0 0.0
    %3688 = vmatprep.subr.mxu0 0.0
    %3689 = vmatpush1.msra.mxu0 0.0
    %3690 = vmatprep.subr.mxu0 0.0
    %3691 = vmatpush1.msra.mxu0 0.0
    %3692 = vmatprep.subr.mxu0 0.0
    %3693 = vmatpush1.msra.mxu0 0.0
    %3694 = vmatprep.subr.mxu0 0.0
    %3695 = vmatpush1.msra.mxu0 0.0
    %3696 = vmatprep.subr.mxu0 0.0
    %3697 = vmatpush1.msra.mxu0 0.0
    %3698 = vmatprep.subr.mxu0 0.0
    %3699 = vmatpush1.msra.mxu0 0.0
    %3700 = vmatprep.subr.mxu0 0.0
    %3701 = vmatpush1.msra.mxu0 0.0
    %3702 = vmatprep.subr.mxu0 %v3435
    %3703 = vmatpush1.msra.mxu0 %v3434
    %3704 = vmatprep.subr.mxu0 %v3431
    %3705 = vmatpush1.msra.mxu0 %v3430
    %3706 = vmatprep.subr.mxu0 %v3427
    %3707 = vmatpush1.msra.mxu0 %v3426
    %3708 = vmatprep.subr.mxu0 %v3423
    %3709 = vmatpush1.msra.mxu0 %v3422
    %3710 = vmatprep.subr.mxu0 %v3419
    %3711 = vmatpush1.msra.mxu0 %v3418
    %3712 = vmatprep.subr.mxu0 %v3415
    %3713 = vmatpush1.msra.mxu0 %v3414
    %3714 = vmatprep.subr.mxu0 0.0
    %3715 = vmatpush2.msra.mxu0 0.0
    %3716 = vmatprep.subr.mxu0 0.0
    %3717 = vmatpush2.msra.mxu0 0.0
    %3718 = vmatprep.subr.mxu0 0.0
    %3719 = vmatpush2.msra.mxu0 0.0
    %3720 = vmatprep.subr.mxu0 0.0
    %3721 = vmatpush2.msra.mxu0 0.0
    %3722 = vmatprep.subr.mxu0 0.0
    %3723 = vmatpush2.msra.mxu0 0.0
    %3724 = vmatprep.subr.mxu0 0.0
    %3725 = vmatpush2.msra.mxu0 0.0
    %3726 = vmatprep.subr.mxu0 0.0
    %3727 = vmatpush2.msra.mxu0 0.0
    %3728 = vmatprep.subr.mxu0 0.0
    %3729 = vmatpush2.msra.mxu0 0.0
    %3730 = vmatprep.subr.mxu0 0.0
    %3731 = vmatpush2.msra.mxu0 0.0
    %3732 = vmatprep.subr.mxu0 0.0
    %3733 = vmatpush2.msra.mxu0 0.0
    %3734 = vmatprep.subr.mxu0 0.0
    %3735 = vmatpush2.msra.mxu0 0.0
    %3736 = vmatprep.subr.mxu0 0.0
    %3737 = vmatpush2.msra.mxu0 0.0
    %3738 = vmatprep.subr.mxu0 0.0
    %3739 = vmatpush2.msra.mxu0 0.0
    %3740 = vmatprep.subr.mxu0 0.0
    %3741 = vmatpush2.msra.mxu0 0.0
    %3742 = vmatprep.subr.mxu0 0.0
    %3743 = vmatpush2.msra.mxu0 0.0
    %3744 = vmatprep.subr.mxu0 0.0
    %3745 = vmatpush2.msra.mxu0 0.0
    %3746 = vmatprep.mubr.f32.mxu0 0.0
    %3747 = vmatmul.mubr.f32.gmra.mxu0 %v3609
    %v3748 = vpop.f32.mrf.mxu0
    %v3749 = vadd.f32 %v3604, %v3748
    %v3750 = vpop.f32.mrf.mxu0
    %v3751 = vadd.f32 %v3606, %v3750
    %3752 = vdwg.mxu0
    %v3754 = vlaneseq
    %v3755 = vshrl.u32 %v3754, 7
    %v3756 = vsub.s32 0, %v3755
    %v3757 = vrot.slane %v3462, %v3756
    %v3758 = vlaneseq
    %v3759 = vshrl.u32 %v3758, 7
    %v3760 = vsub.s32 1, %v3759
    %v3761 = vrot.slane %v3462, %v3760
    %v3762 = vlaneseq
    %v3763 = vshrl.u32 %v3762, 7
    %v3764 = vsub.s32 2, %v3763
    %v3765 = vrot.slane %v3462, %v3764
    %v3766 = vlaneseq
    %v3767 = vshrl.u32 %v3766, 7
    %v3768 = vsub.s32 3, %v3767
    %v3769 = vrot.slane %v3462, %v3768
    %v3774 = vadd.f32 %v3678, %v3757
    %v3775 = vadd.f32 %v3680, %v3761
    %v3776 = vadd.f32 %v3749, %v3765
    %v3777 = vadd.f32 %v3751, %v3769
    %v3778 = vxor.u32 %v3774, 2147483648
    %v3779 = vmul.f32 %v3778, 1.442695
    %v3780 = vpow.pop %v3779
    %v3781 = vadd.f32 %v3780, 1.0
    %v3782 = vrcp.pop %v3781
    %v3783 = vmul.f32 1.0, %v3782
    %v3784 = vxor.u32 %v3775, 2147483648
    %v3785 = vmul.f32 %v3784, 1.442695
    %v3786 = vpow.pop %v3785
    %v3787 = vadd.f32 %v3786, 1.0
    %v3788 = vrcp.pop %v3787
    %v3789 = vmul.f32 1.0, %v3788
    %v3790 = vtanh.pop %v3776
    %v3791 = vxor.u32 %v3777, 2147483648
    %v3792 = vmul.f32 %v3791, 1.442695
    %v3793 = vpow.pop %v3792
    %v3794 = vadd.f32 %v3793, 1.0
    %v3795 = vrcp.pop %v3794
    %v3796 = vmul.f32 1.0, %v3795
    %v3797 = vmul.f32 %v3789, %v3410
    %v3798 = vmul.f32 %v3783, %v3790
    %v3799 = vadd.f32 %v3797, %v3798
    %v3800 = vtanh.pop %v3799
    %v3801 = vmul.f32 %v3796, %v3800
    %s3802 = scalar_lea.vmem [#allocation60], 4
    %3803 = vst.msk [vmem:[%s3802] sm:$0x3] %vm3003, %v3801
    %s3804 = scalar_lea.vmem [#allocation62], 4
    %3805 = vst.msk [vmem:[%s3804] sm:$0x3] %vm3003, %v3799
    %v3806 = vadd.f32 %v3406, %v3801
    %s3807 = scalar_lea.vmem [#allocation14], 6
    %v3808 = vld [vmem:[%s3807] sm:$0x3]
    %s3809 = scalar_lea.vmem [#allocation15], 6
    %v3810 = vld [vmem:[%s3809] sm:$0x3]
    %s3811 = scalar_lea.vmem %s75, 576
    %v3812 = vld [vmem:[%s3811] sm:$0xff]
    %v3813 = vld [vmem:[%s3811 + $0x8] sm:$0xff]
    %v3814 = vld [vmem:[%s3811 + $0x10] sm:$0xff]
    %v3815 = vld [vmem:[%s3811 + $0x18] sm:$0xff]
    %v3816 = vld [vmem:[%s3811 + $0x20] sm:$0xff]
    %v3817 = vld [vmem:[%s3811 + $0x28] sm:$0xff]
    %v3818 = vld [vmem:[%s3811 + $0x30] sm:$0xff]
    %v3819 = vld [vmem:[%s3811 + $0x38] sm:$0xff]
    %v3820 = vld [vmem:[%s3811 + $0x40] sm:$0xff]
    %v3821 = vld [vmem:[%s3811 + $0x48] sm:$0xff]
    %v3822 = vld [vmem:[%s3811 + $0x50] sm:$0xff]
    %v3823 = vld [vmem:[%s3811 + $0x58] sm:$0xff]
    %v3824 = vld [vmem:[%s3811 + $0x60] sm:$0xff]
    %v3825 = vld [vmem:[%s3811 + $0x68] sm:$0xff]
    %v3826 = vld [vmem:[%s3811 + $0x70] sm:$0xff]
    %v3827 = vld [vmem:[%s3811 + $0x78] sm:$0xff]
    %v3828 = vld [vmem:[%s3811 + $0x80] sm:$0xff]
    %v3829 = vld [vmem:[%s3811 + $0x88] sm:$0xff]
    %v3830 = vld [vmem:[%s3811 + $0x90] sm:$0xff]
    %v3831 = vld [vmem:[%s3811 + $0x98] sm:$0xff]
    %v3832 = vld [vmem:[%s3811 + $0xa0] sm:$0xff]
    %v3833 = vld [vmem:[%s3811 + $0xa8] sm:$0xff]
    %v3834 = vld [vmem:[%s3811 + $0xb0] sm:$0xff]
    %v3835 = vld [vmem:[%s3811 + $0xb8] sm:$0xff]
    %s3836 = scalar_lea.vmem [#allocation47], 576
    %v3837 = vld [vmem:[%s3836] sm:$0xff]
    %v3838 = vld [vmem:[%s3836 + $0x8] sm:$0xff]
    %v3839 = vld [vmem:[%s3836 + $0x10] sm:$0xff]
    %v3840 = vld [vmem:[%s3836 + $0x18] sm:$0xff]
    %v3841 = vld [vmem:[%s3836 + $0x20] sm:$0xff]
    %v3842 = vld [vmem:[%s3836 + $0x28] sm:$0xff]
    %v3843 = vld [vmem:[%s3836 + $0x30] sm:$0xff]
    %v3844 = vld [vmem:[%s3836 + $0x38] sm:$0xff]
    %v3845 = vld [vmem:[%s3836 + $0x40] sm:$0xff]
    %v3846 = vld [vmem:[%s3836 + $0x48] sm:$0xff]
    %v3847 = vld [vmem:[%s3836 + $0x50] sm:$0xff]
    %v3848 = vld [vmem:[%s3836 + $0x58] sm:$0xff]
    %v3849 = vld [vmem:[%s3836 + $0x60] sm:$0xff]
    %v3850 = vld [vmem:[%s3836 + $0x68] sm:$0xff]
    %v3851 = vld [vmem:[%s3836 + $0x70] sm:$0xff]
    %v3852 = vld [vmem:[%s3836 + $0x78] sm:$0xff]
    %v3853 = vld [vmem:[%s3836 + $0x80] sm:$0xff]
    %v3854 = vld [vmem:[%s3836 + $0x88] sm:$0xff]
    %v3855 = vld [vmem:[%s3836 + $0x90] sm:$0xff]
    %v3856 = vld [vmem:[%s3836 + $0x98] sm:$0xff]
    %v3857 = vld [vmem:[%s3836 + $0xa0] sm:$0xff]
    %v3858 = vld [vmem:[%s3836 + $0xa8] sm:$0xff]
    %v3859 = vld [vmem:[%s3836 + $0xb0] sm:$0xff]
    %v3860 = vld [vmem:[%s3836 + $0xb8] sm:$0xff]
    %s3861 = scalar_lea.vmem [#allocation48], 12
    %v3862 = vld [vmem:[%s3861] sm:$0xf]
    %v3864 = vsel %vm2663, %v3808, 0
    %3866 = vmatprep.subr.mxu0 0.0
    %3867 = vmatpush1.msra.mxu0 0.0
    %3868 = vmatprep.subr.mxu0 0.0
    %3869 = vmatpush1.msra.mxu0 0.0
    %3870 = vmatprep.subr.mxu0 0.0
    %3871 = vmatpush1.msra.mxu0 0.0
    %3872 = vmatprep.subr.mxu0 0.0
    %3873 = vmatpush1.msra.mxu0 0.0
    %3874 = vmatprep.subr.mxu0 0.0
    %3875 = vmatpush1.msra.mxu0 0.0
    %3876 = vmatprep.subr.mxu0 0.0
    %3877 = vmatpush1.msra.mxu0 0.0
    %3878 = vmatprep.subr.mxu0 0.0
    %3879 = vmatpush1.msra.mxu0 0.0
    %3880 = vmatprep.subr.mxu0 0.0
    %3881 = vmatpush1.msra.mxu0 0.0
    %3882 = vmatprep.subr.mxu0 0.0
    %3883 = vmatpush1.msra.mxu0 0.0
    %3884 = vmatprep.subr.mxu0 0.0
    %3885 = vmatpush1.msra.mxu0 0.0
    %3886 = vmatprep.subr.mxu0 %v3858
    %3887 = vmatpush1.msra.mxu0 %v3857
    %3888 = vmatprep.subr.mxu0 %v3854
    %3889 = vmatpush1.msra.mxu0 %v3853
    %3890 = vmatprep.subr.mxu0 %v3850
    %3891 = vmatpush1.msra.mxu0 %v3849
    %3892 = vmatprep.subr.mxu0 %v3846
    %3893 = vmatpush1.msra.mxu0 %v3845
    %3894 = vmatprep.subr.mxu0 %v3842
    %3895 = vmatpush1.msra.mxu0 %v3841
    %3896 = vmatprep.subr.mxu0 %v3838
    %3897 = vmatpush1.msra.mxu0 %v3837
    %3898 = vmatprep.subr.mxu0 0.0
    %3899 = vmatpush2.msra.mxu0 0.0
    %3900 = vmatprep.subr.mxu0 0.0
    %3901 = vmatpush2.msra.mxu0 0.0
    %3902 = vmatprep.subr.mxu0 0.0
    %3903 = vmatpush2.msra.mxu0 0.0
    %3904 = vmatprep.subr.mxu0 0.0
    %3905 = vmatpush2.msra.mxu0 0.0
    %3906 = vmatprep.subr.mxu0 0.0
    %3907 = vmatpush2.msra.mxu0 0.0
    %3908 = vmatprep.subr.mxu0 0.0
    %3909 = vmatpush2.msra.mxu0 0.0
    %3910 = vmatprep.subr.mxu0 0.0
    %3911 = vmatpush2.msra.mxu0 0.0
    %3912 = vmatprep.subr.mxu0 0.0
    %3913 = vmatpush2.msra.mxu0 0.0
    %3914 = vmatprep.subr.mxu0 0.0
    %3915 = vmatpush2.msra.mxu0 0.0
    %3916 = vmatprep.subr.mxu0 0.0
    %3917 = vmatpush2.msra.mxu0 0.0
    %3918 = vmatprep.subr.mxu0 0.0
    %3919 = vmatpush2.msra.mxu0 0.0
    %3920 = vmatprep.subr.mxu0 0.0
    %3921 = vmatpush2.msra.mxu0 0.0
    %3922 = vmatprep.subr.mxu0 0.0
    %3923 = vmatpush2.msra.mxu0 0.0
    %3924 = vmatprep.subr.mxu0 0.0
    %3925 = vmatpush2.msra.mxu0 0.0
    %3926 = vmatprep.subr.mxu0 0.0
    %3927 = vmatpush2.msra.mxu0 0.0
    %3928 = vmatprep.subr.mxu0 0.0
    %3929 = vmatpush2.msra.mxu0 0.0
    %3930 = vmatprep.mubr.f32.mxu0 0.0
    %3931 = vmatmul.mubr.f32.gmra.mxu0 %v3864
    %v3932 = vpop.f32.mrf.mxu0
    %v3933 = vadd.f32 0.0, %v3932
    %v3934 = vpop.f32.mrf.mxu0
    %v3935 = vadd.f32 0.0, %v3934
    %3936 = vdwg.mxu0
    %3937 = vmatprep.subr.mxu0 0.0
    %3938 = vmatpush1.msra.mxu0 0.0
    %3939 = vmatprep.subr.mxu0 0.0
    %3940 = vmatpush1.msra.mxu0 0.0
    %3941 = vmatprep.subr.mxu0 0.0
    %3942 = vmatpush1.msra.mxu0 0.0
    %3943 = vmatprep.subr.mxu0 0.0
    %3944 = vmatpush1.msra.mxu0 0.0
    %3945 = vmatprep.subr.mxu0 0.0
    %3946 = vmatpush1.msra.mxu0 0.0
    %3947 = vmatprep.subr.mxu0 0.0
    %3948 = vmatpush1.msra.mxu0 0.0
    %3949 = vmatprep.subr.mxu0 0.0
    %3950 = vmatpush1.msra.mxu0 0.0
    %3951 = vmatprep.subr.mxu0 0.0
    %3952 = vmatpush1.msra.mxu0 0.0
    %3953 = vmatprep.subr.mxu0 0.0
    %3954 = vmatpush1.msra.mxu0 0.0
    %3955 = vmatprep.subr.mxu0 0.0
    %3956 = vmatpush1.msra.mxu0 0.0
    %3957 = vmatprep.subr.mxu0 %v3860
    %3958 = vmatpush1.msra.mxu0 %v3859
    %3959 = vmatprep.subr.mxu0 %v3856
    %3960 = vmatpush1.msra.mxu0 %v3855
    %3961 = vmatprep.subr.mxu0 %v3852
    %3962 = vmatpush1.msra.mxu0 %v3851
    %3963 = vmatprep.subr.mxu0 %v3848
    %3964 = vmatpush1.msra.mxu0 %v3847
    %3965 = vmatprep.subr.mxu0 %v3844
    %3966 = vmatpush1.msra.mxu0 %v3843
    %3967 = vmatprep.subr.mxu0 %v3840
    %3968 = vmatpush1.msra.mxu0 %v3839
    %3969 = vmatprep.subr.mxu0 0.0
    %3970 = vmatpush2.msra.mxu0 0.0
    %3971 = vmatprep.subr.mxu0 0.0
    %3972 = vmatpush2.msra.mxu0 0.0
    %3973 = vmatprep.subr.mxu0 0.0
    %3974 = vmatpush2.msra.mxu0 0.0
    %3975 = vmatprep.subr.mxu0 0.0
    %3976 = vmatpush2.msra.mxu0 0.0
    %3977 = vmatprep.subr.mxu0 0.0
    %3978 = vmatpush2.msra.mxu0 0.0
    %3979 = vmatprep.subr.mxu0 0.0
    %3980 = vmatpush2.msra.mxu0 0.0
    %3981 = vmatprep.subr.mxu0 0.0
    %3982 = vmatpush2.msra.mxu0 0.0
    %3983 = vmatprep.subr.mxu0 0.0
    %3984 = vmatpush2.msra.mxu0 0.0
    %3985 = vmatprep.subr.mxu0 0.0
    %3986 = vmatpush2.msra.mxu0 0.0
    %3987 = vmatprep.subr.mxu0 0.0
    %3988 = vmatpush2.msra.mxu0 0.0
    %3989 = vmatprep.subr.mxu0 0.0
    %3990 = vmatpush2.msra.mxu0 0.0
    %3991 = vmatprep.subr.mxu0 0.0
    %3992 = vmatpush2.msra.mxu0 0.0
    %3993 = vmatprep.subr.mxu0 0.0
    %3994 = vmatpush2.msra.mxu0 0.0
    %3995 = vmatprep.subr.mxu0 0.0
    %3996 = vmatpush2.msra.mxu0 0.0
    %3997 = vmatprep.subr.mxu0 0.0
    %3998 = vmatpush2.msra.mxu0 0.0
    %3999 = vmatprep.subr.mxu0 0.0
    %4000 = vmatpush2.msra.mxu0 0.0
    %4001 = vmatprep.mubr.f32.mxu0 0.0
    %4002 = vmatmul.mubr.f32.gmra.mxu0 %v3864
    %v4003 = vpop.f32.mrf.mxu0
    %v4004 = vadd.f32 0.0, %v4003
    %v4005 = vpop.f32.mrf.mxu0
    %v4006 = vadd.f32 0.0, %v4005
    %4007 = vdwg.mxu0
    %v4009 = vsel %vm2663, %v3806, 0
    %4011 = vmatprep.subr.mxu0 0.0
    %4012 = vmatpush1.msra.mxu0 0.0
    %4013 = vmatprep.subr.mxu0 0.0
    %4014 = vmatpush1.msra.mxu0 0.0
    %4015 = vmatprep.subr.mxu0 0.0
    %4016 = vmatpush1.msra.mxu0 0.0
    %4017 = vmatprep.subr.mxu0 0.0
    %4018 = vmatpush1.msra.mxu0 0.0
    %4019 = vmatprep.subr.mxu0 0.0
    %4020 = vmatpush1.msra.mxu0 0.0
    %4021 = vmatprep.subr.mxu0 0.0
    %4022 = vmatpush1.msra.mxu0 0.0
    %4023 = vmatprep.subr.mxu0 0.0
    %4024 = vmatpush1.msra.mxu0 0.0
    %4025 = vmatprep.subr.mxu0 0.0
    %4026 = vmatpush1.msra.mxu0 0.0
    %4027 = vmatprep.subr.mxu0 0.0
    %4028 = vmatpush1.msra.mxu0 0.0
    %4029 = vmatprep.subr.mxu0 0.0
    %4030 = vmatpush1.msra.mxu0 0.0
    %4031 = vmatprep.subr.mxu0 %v3833
    %4032 = vmatpush1.msra.mxu0 %v3832
    %4033 = vmatprep.subr.mxu0 %v3829
    %4034 = vmatpush1.msra.mxu0 %v3828
    %4035 = vmatprep.subr.mxu0 %v3825
    %4036 = vmatpush1.msra.mxu0 %v3824
    %4037 = vmatprep.subr.mxu0 %v3821
    %4038 = vmatpush1.msra.mxu0 %v3820
    %4039 = vmatprep.subr.mxu0 %v3817
    %4040 = vmatpush1.msra.mxu0 %v3816
    %4041 = vmatprep.subr.mxu0 %v3813
    %4042 = vmatpush1.msra.mxu0 %v3812
    %4043 = vmatprep.subr.mxu0 0.0
    %4044 = vmatpush2.msra.mxu0 0.0
    %4045 = vmatprep.subr.mxu0 0.0
    %4046 = vmatpush2.msra.mxu0 0.0
    %4047 = vmatprep.subr.mxu0 0.0
    %4048 = vmatpush2.msra.mxu0 0.0
    %4049 = vmatprep.subr.mxu0 0.0
    %4050 = vmatpush2.msra.mxu0 0.0
    %4051 = vmatprep.subr.mxu0 0.0
    %4052 = vmatpush2.msra.mxu0 0.0
    %4053 = vmatprep.subr.mxu0 0.0
    %4054 = vmatpush2.msra.mxu0 0.0
    %4055 = vmatprep.subr.mxu0 0.0
    %4056 = vmatpush2.msra.mxu0 0.0
    %4057 = vmatprep.subr.mxu0 0.0
    %4058 = vmatpush2.msra.mxu0 0.0
    %4059 = vmatprep.subr.mxu0 0.0
    %4060 = vmatpush2.msra.mxu0 0.0
    %4061 = vmatprep.subr.mxu0 0.0
    %4062 = vmatpush2.msra.mxu0 0.0
    %4063 = vmatprep.subr.mxu0 0.0
    %4064 = vmatpush2.msra.mxu0 0.0
    %4065 = vmatprep.subr.mxu0 0.0
    %4066 = vmatpush2.msra.mxu0 0.0
    %4067 = vmatprep.subr.mxu0 0.0
    %4068 = vmatpush2.msra.mxu0 0.0
    %4069 = vmatprep.subr.mxu0 0.0
    %4070 = vmatpush2.msra.mxu0 0.0
    %4071 = vmatprep.subr.mxu0 0.0
    %4072 = vmatpush2.msra.mxu0 0.0
    %4073 = vmatprep.subr.mxu0 0.0
    %4074 = vmatpush2.msra.mxu0 0.0
    %4075 = vmatprep.mubr.f32.mxu0 0.0
    %4076 = vmatmul.mubr.f32.gmra.mxu0 %v4009
    %v4077 = vpop.f32.mrf.mxu0
    %v4078 = vadd.f32 %v3933, %v4077
    %v4079 = vpop.f32.mrf.mxu0
    %v4080 = vadd.f32 %v3935, %v4079
    %4081 = vdwg.mxu0
    %4082 = vmatprep.subr.mxu0 0.0
    %4083 = vmatpush1.msra.mxu0 0.0
    %4084 = vmatprep.subr.mxu0 0.0
    %4085 = vmatpush1.msra.mxu0 0.0
    %4086 = vmatprep.subr.mxu0 0.0
    %4087 = vmatpush1.msra.mxu0 0.0
    %4088 = vmatprep.subr.mxu0 0.0
    %4089 = vmatpush1.msra.mxu0 0.0
    %4090 = vmatprep.subr.mxu0 0.0
    %4091 = vmatpush1.msra.mxu0 0.0
    %4092 = vmatprep.subr.mxu0 0.0
    %4093 = vmatpush1.msra.mxu0 0.0
    %4094 = vmatprep.subr.mxu0 0.0
    %4095 = vmatpush1.msra.mxu0 0.0
    %4096 = vmatprep.subr.mxu0 0.0
    %4097 = vmatpush1.msra.mxu0 0.0
    %4098 = vmatprep.subr.mxu0 0.0
    %4099 = vmatpush1.msra.mxu0 0.0
    %4100 = vmatprep.subr.mxu0 0.0
    %4101 = vmatpush1.msra.mxu0 0.0
    %4102 = vmatprep.subr.mxu0 %v3835
    %4103 = vmatpush1.msra.mxu0 %v3834
    %4104 = vmatprep.subr.mxu0 %v3831
    %4105 = vmatpush1.msra.mxu0 %v3830
    %4106 = vmatprep.subr.mxu0 %v3827
    %4107 = vmatpush1.msra.mxu0 %v3826
    %4108 = vmatprep.subr.mxu0 %v3823
    %4109 = vmatpush1.msra.mxu0 %v3822
    %4110 = vmatprep.subr.mxu0 %v3819
    %4111 = vmatpush1.msra.mxu0 %v3818
    %4112 = vmatprep.subr.mxu0 %v3815
    %4113 = vmatpush1.msra.mxu0 %v3814
    %4114 = vmatprep.subr.mxu0 0.0
    %4115 = vmatpush2.msra.mxu0 0.0
    %4116 = vmatprep.subr.mxu0 0.0
    %4117 = vmatpush2.msra.mxu0 0.0
    %4118 = vmatprep.subr.mxu0 0.0
    %4119 = vmatpush2.msra.mxu0 0.0
    %4120 = vmatprep.subr.mxu0 0.0
    %4121 = vmatpush2.msra.mxu0 0.0
    %4122 = vmatprep.subr.mxu0 0.0
    %4123 = vmatpush2.msra.mxu0 0.0
    %4124 = vmatprep.subr.mxu0 0.0
    %4125 = vmatpush2.msra.mxu0 0.0
    %4126 = vmatprep.subr.mxu0 0.0
    %4127 = vmatpush2.msra.mxu0 0.0
    %4128 = vmatprep.subr.mxu0 0.0
    %4129 = vmatpush2.msra.mxu0 0.0
    %4130 = vmatprep.subr.mxu0 0.0
    %4131 = vmatpush2.msra.mxu0 0.0
    %4132 = vmatprep.subr.mxu0 0.0
    %4133 = vmatpush2.msra.mxu0 0.0
    %4134 = vmatprep.subr.mxu0 0.0
    %4135 = vmatpush2.msra.mxu0 0.0
    %4136 = vmatprep.subr.mxu0 0.0
    %4137 = vmatpush2.msra.mxu0 0.0
    %4138 = vmatprep.subr.mxu0 0.0
    %4139 = vmatpush2.msra.mxu0 0.0
    %4140 = vmatprep.subr.mxu0 0.0
    %4141 = vmatpush2.msra.mxu0 0.0
    %4142 = vmatprep.subr.mxu0 0.0
    %4143 = vmatpush2.msra.mxu0 0.0
    %4144 = vmatprep.subr.mxu0 0.0
    %4145 = vmatpush2.msra.mxu0 0.0
    %4146 = vmatprep.mubr.f32.mxu0 0.0
    %4147 = vmatmul.mubr.f32.gmra.mxu0 %v4009
    %v4148 = vpop.f32.mrf.mxu0
    %v4149 = vadd.f32 %v4004, %v4148
    %v4150 = vpop.f32.mrf.mxu0
    %v4151 = vadd.f32 %v4006, %v4150
    %4152 = vdwg.mxu0
    %v4154 = vlaneseq
    %v4155 = vshrl.u32 %v4154, 7
    %v4156 = vsub.s32 0, %v4155
    %v4157 = vrot.slane %v3862, %v4156
    %v4158 = vlaneseq
    %v4159 = vshrl.u32 %v4158, 7
    %v4160 = vsub.s32 1, %v4159
    %v4161 = vrot.slane %v3862, %v4160
    %v4162 = vlaneseq
    %v4163 = vshrl.u32 %v4162, 7
    %v4164 = vsub.s32 2, %v4163
    %v4165 = vrot.slane %v3862, %v4164
    %v4166 = vlaneseq
    %v4167 = vshrl.u32 %v4166, 7
    %v4168 = vsub.s32 3, %v4167
    %v4169 = vrot.slane %v3862, %v4168
    %v4174 = vadd.f32 %v4078, %v4157
    %v4175 = vadd.f32 %v4080, %v4161
    %v4176 = vadd.f32 %v4149, %v4165
    %v4177 = vadd.f32 %v4151, %v4169
    %v4178 = vxor.u32 %v4174, 2147483648
    %v4179 = vmul.f32 %v4178, 1.442695
    %v4180 = vpow.pop %v4179
    %v4181 = vadd.f32 %v4180, 1.0
    %v4182 = vrcp.pop %v4181
    %v4183 = vmul.f32 1.0, %v4182
    %v4184 = vxor.u32 %v4175, 2147483648
    %v4185 = vmul.f32 %v4184, 1.442695
    %v4186 = vpow.pop %v4185
    %v4187 = vadd.f32 %v4186, 1.0
    %v4188 = vrcp.pop %v4187
    %v4189 = vmul.f32 1.0, %v4188
    %v4190 = vtanh.pop %v4176
    %v4191 = vxor.u32 %v4177, 2147483648
    %v4192 = vmul.f32 %v4191, 1.442695
    %v4193 = vpow.pop %v4192
    %v4194 = vadd.f32 %v4193, 1.0
    %v4195 = vrcp.pop %v4194
    %v4196 = vmul.f32 1.0, %v4195
    %v4197 = vmul.f32 %v4189, %v3810
    %v4198 = vmul.f32 %v4183, %v4190
    %v4199 = vadd.f32 %v4197, %v4198
    %v4200 = vtanh.pop %v4199
    %v4201 = vmul.f32 %v4196, %v4200
    %s4202 = scalar_lea.vmem [#allocation60], 6
    %4203 = vst.msk [vmem:[%s4202] sm:$0x3] %vm3003, %v4201
    %s4204 = scalar_lea.vmem [#allocation62], 6
    %4205 = vst.msk [vmem:[%s4204] sm:$0x3] %vm3003, %v4199
    %v4206 = vadd.f32 %v3806, %v4201
    %v4207 = vld [vmem:[%s81] sm:$0xff]
    %v4208 = vld [vmem:[%s81 + $0x8] sm:$0xff]
    %v4209 = vld [vmem:[%s81 + $0x10] sm:$0xff]
    %v4210 = vld [vmem:[%s81 + $0x18] sm:$0xff]
    %v4211 = vld [vmem:[%s81 + $0x20] sm:$0xff]
    %v4212 = vld [vmem:[%s81 + $0x28] sm:$0xff]
    %v4213 = vld [vmem:[#allocation2] sm:$0x1]
    %v4215 = vlaneseq
    %v4216 = vshrl.u32 %v4215, 7
    %v4217 = vsub.s32 0, %v4216
    %v4218 = vrot.slane %v4213, %v4217
    %v4221 = vsel %vm2663, %v4206, 0
    %4223 = vmatprep.subr.mxu0 0.0
    %4224 = vmatpush1.msra.mxu0 0.0
    %4225 = vmatprep.subr.mxu0 0.0
    %4226 = vmatpush1.msra.mxu0 0.0
    %4227 = vmatprep.subr.mxu0 0.0
    %4228 = vmatpush1.msra.mxu0 0.0
    %4229 = vmatprep.subr.mxu0 0.0
    %4230 = vmatpush1.msra.mxu0 0.0
    %4231 = vmatprep.subr.mxu0 0.0
    %4232 = vmatpush1.msra.mxu0 0.0
    %4233 = vmatprep.subr.mxu0 0.0
    %4234 = vmatpush1.msra.mxu0 0.0
    %4235 = vmatprep.subr.mxu0 0.0
    %4236 = vmatpush1.msra.mxu0 0.0
    %4237 = vmatprep.subr.mxu0 0.0
    %4238 = vmatpush1.msra.mxu0 0.0
    %4239 = vmatprep.subr.mxu0 0.0
    %4240 = vmatpush1.msra.mxu0 0.0
    %4241 = vmatprep.subr.mxu0 0.0
    %4242 = vmatpush1.msra.mxu0 0.0
    %4243 = vmatprep.subr.mxu0 0.0
    %4244 = vmatpush1.msra.mxu0 %v4212
    %4245 = vmatprep.subr.mxu0 0.0
    %4246 = vmatpush1.msra.mxu0 %v4211
    %4247 = vmatprep.subr.mxu0 0.0
    %4248 = vmatpush1.msra.mxu0 %v4210
    %4249 = vmatprep.subr.mxu0 0.0
    %4250 = vmatpush1.msra.mxu0 %v4209
    %4251 = vmatprep.subr.mxu0 0.0
    %4252 = vmatpush1.msra.mxu0 %v4208
    %4253 = vmatprep.subr.mxu0 0.0
    %4254 = vmatpush1.msra.mxu0 %v4207
    %4255 = vmatprep.subr.mxu0 0.0
    %4256 = vmatpush2.msra.mxu0 0.0
    %4257 = vmatprep.subr.mxu0 0.0
    %4258 = vmatpush2.msra.mxu0 0.0
    %4259 = vmatprep.subr.mxu0 0.0
    %4260 = vmatpush2.msra.mxu0 0.0
    %4261 = vmatprep.subr.mxu0 0.0
    %4262 = vmatpush2.msra.mxu0 0.0
    %4263 = vmatprep.subr.mxu0 0.0
    %4264 = vmatpush2.msra.mxu0 0.0
    %4265 = vmatprep.subr.mxu0 0.0
    %4266 = vmatpush2.msra.mxu0 0.0
    %4267 = vmatprep.subr.mxu0 0.0
    %4268 = vmatpush2.msra.mxu0 0.0
    %4269 = vmatprep.subr.mxu0 0.0
    %4270 = vmatpush2.msra.mxu0 0.0
    %4271 = vmatprep.subr.mxu0 0.0
    %4272 = vmatpush2.msra.mxu0 0.0
    %4273 = vmatprep.subr.mxu0 0.0
    %4274 = vmatpush2.msra.mxu0 0.0
    %4275 = vmatprep.subr.mxu0 0.0
    %4276 = vmatpush2.msra.mxu0 0.0
    %4277 = vmatprep.subr.mxu0 0.0
    %4278 = vmatpush2.msra.mxu0 0.0
    %4279 = vmatprep.subr.mxu0 0.0
    %4280 = vmatpush2.msra.mxu0 0.0
    %4281 = vmatprep.subr.mxu0 0.0
    %4282 = vmatpush2.msra.mxu0 0.0
    %4283 = vmatprep.subr.mxu0 0.0
    %4284 = vmatpush2.msra.mxu0 0.0
    %4285 = vmatprep.subr.mxu0 0.0
    %4286 = vmatpush2.msra.mxu0 0.0
    %4287 = vmatprep.mubr.f32.mxu0 0.0
    %4288 = vmatmul.mubr.f32.gmra.mxu0 %v4221
    %v4289 = vpop.f32.mrf.mxu0
    %v4290 = vadd.f32 %v4218, %v4289
    %v4291 = vpop.f32.mrf.mxu0
    %4292 = vdwg.mxu0
    %v4293 = vxor.u32 %v4290, 2147483648
    %v4294 = vmul.f32 %v4293, 1.442695
    %v4295 = vpow.pop %v4294
    %v4296 = vadd.f32 %v4295, 1.0
    %v4297 = vrcp.pop %v4296
    %v4298 = vmul.f32 1.0, %v4297
    %vm4299 = vcmask 1024
    %4300 = vst.msk [vmem:[%s105] sm:$0x3] %vm4299, %v4298
    // Predicated region
    $region290: #{decoder_forward.1} parent=1 // pred_check
      _
    $region291: #{decoder_forward.1} parent=1 // pred_check_branch
      %4302 = sbr.rel (0) target = $region293
    $region292: #{decoder_forward.1} parent=1 // pred_region
      %s4304 = ssub.s32 32, 32
      %4305 = vsyncadd [#allocation5], %s4304
      %s4307 = sshll.u32 [#allocation50], 4
      %s4308 = int_to_ptr.vmem [resolvable:$true] %s4307
      %4310 = dma.vmem_to_hbm [thread:$0]  %s4308, 32, %s85, [#allocation5]
    $region293: #{decoder_forward.1} parent=1 // pred_fallthru
      _
    // Predicated region
    $region294: #{decoder_forward.1} parent=1 // pred_check
      _
    $region295: #{decoder_forward.1} parent=1 // pred_check_branch
      %4312 = sbr.rel (0) target = $region297
    $region296: #{decoder_forward.1} parent=1 // pred_region
      _
    $region297: #{decoder_forward.1} parent=1 // pred_fallthru
      _
    // Predicated region
    $region298: #{decoder_forward.1} parent=1 // pred_check
      _
    $region299: #{decoder_forward.1} parent=1 // pred_check_branch
      %4314 = sbr.rel (0) target = $region301
    $region300: #{decoder_forward.1} parent=1 // pred_region
      %s4316 = ssub.s32 32, 32
      %4317 = vsyncadd [#allocation52], %s4316
      %s4319 = sshll.u32 [#allocation51], 4
      %s4320 = int_to_ptr.vmem [resolvable:$true] %s4319
      %4322 = dma.vmem_to_hbm [thread:$0]  %s4320, 32, %s89, [#allocation52]
    $region301: #{decoder_forward.1} parent=1 // pred_fallthru
      _
    // Predicated region
    $region302: #{decoder_forward.1} parent=1 // pred_check
      _
    $region303: #{decoder_forward.1} parent=1 // pred_check_branch
      %4324 = sbr.rel (0) target = $region305
    $region304: #{decoder_forward.1} parent=1 // pred_region
      %s4326 = ssub.s32 32, 32
      %4327 = vsyncadd [#allocation52], %s4326
      %s4329 = sshll.u32 [#allocation53], 4
      %s4330 = int_to_ptr.vmem [resolvable:$true] %s4329
      %4332 = dma.vmem_to_hbm [thread:$0]  %s4330, 32, %s91, [#allocation52]
    $region305: #{decoder_forward.1} parent=1 // pred_fallthru
      _
    // Predicated region
    $region306: #{decoder_forward.1} parent=1 // pred_check
      _
    $region307: #{decoder_forward.1} parent=1 // pred_check_branch
      %4334 = sbr.rel (0) target = $region309
    $region308: #{decoder_forward.1} parent=1 // pred_region
      %s4336 = ssub.s32 32, 32
      %4337 = vsyncadd [#allocation55], %s4336
      %s4339 = sshll.u32 [#allocation54], 4
      %s4340 = int_to_ptr.vmem [resolvable:$true] %s4339
      %4342 = dma.vmem_to_hbm [thread:$0]  %s4340, 32, %s93, [#allocation55]
    $region309: #{decoder_forward.1} parent=1 // pred_fallthru
      _
    // Predicated region
    $region310: #{decoder_forward.1} parent=1 // pred_check
      _
    $region311: #{decoder_forward.1} parent=1 // pred_check_branch
      %4344 = sbr.rel (0) target = $region313
    $region312: #{decoder_forward.1} parent=1 // pred_region
      %s4346 = ssub.s32 32, 32
      %4347 = vsyncadd [#allocation55], %s4346
      %s4349 = sshll.u32 [#allocation56], 4
      %s4350 = int_to_ptr.vmem [resolvable:$true] %s4349
      %4352 = dma.vmem_to_hbm [thread:$0]  %s4350, 32, %s95, [#allocation55]
    $region313: #{decoder_forward.1} parent=1 // pred_fallthru
      _
    // Predicated region
    $region314: #{decoder_forward.1} parent=1 // pred_check
      _
    $region315: #{decoder_forward.1} parent=1 // pred_check_branch
      %4354 = sbr.rel (0) target = $region317
    $region316: #{decoder_forward.1} parent=1 // pred_region
      %s4356 = ssub.s32 32, 32
      %4357 = vsyncadd [#allocation58], %s4356
      %s4359 = sshll.u32 [#allocation57], 4
      %s4360 = int_to_ptr.vmem [resolvable:$true] %s4359
      %4362 = dma.vmem_to_hbm [thread:$0]  %s4360, 32, %s97, [#allocation58]
    $region317: #{decoder_forward.1} parent=1 // pred_fallthru
      _
    // Predicated region
    $region318: #{decoder_forward.1} parent=1 // pred_check
      _
    $region319: #{decoder_forward.1} parent=1 // pred_check_branch
      %4364 = sbr.rel (0) target = $region321
    $region320: #{decoder_forward.1} parent=1 // pred_region
      %s4366 = ssub.s32 32, 32
      %4367 = vsyncadd [#allocation58], %s4366
      %s4369 = sshll.u32 [#allocation59], 4
      %s4370 = int_to_ptr.vmem [resolvable:$true] %s4369
      %4372 = dma.vmem_to_hbm [thread:$0]  %s4370, 32, %s99, [#allocation58]
    $region321: #{decoder_forward.1} parent=1 // pred_fallthru
      _
    // Predicated region
    $region322: #{decoder_forward.1} parent=1 // pred_check
      _
    $region323: #{decoder_forward.1} parent=1 // pred_check_branch
      %4374 = sbr.rel (0) target = $region325
    $region324: #{decoder_forward.1} parent=1 // pred_region
      %s4376 = ssub.s32 128, 128
      %4377 = vsyncadd [#allocation61], %s4376
      %s4378 = sshll.u32 [#allocation60], 4
      %s4379 = int_to_ptr.vmem [resolvable:$true] %s4378
      %4384 = dma.vmem_to_hbm [thread:$0]  %s4379, 128, %s101, [#allocation61], 32, 32, 2
    $region325: #{decoder_forward.1} parent=1 // pred_fallthru
      _
    // Predicated region
    $region326: #{decoder_forward.1} parent=1 // pred_check
      _
    $region327: #{decoder_forward.1} parent=1 // pred_check_branch
      %4386 = sbr.rel (0) target = $region329
    $region328: #{decoder_forward.1} parent=1 // pred_region
      %s4388 = ssub.s32 128, 128
      %4389 = vsyncadd [#allocation61], %s4388
      %s4390 = sshll.u32 [#allocation62], 4
      %s4391 = int_to_ptr.vmem [resolvable:$true] %s4390
      %4396 = dma.vmem_to_hbm [thread:$0]  %s4391, 128, %s103, [#allocation61], 32, 32, 2
    $region329: #{decoder_forward.1} parent=1 // pred_fallthru
      _
    // Predicated region
    $region330: #{decoder_forward.1} parent=1 // pred_check
      _
    $region331: #{decoder_forward.1} parent=1 // pred_check_branch
      %4398 = sbr.rel (0) target = $region333
    $region332: #{decoder_forward.1} parent=1 // pred_region
      _
    $region333: #{decoder_forward.1} parent=1 // pred_fallthru
      _
    // Predicated region
    $region334: #{decoder_forward.1} parent=1 // pred_check
      _
    $region335: #{decoder_forward.1} parent=1 // pred_check_branch
      %4400 = sbr.rel (0) target = $region337
    $region336: #{decoder_forward.1} parent=1 // pred_region
      %4401 = dma.done [#allocation5], 32
    $region337: #{decoder_forward.1} parent=1 // pred_fallthru
      _
    // Predicated region
    $region338: #{decoder_forward.1} parent=1 // pred_check
      _
    $region339: #{decoder_forward.1} parent=1 // pred_check_branch
      %4403 = sbr.rel (0) target = $region341
    $region340: #{decoder_forward.1} parent=1 // pred_region
      _
    $region341: #{decoder_forward.1} parent=1 // pred_fallthru
      _
    // Predicated region
    $region342: #{decoder_forward.1} parent=1 // pred_check
      _
    $region343: #{decoder_forward.1} parent=1 // pred_check_branch
      %4405 = sbr.rel (0) target = $region345
    $region344: #{decoder_forward.1} parent=1 // pred_region
      %4406 = dma.done [#allocation52], 32
    $region345: #{decoder_forward.1} parent=1 // pred_fallthru
      _
    // Predicated region
    $region346: #{decoder_forward.1} parent=1 // pred_check
      _
    $region347: #{decoder_forward.1} parent=1 // pred_check_branch
      %4408 = sbr.rel (0) target = $region349
    $region348: #{decoder_forward.1} parent=1 // pred_region
      %4409 = dma.done [#allocation52], 32
    $region349: #{decoder_forward.1} parent=1 // pred_fallthru
      _
    // Predicated region
    $region350: #{decoder_forward.1} parent=1 // pred_check
      _
    $region351: #{decoder_forward.1} parent=1 // pred_check_branch
      %4411 = sbr.rel (0) target = $region353
    $region352: #{decoder_forward.1} parent=1 // pred_region
      %4412 = dma.done [#allocation55], 32
    $region353: #{decoder_forward.1} parent=1 // pred_fallthru
      _
    // Predicated region
    $region354: #{decoder_forward.1} parent=1 // pred_check
      _
    $region355: #{decoder_forward.1} parent=1 // pred_check_branch
      %4414 = sbr.rel (0) target = $region357
    $region356: #{decoder_forward.1} parent=1 // pred_region
      %4415 = dma.done [#allocation55], 32
    $region357: #{decoder_forward.1} parent=1 // pred_fallthru
      _
    // Predicated region
    $region358: #{decoder_forward.1} parent=1 // pred_check
      _
    $region359: #{decoder_forward.1} parent=1 // pred_check_branch
      %4417 = sbr.rel (0) target = $region361
    $region360: #{decoder_forward.1} parent=1 // pred_region
      %4418 = dma.done [#allocation58], 32
    $region361: #{decoder_forward.1} parent=1 // pred_fallthru
      _
    // Predicated region
    $region362: #{decoder_forward.1} parent=1 // pred_check
      _
    $region363: #{decoder_forward.1} parent=1 // pred_check_branch
      %4420 = sbr.rel (0) target = $region365
    $region364: #{decoder_forward.1} parent=1 // pred_region
      %4421 = dma.done [#allocation58], 32
    $region365: #{decoder_forward.1} parent=1 // pred_fallthru
      _
    // Predicated region
    $region366: #{decoder_forward.1} parent=1 // pred_check
      _
    $region367: #{decoder_forward.1} parent=1 // pred_check_branch
      %4423 = sbr.rel (0) target = $region369
    $region368: #{decoder_forward.1} parent=1 // pred_region
      %4424 = dma.done [#allocation61], 128
    $region369: #{decoder_forward.1} parent=1 // pred_fallthru
      _
    // Predicated region
    $region370: #{decoder_forward.1} parent=1 // pred_check
      _
    $region371: #{decoder_forward.1} parent=1 // pred_check_branch
      %4426 = sbr.rel (0) target = $region373
    $region372: #{decoder_forward.1} parent=1 // pred_region
      %4427 = dma.done [#allocation61], 128
    $region373: #{decoder_forward.1} parent=1 // pred_fallthru
      _
    // Predicated region
    $region374: #{decoder_forward.1} parent=1 // pred_check
      _
    $region375: #{decoder_forward.1} parent=1 // pred_check_branch
      %4429 = sbr.rel (0) target = $region377
    $region376: #{decoder_forward.1} parent=1 // pred_region
      _
    $region377: #{decoder_forward.1} parent=1 // pred_fallthru
      _
    %4430 = vsyncpa [#allocation4], 1
    %4431 = vsyncpa [#allocation7], 1
    %4432 = vsyncpa [#allocation10], 1
    %4433 = vsyncpa [#allocation13], 1
    %4434 = vsyncpa [#allocation16], 1
    %4435 = vsyncpa [#allocation19], 1
    %4436 = vsyncpa [#allocation22], 1
    %4437 = vsyncpa [#allocation25], 1
    %4438 = vsyncpa [#allocation28], 1
    %4439 = vsyncpa [#allocation31], 1
    %4440 = vsyncpa [#allocation34], 1
    %4441 = vsyncpa [#allocation37], 1
    %4442 = vsyncpa [#allocation40], 1
    %4443 = vsyncpa [#allocation43], 1
    %4444 = vsyncpa [#allocation46], 1
    %4445 = vsyncpa [#allocation49], 1
    %4446 = vsyncpa [#allocation5], 1
    %4447 = vsyncpa [#allocation52], 1
    %4448 = vsyncpa [#allocation55], 1
    %4449 = vsyncpa [#allocation58], 1
    %4450 = vsyncpa [#allocation61], 1

</llo_original>
